<compile_context>
chip_gen: v6e
topology: v6e:2x2x1
jax: 0.10.0
libtpu: 0.0.40
codegen_flags: <defaults>
</compile_context>

<pallas_src>
import jax
import jax.numpy as jnp
from jax.experimental import pallas as pl
from jax.experimental.pallas import tpu as pltpu

# ----------------------------- config ---------------------------------------
B = 2          # batch
L = 8          # max_length / seq len
H = 64         # hidden size (synthetic; real BERT uses 768)
NH = 4         # attention heads
DH = H // NH   # head dim
FF = 128       # intermediate (FFN) size
LAYERS = 2     # transformer layers
VOCAB = 100    # synthetic vocab
LN_EPS = 1e-12
NEG_INF = -10000.0       # HF BERT additive attention mask value
N_LAYER_PARAMS = 12      # refs per transformer layer passed to the kernel


# ----------------------------- in-kernel helpers -----------------------------
def _layer_norm(x, g, b):
    mu = jnp.mean(x, axis=-1, keepdims=True)
    var = jnp.mean(jnp.square(x - mu), axis=-1, keepdims=True)
    return (x - mu) * jax.lax.rsqrt(var + LN_EPS) * g + b


def _gelu(x):
    # TODO(synk): HF BERT "gelu" is the exact erf-GELU; we use the tanh
    # approximation to guarantee Mosaic lowering.
    return jax.nn.gelu(x, approximate=True)


def _attn_head(q, k, v, mask_row):
    """Single-head attention. q,k,v: (L, DH); mask_row: (1, L) additive."""
    scale = 1.0 / (DH ** 0.5)
    s = jax.lax.dot_general(q, k, (((1,), (1,)), ((), ())),
                            preferred_element_type=jnp.float32)   # (L, L)
    s = s * scale + mask_row
    s = s - jnp.max(s, axis=-1, keepdims=True)
    p = jnp.exp(s)
    p = p / jnp.sum(p, axis=-1, keepdims=True)
    return jnp.dot(p, v, preferred_element_type=jnp.float32)       # (L, DH)


# ----------------------------- fused encoder kernel --------------------------
def _encoder_kernel(*refs):
    # ref layout:
    #   [emb(B*L,H), add_mask(B,L), emb_ln_g(1,H), emb_ln_b(1,H)]
    #   + LAYERS * [wqkv(H,3H), bqkv(1,3H), wo(H,H), bo(1,H),
    #               ln1_g(1,H), ln1_b(1,H),
    #               w1(H,FF), b1(1,FF), w2(FF,H), b2(1,H),
    #               ln2_g(1,H), ln2_b(1,H)]
    #   + [pool_w(H,H), pool_b(1,H)]
    #   + [out(B,H)]
    out_ref = refs[-1]
    emb_ref, mask_ref, eg_ref, eb_ref = refs[0:4]
    layer_refs = refs[4:4 + N_LAYER_PARAMS * LAYERS]
    pw_ref = refs[4 + N_LAYER_PARAMS * LAYERS]
    pb_ref = refs[4 + N_LAYER_PARAMS * LAYERS + 1]

    mask = mask_ref[...]                                            # (B, L)
    h = _layer_norm(emb_ref[...], eg_ref[...], eb_ref[...])         # (B*L, H)

    for li in range(LAYERS):
        (wqkv_r, bqkv_r, wo_r, bo_r, g1_r, b1_r,
         w1_r, bb1_r, w2_r, bb2_r, g2_r, b2_r) = layer_refs[
             li * N_LAYER_PARAMS:(li + 1) * N_LAYER_PARAMS]

        # Fused QKV projection: one (B*L, H) @ (H, 3H) matmul.
        qkv = jnp.dot(h, wqkv_r[...],
                      preferred_element_type=jnp.float32) + bqkv_r[...]   # (B*L, 3H)

        # Per-(batch, head) attention, fully unrolled; heads are extracted
        # by static slicing of the fused QKV activation (no transposes).
        ctx_rows = []
        for b in range(B):
            mrow = mask[b:b + 1, :]                                 # (1, L)
            heads = []
            for hh in range(NH):
                r0, r1 = b * L, (b + 1) * L
                q = qkv[r0:r1, hh * DH:(hh + 1) * DH]
                k = qkv[r0:r1, H + hh * DH:H + (hh + 1) * DH]
                v = qkv[r0:r1, 2 * H + hh * DH:2 * H + (hh + 1) * DH]
                heads.append(_attn_head(q, k, v, mrow))
            ctx_rows.append(jnp.concatenate(heads, axis=-1))        # (L, H)
        ctx = jnp.concatenate(ctx_rows, axis=0)                     # (B*L, H)

        attn_out = jnp.dot(ctx, wo_r[...],
                           preferred_element_type=jnp.float32) + bo_r[...]
        h = _layer_norm(attn_out + h, g1_r[...], b1_r[...])

        if li == LAYERS - 1:
            # Only the CLS rows feed the pooler -> skip FFN/LN for other rows.
            h = jnp.concatenate([h[b * L:b * L + 1, :] for b in range(B)],
                                axis=0)                             # (B, H)

        ff = _gelu(jnp.dot(h, w1_r[...],
                           preferred_element_type=jnp.float32) + bb1_r[...])
        ff_out = jnp.dot(ff, w2_r[...],
                         preferred_element_type=jnp.float32) + bb2_r[...]
        h = _layer_norm(ff_out + h, g2_r[...], b2_r[...])

    # Pooler: tanh(h_cls @ W_p + b_p) -> the "x" returned by the module.
    pooled = jnp.tanh(jnp.dot(h, pw_ref[...],
                              preferred_element_type=jnp.float32) + pb_ref[...])
    out_ref[...] = pooled.astype(out_ref.dtype)


# ----------------------------- wrapper ---------------------------------------
def bert_encoder(params, token, att_mask):
    """token: (B, L) int32; att_mask: (B, L) {0,1}. Returns pooled (B, H)."""
    # Embedding gather is glue (plain JAX indexing); everything else is the
    # single fused Pallas kernel.
    word = params["word_emb"][token]                    # (B, L, H)
    pos = params["pos_emb"][None]                       # (1, L, H)
    typ = params["type_emb"][0][None, None]             # (1, 1, H) (token_type_ids == 0)
    emb = (word + pos + typ).reshape(B * L, H).astype(jnp.float32)

    # Additive attention mask, once per batch row: (B, L), 0 or -10000.
    add_mask = (1.0 - att_mask.astype(jnp.float32)) * NEG_INF

    inputs = [
        emb, add_mask,
        params["emb_ln_g"].reshape(1, H), params["emb_ln_b"].reshape(1, H),
    ]
    for lp in params["layers"]:
        inputs += [
            lp["wqkv"], lp["bqkv"].reshape(1, 3 * H),
            lp["wo"], lp["bo"].reshape(1, H),
            lp["ln1_g"].reshape(1, H), lp["ln1_b"].reshape(1, H),
            lp["w1"], lp["b1"].reshape(1, FF),
            lp["w2"], lp["b2"].reshape(1, H),
            lp["ln2_g"].reshape(1, H), lp["ln2_b"].reshape(1, H),
        ]
    inputs += [params["pool_w"], params["pool_b"].reshape(1, H)]

    in_specs = [pl.BlockSpec(memory_space=pltpu.MemorySpace.VMEM)
                for _ in inputs]
    out_spec = pl.BlockSpec(memory_space=pltpu.MemorySpace.VMEM)

    return pl.pallas_call(
        _encoder_kernel,
        out_shape=jax.ShapeDtypeStruct((B, H), jnp.float32),
        in_specs=in_specs,
        out_specs=out_spec,
    )(*inputs)


# ----------------------------- deterministic init ----------------------------
def init_params(key):
    def nrm(k, shape):
        return 0.02 * jax.random.normal(k, shape, jnp.float32)

    keys = jax.random.split(key, 4 + LAYERS)
    params = {
        "word_emb": nrm(keys[0], (VOCAB, H)),
        "pos_emb": nrm(keys[1], (L, H)),
        "type_emb": nrm(keys[2], (2, H)),
        "emb_ln_g": jnp.ones((H,), jnp.float32),
        "emb_ln_b": jnp.zeros((H,), jnp.float32),
        "pool_w": nrm(keys[3], (H, H)),
        "pool_b": jnp.zeros((H,), jnp.float32),
        "layers": [],
    }
    for li in range(LAYERS):
        ks = jax.random.split(keys[4 + li], 6)
        wq, wk, wv = nrm(ks[0], (H, H)), nrm(ks[1], (H, H)), nrm(ks[2], (H, H))
        params["layers"].append({
            # Fused QKV weight: (H, 3H), bias (3H,)
            "wqkv": jnp.concatenate([wq, wk, wv], axis=1),
            "bqkv": jnp.zeros((3 * H,), jnp.float32),
            "wo": nrm(ks[3], (H, H)), "bo": jnp.zeros((H,), jnp.float32),
            "ln1_g": jnp.ones((H,), jnp.float32), "ln1_b": jnp.zeros((H,), jnp.float32),
            "w1": nrm(ks[4], (H, FF)), "b1": jnp.zeros((FF,), jnp.float32),
            "w2": nrm(ks[5], (FF, H)), "b2": jnp.zeros((H,), jnp.float32),
            "ln2_g": jnp.ones((H,), jnp.float32), "ln2_b": jnp.zeros((H,), jnp.float32),
        })
    return params


# ----------------------------- main ------------------------------------------
if __name__ == "__main__":
    key = jax.random.PRNGKey(0)
    pkey, tkey = jax.random.split(key)
    params = init_params(pkey)

    # (B, L) token ids and attention mask (1 = content, 0 = padding), like
    # BERTEncoder.tokenize() would produce.
    token = jax.random.randint(tkey, (B, L), 1, VOCAB, dtype=jnp.int32)
    att_mask = jnp.array([[1] * L, [1] * 5 + [0] * (L - 5)], dtype=jnp.int32)
    token = token * att_mask  # blank (0) padding, as in tokenize()

    fwd = jax.jit(lambda t, m: bert_encoder(params, t, m))
    out = fwd(token, att_mask)
    jax.block_until_ready(out)
    assert out.shape == (B, H) and out.dtype == jnp.float32
    assert bool(jnp.all(jnp.isfinite(out)))
    print("KERNEL_OK")
</pallas_src>

<mosaic_0001>
module attributes {stable_mosaic.version = 11 : i64} {
  func.func @_encoder_kernel(%arg0: memref<16x64xf32, #tpu.memory_space<vmem>>, %arg1: memref<2x8xf32, #tpu.memory_space<vmem>>, %arg2: memref<1x64xf32, #tpu.memory_space<vmem>>, %arg3: memref<1x64xf32, #tpu.memory_space<vmem>>, %arg4: memref<64x192xf32, #tpu.memory_space<vmem>>, %arg5: memref<1x192xf32, #tpu.memory_space<vmem>>, %arg6: memref<64x64xf32, #tpu.memory_space<vmem>>, %arg7: memref<1x64xf32, #tpu.memory_space<vmem>>, %arg8: memref<1x64xf32, #tpu.memory_space<vmem>>, %arg9: memref<1x64xf32, #tpu.memory_space<vmem>>, %arg10: memref<64x128xf32, #tpu.memory_space<vmem>>, %arg11: memref<1x128xf32, #tpu.memory_space<vmem>>, %arg12: memref<128x64xf32, #tpu.memory_space<vmem>>, %arg13: memref<1x64xf32, #tpu.memory_space<vmem>>, %arg14: memref<1x64xf32, #tpu.memory_space<vmem>>, %arg15: memref<1x64xf32, #tpu.memory_space<vmem>>, %arg16: memref<64x192xf32, #tpu.memory_space<vmem>>, %arg17: memref<1x192xf32, #tpu.memory_space<vmem>>, %arg18: memref<64x64xf32, #tpu.memory_space<vmem>>, %arg19: memref<1x64xf32, #tpu.memory_space<vmem>>, %arg20: memref<1x64xf32, #tpu.memory_space<vmem>>, %arg21: memref<1x64xf32, #tpu.memory_space<vmem>>, %arg22: memref<64x128xf32, #tpu.memory_space<vmem>>, %arg23: memref<1x128xf32, #tpu.memory_space<vmem>>, %arg24: memref<128x64xf32, #tpu.memory_space<vmem>>, %arg25: memref<1x64xf32, #tpu.memory_space<vmem>>, %arg26: memref<1x64xf32, #tpu.memory_space<vmem>>, %arg27: memref<1x64xf32, #tpu.memory_space<vmem>>, %arg28: memref<64x64xf32, #tpu.memory_space<vmem>>, %arg29: memref<1x64xf32, #tpu.memory_space<vmem>>, %arg30: memref<2x64xf32, #tpu.memory_space<vmem>>) attributes {dimension_semantics = [], scalar_prefetch = 0 : i64, scratch_operands = 0 : i64, tpu.core_type = #tpu.core_type<tc>} {
    %c0 = arith.constant 0 : index
    %c0_0 = arith.constant 0 : index
    %0 = vector.load %arg1[%c0, %c0_0] : memref<2x8xf32, #tpu.memory_space<vmem>>, vector<2x8xf32>
    %c0_1 = arith.constant 0 : index
    %c0_2 = arith.constant 0 : index
    %1 = vector.load %arg0[%c0_1, %c0_2] : memref<16x64xf32, #tpu.memory_space<vmem>>, vector<16x64xf32>
    %c0_3 = arith.constant 0 : index
    %c0_4 = arith.constant 0 : index
    %2 = vector.load %arg2[%c0_3, %c0_4] : memref<1x64xf32, #tpu.memory_space<vmem>>, vector<1x64xf32>
    %c0_5 = arith.constant 0 : index
    %c0_6 = arith.constant 0 : index
    %3 = vector.load %arg3[%c0_5, %c0_6] : memref<1x64xf32, #tpu.memory_space<vmem>>, vector<1x64xf32>
    %cst = arith.constant dense<0.000000e+00> : vector<16xf32>
    %4 = vector.multi_reduction <add>, %1, %cst [1] : vector<16x64xf32> to vector<16xf32>
    %5 = vector.shape_cast %4 : vector<16xf32> to vector<16x1xf32>
    %cst_7 = arith.constant 6.400000e+01 : f32
    %6 = vector.broadcast %cst_7 : f32 to vector<16x1xf32>
    %7 = arith.divf %5, %6 : vector<16x1xf32>
    %8 = vector.broadcast %7 : vector<16x1xf32> to vector<16x64xf32>
    %9 = arith.subf %1, %8 : vector<16x64xf32>
    %10 = arith.mulf %9, %9 : vector<16x64xf32>
    %cst_8 = arith.constant dense<0.000000e+00> : vector<16xf32>
    %11 = vector.multi_reduction <add>, %10, %cst_8 [1] : vector<16x64xf32> to vector<16xf32>
    %12 = vector.shape_cast %11 : vector<16xf32> to vector<16x1xf32>
    %cst_9 = arith.constant 6.400000e+01 : f32
    %13 = vector.broadcast %cst_9 : f32 to vector<16x1xf32>
    %14 = arith.divf %12, %13 : vector<16x1xf32>
    %15 = vector.broadcast %7 : vector<16x1xf32> to vector<16x64xf32>
    %16 = arith.subf %1, %15 : vector<16x64xf32>
    %cst_10 = arith.constant 9.99999996E-13 : f32
    %17 = vector.broadcast %cst_10 : f32 to vector<16x1xf32>
    %18 = arith.addf %14, %17 : vector<16x1xf32>
    %19 = math.rsqrt %18 : vector<16x1xf32>
    %20 = vector.broadcast %19 : vector<16x1xf32> to vector<16x64xf32>
    %21 = arith.mulf %16, %20 : vector<16x64xf32>
    %22 = vector.broadcast %2 : vector<1x64xf32> to vector<16x64xf32>
    %23 = arith.mulf %21, %22 : vector<16x64xf32>
    %24 = vector.broadcast %3 : vector<1x64xf32> to vector<16x64xf32>
    %25 = arith.addf %23, %24 : vector<16x64xf32>
    %c0_11 = arith.constant 0 : index
    %c0_12 = arith.constant 0 : index
    %26 = vector.load %arg4[%c0_11, %c0_12] : memref<64x192xf32, #tpu.memory_space<vmem>>, vector<64x192xf32>
    %cst_13 = arith.constant dense<0.000000e+00> : vector<16x192xf32>
    %27 = tpu.matmul %25, %26, %cst_13 {dimension_numbers = #tpu.dot_dimension_numbers<[1], [0], [0], [1], [0, 0, 1, 1], [], []>} : vector<16x64xf32>, vector<64x192xf32>, vector<16x192xf32> -> vector<16x192xf32>
    %c0_14 = arith.constant 0 : index
    %c0_15 = arith.constant 0 : index
    %28 = vector.load %arg5[%c0_14, %c0_15] : memref<1x192xf32, #tpu.memory_space<vmem>>, vector<1x192xf32>
    %29 = vector.broadcast %28 : vector<1x192xf32> to vector<16x192xf32>
    %30 = arith.addf %27, %29 : vector<16x192xf32>
    %31 = vector.extract_strided_slice %0 {offsets = [0, 0], sizes = [1, 8], strides = [1, 1]} : vector<2x8xf32> to vector<1x8xf32>
    %32 = vector.extract_strided_slice %30 {offsets = [0, 0], sizes = [8, 16], strides = [1, 1]} : vector<16x192xf32> to vector<8x16xf32>
    %33 = vector.extract_strided_slice %30 {offsets = [0, 64], sizes = [8, 16], strides = [1, 1]} : vector<16x192xf32> to vector<8x16xf32>
    %34 = vector.extract_strided_slice %30 {offsets = [0, 128], sizes = [8, 16], strides = [1, 1]} : vector<16x192xf32> to vector<8x16xf32>
    %cst_16 = arith.constant dense<0.000000e+00> : vector<8x8xf32>
    %35 = tpu.matmul %32, %33, %cst_16 {dimension_numbers = #tpu.dot_dimension_numbers<[1], [1], [0], [0], [0, 0, 1, 0], [], []>} : vector<8x16xf32>, vector<8x16xf32>, vector<8x8xf32> -> vector<8x8xf32>
    %cst_17 = arith.constant 2.500000e-01 : f32
    %36 = vector.broadcast %cst_17 : f32 to vector<8x8xf32>
    %37 = arith.mulf %35, %36 : vector<8x8xf32>
    %38 = vector.broadcast %31 : vector<1x8xf32> to vector<8x8xf32>
    %39 = arith.addf %37, %38 : vector<8x8xf32>
    %cst_18 = arith.constant dense<0xFF800000> : vector<8xf32>
    %40 = vector.multi_reduction <maximumf>, %39, %cst_18 [1] : vector<8x8xf32> to vector<8xf32>
    %41 = vector.shape_cast %40 : vector<8xf32> to vector<8x1xf32>
    %42 = vector.broadcast %41 : vector<8x1xf32> to vector<8x8xf32>
    %43 = arith.subf %39, %42 : vector<8x8xf32>
    %44 = math.exp %43 : vector<8x8xf32>
    %cst_19 = arith.constant dense<0.000000e+00> : vector<8xf32>
    %45 = vector.multi_reduction <add>, %44, %cst_19 [1] : vector<8x8xf32> to vector<8xf32>
    %46 = vector.shape_cast %45 : vector<8xf32> to vector<8x1xf32>
    %47 = vector.broadcast %46 : vector<8x1xf32> to vector<8x8xf32>
    %48 = arith.divf %44, %47 : vector<8x8xf32>
    %cst_20 = arith.constant dense<0.000000e+00> : vector<8x16xf32>
    %49 = tpu.matmul %48, %34, %cst_20 {dimension_numbers = #tpu.dot_dimension_numbers<[1], [0], [0], [1], [0, 0, 1, 1], [], []>} : vector<8x8xf32>, vector<8x16xf32>, vector<8x16xf32> -> vector<8x16xf32>
    %50 = vector.extract_strided_slice %30 {offsets = [0, 16], sizes = [8, 16], strides = [1, 1]} : vector<16x192xf32> to vector<8x16xf32>
    %51 = vector.extract_strided_slice %30 {offsets = [0, 80], sizes = [8, 16], strides = [1, 1]} : vector<16x192xf32> to vector<8x16xf32>
    %52 = vector.extract_strided_slice %30 {offsets = [0, 144], sizes = [8, 16], strides = [1, 1]} : vector<16x192xf32> to vector<8x16xf32>
    %cst_21 = arith.constant dense<0.000000e+00> : vector<8x8xf32>
    %53 = tpu.matmul %50, %51, %cst_21 {dimension_numbers = #tpu.dot_dimension_numbers<[1], [1], [0], [0], [0, 0, 1, 0], [], []>} : vector<8x16xf32>, vector<8x16xf32>, vector<8x8xf32> -> vector<8x8xf32>
    %cst_22 = arith.constant 2.500000e-01 : f32
    %54 = vector.broadcast %cst_22 : f32 to vector<8x8xf32>
    %55 = arith.mulf %53, %54 : vector<8x8xf32>
    %56 = vector.broadcast %31 : vector<1x8xf32> to vector<8x8xf32>
    %57 = arith.addf %55, %56 : vector<8x8xf32>
    %cst_23 = arith.constant dense<0xFF800000> : vector<8xf32>
    %58 = vector.multi_reduction <maximumf>, %57, %cst_23 [1] : vector<8x8xf32> to vector<8xf32>
    %59 = vector.shape_cast %58 : vector<8xf32> to vector<8x1xf32>
    %60 = vector.broadcast %59 : vector<8x1xf32> to vector<8x8xf32>
    %61 = arith.subf %57, %60 : vector<8x8xf32>
    %62 = math.exp %61 : vector<8x8xf32>
    %cst_24 = arith.constant dense<0.000000e+00> : vector<8xf32>
    %63 = vector.multi_reduction <add>, %62, %cst_24 [1] : vector<8x8xf32> to vector<8xf32>
    %64 = vector.shape_cast %63 : vector<8xf32> to vector<8x1xf32>
    %65 = vector.broadcast %64 : vector<8x1xf32> to vector<8x8xf32>
    %66 = arith.divf %62, %65 : vector<8x8xf32>
    %cst_25 = arith.constant dense<0.000000e+00> : vector<8x16xf32>
    %67 = tpu.matmul %66, %52, %cst_25 {dimension_numbers = #tpu.dot_dimension_numbers<[1], [0], [0], [1], [0, 0, 1, 1], [], []>} : vector<8x8xf32>, vector<8x16xf32>, vector<8x16xf32> -> vector<8x16xf32>
    %68 = vector.extract_strided_slice %30 {offsets = [0, 32], sizes = [8, 16], strides = [1, 1]} : vector<16x192xf32> to vector<8x16xf32>
    %69 = vector.extract_strided_slice %30 {offsets = [0, 96], sizes = [8, 16], strides = [1, 1]} : vector<16x192xf32> to vector<8x16xf32>
    %70 = vector.extract_strided_slice %30 {offsets = [0, 160], sizes = [8, 16], strides = [1, 1]} : vector<16x192xf32> to vector<8x16xf32>
    %cst_26 = arith.constant dense<0.000000e+00> : vector<8x8xf32>
    %71 = tpu.matmul %68, %69, %cst_26 {dimension_numbers = #tpu.dot_dimension_numbers<[1], [1], [0], [0], [0, 0, 1, 0], [], []>} : vector<8x16xf32>, vector<8x16xf32>, vector<8x8xf32> -> vector<8x8xf32>
    %cst_27 = arith.constant 2.500000e-01 : f32
    %72 = vector.broadcast %cst_27 : f32 to vector<8x8xf32>
    %73 = arith.mulf %71, %72 : vector<8x8xf32>
    %74 = vector.broadcast %31 : vector<1x8xf32> to vector<8x8xf32>
    %75 = arith.addf %73, %74 : vector<8x8xf32>
    %cst_28 = arith.constant dense<0xFF800000> : vector<8xf32>
    %76 = vector.multi_reduction <maximumf>, %75, %cst_28 [1] : vector<8x8xf32> to vector<8xf32>
    %77 = vector.shape_cast %76 : vector<8xf32> to vector<8x1xf32>
    %78 = vector.broadcast %77 : vector<8x1xf32> to vector<8x8xf32>
    %79 = arith.subf %75, %78 : vector<8x8xf32>
    %80 = math.exp %79 : vector<8x8xf32>
    %cst_29 = arith.constant dense<0.000000e+00> : vector<8xf32>
    %81 = vector.multi_reduction <add>, %80, %cst_29 [1] : vector<8x8xf32> to vector<8xf32>
    %82 = vector.shape_cast %81 : vector<8xf32> to vector<8x1xf32>
    %83 = vector.broadcast %82 : vector<8x1xf32> to vector<8x8xf32>
    %84 = arith.divf %80, %83 : vector<8x8xf32>
    %cst_30 = arith.constant dense<0.000000e+00> : vector<8x16xf32>
    %85 = tpu.matmul %84, %70, %cst_30 {dimension_numbers = #tpu.dot_dimension_numbers<[1], [0], [0], [1], [0, 0, 1, 1], [], []>} : vector<8x8xf32>, vector<8x16xf32>, vector<8x16xf32> -> vector<8x16xf32>
    %86 = vector.extract_strided_slice %30 {offsets = [0, 48], sizes = [8, 16], strides = [1, 1]} : vector<16x192xf32> to vector<8x16xf32>
    %87 = vector.extract_strided_slice %30 {offsets = [0, 112], sizes = [8, 16], strides = [1, 1]} : vector<16x192xf32> to vector<8x16xf32>
    %88 = vector.extract_strided_slice %30 {offsets = [0, 176], sizes = [8, 16], strides = [1, 1]} : vector<16x192xf32> to vector<8x16xf32>
    %cst_31 = arith.constant dense<0.000000e+00> : vector<8x8xf32>
    %89 = tpu.matmul %86, %87, %cst_31 {dimension_numbers = #tpu.dot_dimension_numbers<[1], [1], [0], [0], [0, 0, 1, 0], [], []>} : vector<8x16xf32>, vector<8x16xf32>, vector<8x8xf32> -> vector<8x8xf32>
    %cst_32 = arith.constant 2.500000e-01 : f32
    %90 = vector.broadcast %cst_32 : f32 to vector<8x8xf32>
    %91 = arith.mulf %89, %90 : vector<8x8xf32>
    %92 = vector.broadcast %31 : vector<1x8xf32> to vector<8x8xf32>
    %93 = arith.addf %91, %92 : vector<8x8xf32>
    %cst_33 = arith.constant dense<0xFF800000> : vector<8xf32>
    %94 = vector.multi_reduction <maximumf>, %93, %cst_33 [1] : vector<8x8xf32> to vector<8xf32>
    %95 = vector.shape_cast %94 : vector<8xf32> to vector<8x1xf32>
    %96 = vector.broadcast %95 : vector<8x1xf32> to vector<8x8xf32>
    %97 = arith.subf %93, %96 : vector<8x8xf32>
    %98 = math.exp %97 : vector<8x8xf32>
    %cst_34 = arith.constant dense<0.000000e+00> : vector<8xf32>
    %99 = vector.multi_reduction <add>, %98, %cst_34 [1] : vector<8x8xf32> to vector<8xf32>
    %100 = vector.shape_cast %99 : vector<8xf32> to vector<8x1xf32>
    %101 = vector.broadcast %100 : vector<8x1xf32> to vector<8x8xf32>
    %102 = arith.divf %98, %101 : vector<8x8xf32>
    %cst_35 = arith.constant dense<0.000000e+00> : vector<8x16xf32>
    %103 = tpu.matmul %102, %88, %cst_35 {dimension_numbers = #tpu.dot_dimension_numbers<[1], [0], [0], [1], [0, 0, 1, 1], [], []>} : vector<8x8xf32>, vector<8x16xf32>, vector<8x16xf32> -> vector<8x16xf32>
    %104 = tpu.concatenate %49, %67, %85, %103 in 1 : vector<8x16xf32>, vector<8x16xf32>, vector<8x16xf32>, vector<8x16xf32> -> vector<8x64xf32>
    %105 = vector.extract_strided_slice %0 {offsets = [1, 0], sizes = [1, 8], strides = [1, 1]} : vector<2x8xf32> to vector<1x8xf32>
    %106 = vector.extract_strided_slice %30 {offsets = [8, 0], sizes = [8, 16], strides = [1, 1]} : vector<16x192xf32> to vector<8x16xf32>
    %107 = vector.extract_strided_slice %30 {offsets = [8, 64], sizes = [8, 16], strides = [1, 1]} : vector<16x192xf32> to vector<8x16xf32>
    %108 = vector.extract_strided_slice %30 {offsets = [8, 128], sizes = [8, 16], strides = [1, 1]} : vector<16x192xf32> to vector<8x16xf32>
    %cst_36 = arith.constant dense<0.000000e+00> : vector<8x8xf32>
    %109 = tpu.matmul %106, %107, %cst_36 {dimension_numbers = #tpu.dot_dimension_numbers<[1], [1], [0], [0], [0, 0, 1, 0], [], []>} : vector<8x16xf32>, vector<8x16xf32>, vector<8x8xf32> -> vector<8x8xf32>
    %cst_37 = arith.constant 2.500000e-01 : f32
    %110 = vector.broadcast %cst_37 : f32 to vector<8x8xf32>
    %111 = arith.mulf %109, %110 : vector<8x8xf32>
    %112 = vector.broadcast %105 : vector<1x8xf32> to vector<8x8xf32>
    %113 = arith.addf %111, %112 : vector<8x8xf32>
    %cst_38 = arith.constant dense<0xFF800000> : vector<8xf32>
    %114 = vector.multi_reduction <maximumf>, %113, %cst_38 [1] : vector<8x8xf32> to vector<8xf32>
    %115 = vector.shape_cast %114 : vector<8xf32> to vector<8x1xf32>
    %116 = vector.broadcast %115 : vector<8x1xf32> to vector<8x8xf32>
    %117 = arith.subf %113, %116 : vector<8x8xf32>
    %118 = math.exp %117 : vector<8x8xf32>
    %cst_39 = arith.constant dense<0.000000e+00> : vector<8xf32>
    %119 = vector.multi_reduction <add>, %118, %cst_39 [1] : vector<8x8xf32> to vector<8xf32>
    %120 = vector.shape_cast %119 : vector<8xf32> to vector<8x1xf32>
    %121 = vector.broadcast %120 : vector<8x1xf32> to vector<8x8xf32>
    %122 = arith.divf %118, %121 : vector<8x8xf32>
    %cst_40 = arith.constant dense<0.000000e+00> : vector<8x16xf32>
    %123 = tpu.matmul %122, %108, %cst_40 {dimension_numbers = #tpu.dot_dimension_numbers<[1], [0], [0], [1], [0, 0, 1, 1], [], []>} : vector<8x8xf32>, vector<8x16xf32>, vector<8x16xf32> -> vector<8x16xf32>
    %124 = vector.extract_strided_slice %30 {offsets = [8, 16], sizes = [8, 16], strides = [1, 1]} : vector<16x192xf32> to vector<8x16xf32>
    %125 = vector.extract_strided_slice %30 {offsets = [8, 80], sizes = [8, 16], strides = [1, 1]} : vector<16x192xf32> to vector<8x16xf32>
    %126 = vector.extract_strided_slice %30 {offsets = [8, 144], sizes = [8, 16], strides = [1, 1]} : vector<16x192xf32> to vector<8x16xf32>
    %cst_41 = arith.constant dense<0.000000e+00> : vector<8x8xf32>
    %127 = tpu.matmul %124, %125, %cst_41 {dimension_numbers = #tpu.dot_dimension_numbers<[1], [1], [0], [0], [0, 0, 1, 0], [], []>} : vector<8x16xf32>, vector<8x16xf32>, vector<8x8xf32> -> vector<8x8xf32>
    %cst_42 = arith.constant 2.500000e-01 : f32
    %128 = vector.broadcast %cst_42 : f32 to vector<8x8xf32>
    %129 = arith.mulf %127, %128 : vector<8x8xf32>
    %130 = vector.broadcast %105 : vector<1x8xf32> to vector<8x8xf32>
    %131 = arith.addf %129, %130 : vector<8x8xf32>
    %cst_43 = arith.constant dense<0xFF800000> : vector<8xf32>
    %132 = vector.multi_reduction <maximumf>, %131, %cst_43 [1] : vector<8x8xf32> to vector<8xf32>
    %133 = vector.shape_cast %132 : vector<8xf32> to vector<8x1xf32>
    %134 = vector.broadcast %133 : vector<8x1xf32> to vector<8x8xf32>
    %135 = arith.subf %131, %134 : vector<8x8xf32>
    %136 = math.exp %135 : vector<8x8xf32>
    %cst_44 = arith.constant dense<0.000000e+00> : vector<8xf32>
    %137 = vector.multi_reduction <add>, %136, %cst_44 [1] : vector<8x8xf32> to vector<8xf32>
    %138 = vector.shape_cast %137 : vector<8xf32> to vector<8x1xf32>
    %139 = vector.broadcast %138 : vector<8x1xf32> to vector<8x8xf32>
    %140 = arith.divf %136, %139 : vector<8x8xf32>
    %cst_45 = arith.constant dense<0.000000e+00> : vector<8x16xf32>
    %141 = tpu.matmul %140, %126, %cst_45 {dimension_numbers = #tpu.dot_dimension_numbers<[1], [0], [0], [1], [0, 0, 1, 1], [], []>} : vector<8x8xf32>, vector<8x16xf32>, vector<8x16xf32> -> vector<8x16xf32>
    %142 = vector.extract_strided_slice %30 {offsets = [8, 32], sizes = [8, 16], strides = [1, 1]} : vector<16x192xf32> to vector<8x16xf32>
    %143 = vector.extract_strided_slice %30 {offsets = [8, 96], sizes = [8, 16], strides = [1, 1]} : vector<16x192xf32> to vector<8x16xf32>
    %144 = vector.extract_strided_slice %30 {offsets = [8, 160], sizes = [8, 16], strides = [1, 1]} : vector<16x192xf32> to vector<8x16xf32>
    %cst_46 = arith.constant dense<0.000000e+00> : vector<8x8xf32>
    %145 = tpu.matmul %142, %143, %cst_46 {dimension_numbers = #tpu.dot_dimension_numbers<[1], [1], [0], [0], [0, 0, 1, 0], [], []>} : vector<8x16xf32>, vector<8x16xf32>, vector<8x8xf32> -> vector<8x8xf32>
    %cst_47 = arith.constant 2.500000e-01 : f32
    %146 = vector.broadcast %cst_47 : f32 to vector<8x8xf32>
    %147 = arith.mulf %145, %146 : vector<8x8xf32>
    %148 = vector.broadcast %105 : vector<1x8xf32> to vector<8x8xf32>
    %149 = arith.addf %147, %148 : vector<8x8xf32>
    %cst_48 = arith.constant dense<0xFF800000> : vector<8xf32>
    %150 = vector.multi_reduction <maximumf>, %149, %cst_48 [1] : vector<8x8xf32> to vector<8xf32>
    %151 = vector.shape_cast %150 : vector<8xf32> to vector<8x1xf32>
    %152 = vector.broadcast %151 : vector<8x1xf32> to vector<8x8xf32>
    %153 = arith.subf %149, %152 : vector<8x8xf32>
    %154 = math.exp %153 : vector<8x8xf32>
    %cst_49 = arith.constant dense<0.000000e+00> : vector<8xf32>
    %155 = vector.multi_reduction <add>, %154, %cst_49 [1] : vector<8x8xf32> to vector<8xf32>
    %156 = vector.shape_cast %155 : vector<8xf32> to vector<8x1xf32>
    %157 = vector.broadcast %156 : vector<8x1xf32> to vector<8x8xf32>
    %158 = arith.divf %154, %157 : vector<8x8xf32>
    %cst_50 = arith.constant dense<0.000000e+00> : vector<8x16xf32>
    %159 = tpu.matmul %158, %144, %cst_50 {dimension_numbers = #tpu.dot_dimension_numbers<[1], [0], [0], [1], [0, 0, 1, 1], [], []>} : vector<8x8xf32>, vector<8x16xf32>, vector<8x16xf32> -> vector<8x16xf32>
    %160 = vector.extract_strided_slice %30 {offsets = [8, 48], sizes = [8, 16], strides = [1, 1]} : vector<16x192xf32> to vector<8x16xf32>
    %161 = vector.extract_strided_slice %30 {offsets = [8, 112], sizes = [8, 16], strides = [1, 1]} : vector<16x192xf32> to vector<8x16xf32>
    %162 = vector.extract_strided_slice %30 {offsets = [8, 176], sizes = [8, 16], strides = [1, 1]} : vector<16x192xf32> to vector<8x16xf32>
    %cst_51 = arith.constant dense<0.000000e+00> : vector<8x8xf32>
    %163 = tpu.matmul %160, %161, %cst_51 {dimension_numbers = #tpu.dot_dimension_numbers<[1], [1], [0], [0], [0, 0, 1, 0], [], []>} : vector<8x16xf32>, vector<8x16xf32>, vector<8x8xf32> -> vector<8x8xf32>
    %cst_52 = arith.constant 2.500000e-01 : f32
    %164 = vector.broadcast %cst_52 : f32 to vector<8x8xf32>
    %165 = arith.mulf %163, %164 : vector<8x8xf32>
    %166 = vector.broadcast %105 : vector<1x8xf32> to vector<8x8xf32>
    %167 = arith.addf %165, %166 : vector<8x8xf32>
    %cst_53 = arith.constant dense<0xFF800000> : vector<8xf32>
    %168 = vector.multi_reduction <maximumf>, %167, %cst_53 [1] : vector<8x8xf32> to vector<8xf32>
    %169 = vector.shape_cast %168 : vector<8xf32> to vector<8x1xf32>
    %170 = vector.broadcast %169 : vector<8x1xf32> to vector<8x8xf32>
    %171 = arith.subf %167, %170 : vector<8x8xf32>
    %172 = math.exp %171 : vector<8x8xf32>
    %cst_54 = arith.constant dense<0.000000e+00> : vector<8xf32>
    %173 = vector.multi_reduction <add>, %172, %cst_54 [1] : vector<8x8xf32> to vector<8xf32>
    %174 = vector.shape_cast %173 : vector<8xf32> to vector<8x1xf32>
    %175 = vector.broadcast %174 : vector<8x1xf32> to vector<8x8xf32>
    %176 = arith.divf %172, %175 : vector<8x8xf32>
    %cst_55 = arith.constant dense<0.000000e+00> : vector<8x16xf32>
    %177 = tpu.matmul %176, %162, %cst_55 {dimension_numbers = #tpu.dot_dimension_numbers<[1], [0], [0], [1], [0, 0, 1, 1], [], []>} : vector<8x8xf32>, vector<8x16xf32>, vector<8x16xf32> -> vector<8x16xf32>
    %178 = tpu.concatenate %123, %141, %159, %177 in 1 : vector<8x16xf32>, vector<8x16xf32>, vector<8x16xf32>, vector<8x16xf32> -> vector<8x64xf32>
    %179 = tpu.concatenate %104, %178 in 0 : vector<8x64xf32>, vector<8x64xf32> -> vector<16x64xf32>
    %c0_56 = arith.constant 0 : index
    %c0_57 = arith.constant 0 : index
    %180 = vector.load %arg6[%c0_56, %c0_57] : memref<64x64xf32, #tpu.memory_space<vmem>>, vector<64x64xf32>
    %cst_58 = arith.constant dense<0.000000e+00> : vector<16x64xf32>
    %181 = tpu.matmul %179, %180, %cst_58 {dimension_numbers = #tpu.dot_dimension_numbers<[1], [0], [0], [1], [0, 0, 1, 1], [], []>} : vector<16x64xf32>, vector<64x64xf32>, vector<16x64xf32> -> vector<16x64xf32>
    %c0_59 = arith.constant 0 : index
    %c0_60 = arith.constant 0 : index
    %182 = vector.load %arg7[%c0_59, %c0_60] : memref<1x64xf32, #tpu.memory_space<vmem>>, vector<1x64xf32>
    %183 = vector.broadcast %182 : vector<1x64xf32> to vector<16x64xf32>
    %184 = arith.addf %181, %183 : vector<16x64xf32>
    %185 = arith.addf %184, %25 : vector<16x64xf32>
    %c0_61 = arith.constant 0 : index
    %c0_62 = arith.constant 0 : index
    %186 = vector.load %arg8[%c0_61, %c0_62] : memref<1x64xf32, #tpu.memory_space<vmem>>, vector<1x64xf32>
    %c0_63 = arith.constant 0 : index
    %c0_64 = arith.constant 0 : index
    %187 = vector.load %arg9[%c0_63, %c0_64] : memref<1x64xf32, #tpu.memory_space<vmem>>, vector<1x64xf32>
    %cst_65 = arith.constant dense<0.000000e+00> : vector<16xf32>
    %188 = vector.multi_reduction <add>, %185, %cst_65 [1] : vector<16x64xf32> to vector<16xf32>
    %189 = vector.shape_cast %188 : vector<16xf32> to vector<16x1xf32>
    %cst_66 = arith.constant 6.400000e+01 : f32
    %190 = vector.broadcast %cst_66 : f32 to vector<16x1xf32>
    %191 = arith.divf %189, %190 : vector<16x1xf32>
    %192 = vector.broadcast %191 : vector<16x1xf32> to vector<16x64xf32>
    %193 = arith.subf %185, %192 : vector<16x64xf32>
    %194 = arith.mulf %193, %193 : vector<16x64xf32>
    %cst_67 = arith.constant dense<0.000000e+00> : vector<16xf32>
    %195 = vector.multi_reduction <add>, %194, %cst_67 [1] : vector<16x64xf32> to vector<16xf32>
    %196 = vector.shape_cast %195 : vector<16xf32> to vector<16x1xf32>
    %cst_68 = arith.constant 6.400000e+01 : f32
    %197 = vector.broadcast %cst_68 : f32 to vector<16x1xf32>
    %198 = arith.divf %196, %197 : vector<16x1xf32>
    %199 = vector.broadcast %191 : vector<16x1xf32> to vector<16x64xf32>
    %200 = arith.subf %185, %199 : vector<16x64xf32>
    %cst_69 = arith.constant 9.99999996E-13 : f32
    %201 = vector.broadcast %cst_69 : f32 to vector<16x1xf32>
    %202 = arith.addf %198, %201 : vector<16x1xf32>
    %203 = math.rsqrt %202 : vector<16x1xf32>
    %204 = vector.broadcast %203 : vector<16x1xf32> to vector<16x64xf32>
    %205 = arith.mulf %200, %204 : vector<16x64xf32>
    %206 = vector.broadcast %186 : vector<1x64xf32> to vector<16x64xf32>
    %207 = arith.mulf %205, %206 : vector<16x64xf32>
    %208 = vector.broadcast %187 : vector<1x64xf32> to vector<16x64xf32>
    %209 = arith.addf %207, %208 : vector<16x64xf32>
    %c0_70 = arith.constant 0 : index
    %c0_71 = arith.constant 0 : index
    %210 = vector.load %arg10[%c0_70, %c0_71] : memref<64x128xf32, #tpu.memory_space<vmem>>, vector<64x128xf32>
    %cst_72 = arith.constant dense<0.000000e+00> : vector<16x128xf32>
    %211 = tpu.matmul %209, %210, %cst_72 {dimension_numbers = #tpu.dot_dimension_numbers<[1], [0], [0], [1], [0, 0, 1, 1], [], []>} : vector<16x64xf32>, vector<64x128xf32>, vector<16x128xf32> -> vector<16x128xf32>
    %c0_73 = arith.constant 0 : index
    %c0_74 = arith.constant 0 : index
    %212 = vector.load %arg11[%c0_73, %c0_74] : memref<1x128xf32, #tpu.memory_space<vmem>>, vector<1x128xf32>
    %213 = vector.broadcast %212 : vector<1x128xf32> to vector<16x128xf32>
    %214 = arith.addf %211, %213 : vector<16x128xf32>
    %215 = arith.mulf %214, %214 : vector<16x128xf32>
    %216 = arith.mulf %214, %215 : vector<16x128xf32>
    %cst_75 = arith.constant 4.471500e-02 : f32
    %217 = vector.broadcast %cst_75 : f32 to vector<16x128xf32>
    %218 = arith.mulf %217, %216 : vector<16x128xf32>
    %219 = arith.addf %214, %218 : vector<16x128xf32>
    %cst_76 = arith.constant 0.797884583 : f32
    %220 = vector.broadcast %cst_76 : f32 to vector<16x128xf32>
    %221 = arith.mulf %220, %219 : vector<16x128xf32>
    %222 = math.tanh %221 : vector<16x128xf32>
    %cst_77 = arith.constant 1.000000e+00 : f32
    %223 = vector.broadcast %cst_77 : f32 to vector<16x128xf32>
    %224 = arith.addf %223, %222 : vector<16x128xf32>
    %cst_78 = arith.constant 5.000000e-01 : f32
    %225 = vector.broadcast %cst_78 : f32 to vector<16x128xf32>
    %226 = arith.mulf %225, %224 : vector<16x128xf32>
    %227 = arith.mulf %214, %226 : vector<16x128xf32>
    %c0_79 = arith.constant 0 : index
    %c0_80 = arith.constant 0 : index
    %228 = vector.load %arg12[%c0_79, %c0_80] : memref<128x64xf32, #tpu.memory_space<vmem>>, vector<128x64xf32>
    %cst_81 = arith.constant dense<0.000000e+00> : vector<16x64xf32>
    %229 = tpu.matmul %227, %228, %cst_81 {dimension_numbers = #tpu.dot_dimension_numbers<[1], [0], [0], [1], [0, 0, 1, 1], [], []>} : vector<16x128xf32>, vector<128x64xf32>, vector<16x64xf32> -> vector<16x64xf32>
    %c0_82 = arith.constant 0 : index
    %c0_83 = arith.constant 0 : index
    %230 = vector.load %arg13[%c0_82, %c0_83] : memref<1x64xf32, #tpu.memory_space<vmem>>, vector<1x64xf32>
    %231 = vector.broadcast %230 : vector<1x64xf32> to vector<16x64xf32>
    %232 = arith.addf %229, %231 : vector<16x64xf32>
    %233 = arith.addf %232, %209 : vector<16x64xf32>
    %c0_84 = arith.constant 0 : index
    %c0_85 = arith.constant 0 : index
    %234 = vector.load %arg14[%c0_84, %c0_85] : memref<1x64xf32, #tpu.memory_space<vmem>>, vector<1x64xf32>
    %c0_86 = arith.constant 0 : index
    %c0_87 = arith.constant 0 : index
    %235 = vector.load %arg15[%c0_86, %c0_87] : memref<1x64xf32, #tpu.memory_space<vmem>>, vector<1x64xf32>
    %cst_88 = arith.constant dense<0.000000e+00> : vector<16xf32>
    %236 = vector.multi_reduction <add>, %233, %cst_88 [1] : vector<16x64xf32> to vector<16xf32>
    %237 = vector.shape_cast %236 : vector<16xf32> to vector<16x1xf32>
    %cst_89 = arith.constant 6.400000e+01 : f32
    %238 = vector.broadcast %cst_89 : f32 to vector<16x1xf32>
    %239 = arith.divf %237, %238 : vector<16x1xf32>
    %240 = vector.broadcast %239 : vector<16x1xf32> to vector<16x64xf32>
    %241 = arith.subf %233, %240 : vector<16x64xf32>
    %242 = arith.mulf %241, %241 : vector<16x64xf32>
    %cst_90 = arith.constant dense<0.000000e+00> : vector<16xf32>
    %243 = vector.multi_reduction <add>, %242, %cst_90 [1] : vector<16x64xf32> to vector<16xf32>
    %244 = vector.shape_cast %243 : vector<16xf32> to vector<16x1xf32>
    %cst_91 = arith.constant 6.400000e+01 : f32
    %245 = vector.broadcast %cst_91 : f32 to vector<16x1xf32>
    %246 = arith.divf %244, %245 : vector<16x1xf32>
    %247 = vector.broadcast %239 : vector<16x1xf32> to vector<16x64xf32>
    %248 = arith.subf %233, %247 : vector<16x64xf32>
    %cst_92 = arith.constant 9.99999996E-13 : f32
    %249 = vector.broadcast %cst_92 : f32 to vector<16x1xf32>
    %250 = arith.addf %246, %249 : vector<16x1xf32>
    %251 = math.rsqrt %250 : vector<16x1xf32>
    %252 = vector.broadcast %251 : vector<16x1xf32> to vector<16x64xf32>
    %253 = arith.mulf %248, %252 : vector<16x64xf32>
    %254 = vector.broadcast %234 : vector<1x64xf32> to vector<16x64xf32>
    %255 = arith.mulf %253, %254 : vector<16x64xf32>
    %256 = vector.broadcast %235 : vector<1x64xf32> to vector<16x64xf32>
    %257 = arith.addf %255, %256 : vector<16x64xf32>
    %c0_93 = arith.constant 0 : index
    %c0_94 = arith.constant 0 : index
    %258 = vector.load %arg16[%c0_93, %c0_94] : memref<64x192xf32, #tpu.memory_space<vmem>>, vector<64x192xf32>
    %cst_95 = arith.constant dense<0.000000e+00> : vector<16x192xf32>
    %259 = tpu.matmul %257, %258, %cst_95 {dimension_numbers = #tpu.dot_dimension_numbers<[1], [0], [0], [1], [0, 0, 1, 1], [], []>} : vector<16x64xf32>, vector<64x192xf32>, vector<16x192xf32> -> vector<16x192xf32>
    %c0_96 = arith.constant 0 : index
    %c0_97 = arith.constant 0 : index
    %260 = vector.load %arg17[%c0_96, %c0_97] : memref<1x192xf32, #tpu.memory_space<vmem>>, vector<1x192xf32>
    %261 = vector.broadcast %260 : vector<1x192xf32> to vector<16x192xf32>
    %262 = arith.addf %259, %261 : vector<16x192xf32>
    %263 = vector.extract_strided_slice %0 {offsets = [0, 0], sizes = [1, 8], strides = [1, 1]} : vector<2x8xf32> to vector<1x8xf32>
    %264 = vector.extract_strided_slice %262 {offsets = [0, 0], sizes = [8, 16], strides = [1, 1]} : vector<16x192xf32> to vector<8x16xf32>
    %265 = vector.extract_strided_slice %262 {offsets = [0, 64], sizes = [8, 16], strides = [1, 1]} : vector<16x192xf32> to vector<8x16xf32>
    %266 = vector.extract_strided_slice %262 {offsets = [0, 128], sizes = [8, 16], strides = [1, 1]} : vector<16x192xf32> to vector<8x16xf32>
    %cst_98 = arith.constant dense<0.000000e+00> : vector<8x8xf32>
    %267 = tpu.matmul %264, %265, %cst_98 {dimension_numbers = #tpu.dot_dimension_numbers<[1], [1], [0], [0], [0, 0, 1, 0], [], []>} : vector<8x16xf32>, vector<8x16xf32>, vector<8x8xf32> -> vector<8x8xf32>
    %cst_99 = arith.constant 2.500000e-01 : f32
    %268 = vector.broadcast %cst_99 : f32 to vector<8x8xf32>
    %269 = arith.mulf %267, %268 : vector<8x8xf32>
    %270 = vector.broadcast %263 : vector<1x8xf32> to vector<8x8xf32>
    %271 = arith.addf %269, %270 : vector<8x8xf32>
    %cst_100 = arith.constant dense<0xFF800000> : vector<8xf32>
    %272 = vector.multi_reduction <maximumf>, %271, %cst_100 [1] : vector<8x8xf32> to vector<8xf32>
    %273 = vector.shape_cast %272 : vector<8xf32> to vector<8x1xf32>
    %274 = vector.broadcast %273 : vector<8x1xf32> to vector<8x8xf32>
    %275 = arith.subf %271, %274 : vector<8x8xf32>
    %276 = math.exp %275 : vector<8x8xf32>
    %cst_101 = arith.constant dense<0.000000e+00> : vector<8xf32>
    %277 = vector.multi_reduction <add>, %276, %cst_101 [1] : vector<8x8xf32> to vector<8xf32>
    %278 = vector.shape_cast %277 : vector<8xf32> to vector<8x1xf32>
    %279 = vector.broadcast %278 : vector<8x1xf32> to vector<8x8xf32>
    %280 = arith.divf %276, %279 : vector<8x8xf32>
    %cst_102 = arith.constant dense<0.000000e+00> : vector<8x16xf32>
    %281 = tpu.matmul %280, %266, %cst_102 {dimension_numbers = #tpu.dot_dimension_numbers<[1], [0], [0], [1], [0, 0, 1, 1], [], []>} : vector<8x8xf32>, vector<8x16xf32>, vector<8x16xf32> -> vector<8x16xf32>
    %282 = vector.extract_strided_slice %262 {offsets = [0, 16], sizes = [8, 16], strides = [1, 1]} : vector<16x192xf32> to vector<8x16xf32>
    %283 = vector.extract_strided_slice %262 {offsets = [0, 80], sizes = [8, 16], strides = [1, 1]} : vector<16x192xf32> to vector<8x16xf32>
    %284 = vector.extract_strided_slice %262 {offsets = [0, 144], sizes = [8, 16], strides = [1, 1]} : vector<16x192xf32> to vector<8x16xf32>
    %cst_103 = arith.constant dense<0.000000e+00> : vector<8x8xf32>
    %285 = tpu.matmul %282, %283, %cst_103 {dimension_numbers = #tpu.dot_dimension_numbers<[1], [1], [0], [0], [0, 0, 1, 0], [], []>} : vector<8x16xf32>, vector<8x16xf32>, vector<8x8xf32> -> vector<8x8xf32>
    %cst_104 = arith.constant 2.500000e-01 : f32
    %286 = vector.broadcast %cst_104 : f32 to vector<8x8xf32>
    %287 = arith.mulf %285, %286 : vector<8x8xf32>
    %288 = vector.broadcast %263 : vector<1x8xf32> to vector<8x8xf32>
    %289 = arith.addf %287, %288 : vector<8x8xf32>
    %cst_105 = arith.constant dense<0xFF800000> : vector<8xf32>
    %290 = vector.multi_reduction <maximumf>, %289, %cst_105 [1] : vector<8x8xf32> to vector<8xf32>
    %291 = vector.shape_cast %290 : vector<8xf32> to vector<8x1xf32>
    %292 = vector.broadcast %291 : vector<8x1xf32> to vector<8x8xf32>
    %293 = arith.subf %289, %292 : vector<8x8xf32>
    %294 = math.exp %293 : vector<8x8xf32>
    %cst_106 = arith.constant dense<0.000000e+00> : vector<8xf32>
    %295 = vector.multi_reduction <add>, %294, %cst_106 [1] : vector<8x8xf32> to vector<8xf32>
    %296 = vector.shape_cast %295 : vector<8xf32> to vector<8x1xf32>
    %297 = vector.broadcast %296 : vector<8x1xf32> to vector<8x8xf32>
    %298 = arith.divf %294, %297 : vector<8x8xf32>
    %cst_107 = arith.constant dense<0.000000e+00> : vector<8x16xf32>
    %299 = tpu.matmul %298, %284, %cst_107 {dimension_numbers = #tpu.dot_dimension_numbers<[1], [0], [0], [1], [0, 0, 1, 1], [], []>} : vector<8x8xf32>, vector<8x16xf32>, vector<8x16xf32> -> vector<8x16xf32>
    %300 = vector.extract_strided_slice %262 {offsets = [0, 32], sizes = [8, 16], strides = [1, 1]} : vector<16x192xf32> to vector<8x16xf32>
    %301 = vector.extract_strided_slice %262 {offsets = [0, 96], sizes = [8, 16], strides = [1, 1]} : vector<16x192xf32> to vector<8x16xf32>
    %302 = vector.extract_strided_slice %262 {offsets = [0, 160], sizes = [8, 16], strides = [1, 1]} : vector<16x192xf32> to vector<8x16xf32>
    %cst_108 = arith.constant dense<0.000000e+00> : vector<8x8xf32>
    %303 = tpu.matmul %300, %301, %cst_108 {dimension_numbers = #tpu.dot_dimension_numbers<[1], [1], [0], [0], [0, 0, 1, 0], [], []>} : vector<8x16xf32>, vector<8x16xf32>, vector<8x8xf32> -> vector<8x8xf32>
    %cst_109 = arith.constant 2.500000e-01 : f32
    %304 = vector.broadcast %cst_109 : f32 to vector<8x8xf32>
    %305 = arith.mulf %303, %304 : vector<8x8xf32>
    %306 = vector.broadcast %263 : vector<1x8xf32> to vector<8x8xf32>
    %307 = arith.addf %305, %306 : vector<8x8xf32>
    %cst_110 = arith.constant dense<0xFF800000> : vector<8xf32>
    %308 = vector.multi_reduction <maximumf>, %307, %cst_110 [1] : vector<8x8xf32> to vector<8xf32>
    %309 = vector.shape_cast %308 : vector<8xf32> to vector<8x1xf32>
    %310 = vector.broadcast %309 : vector<8x1xf32> to vector<8x8xf32>
    %311 = arith.subf %307, %310 : vector<8x8xf32>
    %312 = math.exp %311 : vector<8x8xf32>
    %cst_111 = arith.constant dense<0.000000e+00> : vector<8xf32>
    %313 = vector.multi_reduction <add>, %312, %cst_111 [1] : vector<8x8xf32> to vector<8xf32>
    %314 = vector.shape_cast %313 : vector<8xf32> to vector<8x1xf32>
    %315 = vector.broadcast %314 : vector<8x1xf32> to vector<8x8xf32>
    %316 = arith.divf %312, %315 : vector<8x8xf32>
    %cst_112 = arith.constant dense<0.000000e+00> : vector<8x16xf32>
    %317 = tpu.matmul %316, %302, %cst_112 {dimension_numbers = #tpu.dot_dimension_numbers<[1], [0], [0], [1], [0, 0, 1, 1], [], []>} : vector<8x8xf32>, vector<8x16xf32>, vector<8x16xf32> -> vector<8x16xf32>
    %318 = vector.extract_strided_slice %262 {offsets = [0, 48], sizes = [8, 16], strides = [1, 1]} : vector<16x192xf32> to vector<8x16xf32>
    %319 = vector.extract_strided_slice %262 {offsets = [0, 112], sizes = [8, 16], strides = [1, 1]} : vector<16x192xf32> to vector<8x16xf32>
    %320 = vector.extract_strided_slice %262 {offsets = [0, 176], sizes = [8, 16], strides = [1, 1]} : vector<16x192xf32> to vector<8x16xf32>
    %cst_113 = arith.constant dense<0.000000e+00> : vector<8x8xf32>
    %321 = tpu.matmul %318, %319, %cst_113 {dimension_numbers = #tpu.dot_dimension_numbers<[1], [1], [0], [0], [0, 0, 1, 0], [], []>} : vector<8x16xf32>, vector<8x16xf32>, vector<8x8xf32> -> vector<8x8xf32>
    %cst_114 = arith.constant 2.500000e-01 : f32
    %322 = vector.broadcast %cst_114 : f32 to vector<8x8xf32>
    %323 = arith.mulf %321, %322 : vector<8x8xf32>
    %324 = vector.broadcast %263 : vector<1x8xf32> to vector<8x8xf32>
    %325 = arith.addf %323, %324 : vector<8x8xf32>
    %cst_115 = arith.constant dense<0xFF800000> : vector<8xf32>
    %326 = vector.multi_reduction <maximumf>, %325, %cst_115 [1] : vector<8x8xf32> to vector<8xf32>
    %327 = vector.shape_cast %326 : vector<8xf32> to vector<8x1xf32>
    %328 = vector.broadcast %327 : vector<8x1xf32> to vector<8x8xf32>
    %329 = arith.subf %325, %328 : vector<8x8xf32>
    %330 = math.exp %329 : vector<8x8xf32>
    %cst_116 = arith.constant dense<0.000000e+00> : vector<8xf32>
    %331 = vector.multi_reduction <add>, %330, %cst_116 [1] : vector<8x8xf32> to vector<8xf32>
    %332 = vector.shape_cast %331 : vector<8xf32> to vector<8x1xf32>
    %333 = vector.broadcast %332 : vector<8x1xf32> to vector<8x8xf32>
    %334 = arith.divf %330, %333 : vector<8x8xf32>
    %cst_117 = arith.constant dense<0.000000e+00> : vector<8x16xf32>
    %335 = tpu.matmul %334, %320, %cst_117 {dimension_numbers = #tpu.dot_dimension_numbers<[1], [0], [0], [1], [0, 0, 1, 1], [], []>} : vector<8x8xf32>, vector<8x16xf32>, vector<8x16xf32> -> vector<8x16xf32>
    %336 = tpu.concatenate %281, %299, %317, %335 in 1 : vector<8x16xf32>, vector<8x16xf32>, vector<8x16xf32>, vector<8x16xf32> -> vector<8x64xf32>
    %337 = vector.extract_strided_slice %0 {offsets = [1, 0], sizes = [1, 8], strides = [1, 1]} : vector<2x8xf32> to vector<1x8xf32>
    %338 = vector.extract_strided_slice %262 {offsets = [8, 0], sizes = [8, 16], strides = [1, 1]} : vector<16x192xf32> to vector<8x16xf32>
    %339 = vector.extract_strided_slice %262 {offsets = [8, 64], sizes = [8, 16], strides = [1, 1]} : vector<16x192xf32> to vector<8x16xf32>
    %340 = vector.extract_strided_slice %262 {offsets = [8, 128], sizes = [8, 16], strides = [1, 1]} : vector<16x192xf32> to vector<8x16xf32>
    %cst_118 = arith.constant dense<0.000000e+00> : vector<8x8xf32>
    %341 = tpu.matmul %338, %339, %cst_118 {dimension_numbers = #tpu.dot_dimension_numbers<[1], [1], [0], [0], [0, 0, 1, 0], [], []>} : vector<8x16xf32>, vector<8x16xf32>, vector<8x8xf32> -> vector<8x8xf32>
    %cst_119 = arith.constant 2.500000e-01 : f32
    %342 = vector.broadcast %cst_119 : f32 to vector<8x8xf32>
    %343 = arith.mulf %341, %342 : vector<8x8xf32>
    %344 = vector.broadcast %337 : vector<1x8xf32> to vector<8x8xf32>
    %345 = arith.addf %343, %344 : vector<8x8xf32>
    %cst_120 = arith.constant dense<0xFF800000> : vector<8xf32>
    %346 = vector.multi_reduction <maximumf>, %345, %cst_120 [1] : vector<8x8xf32> to vector<8xf32>
    %347 = vector.shape_cast %346 : vector<8xf32> to vector<8x1xf32>
    %348 = vector.broadcast %347 : vector<8x1xf32> to vector<8x8xf32>
    %349 = arith.subf %345, %348 : vector<8x8xf32>
    %350 = math.exp %349 : vector<8x8xf32>
    %cst_121 = arith.constant dense<0.000000e+00> : vector<8xf32>
    %351 = vector.multi_reduction <add>, %350, %cst_121 [1] : vector<8x8xf32> to vector<8xf32>
    %352 = vector.shape_cast %351 : vector<8xf32> to vector<8x1xf32>
    %353 = vector.broadcast %352 : vector<8x1xf32> to vector<8x8xf32>
    %354 = arith.divf %350, %353 : vector<8x8xf32>
    %cst_122 = arith.constant dense<0.000000e+00> : vector<8x16xf32>
    %355 = tpu.matmul %354, %340, %cst_122 {dimension_numbers = #tpu.dot_dimension_numbers<[1], [0], [0], [1], [0, 0, 1, 1], [], []>} : vector<8x8xf32>, vector<8x16xf32>, vector<8x16xf32> -> vector<8x16xf32>
    %356 = vector.extract_strided_slice %262 {offsets = [8, 16], sizes = [8, 16], strides = [1, 1]} : vector<16x192xf32> to vector<8x16xf32>
    %357 = vector.extract_strided_slice %262 {offsets = [8, 80], sizes = [8, 16], strides = [1, 1]} : vector<16x192xf32> to vector<8x16xf32>
    %358 = vector.extract_strided_slice %262 {offsets = [8, 144], sizes = [8, 16], strides = [1, 1]} : vector<16x192xf32> to vector<8x16xf32>
    %cst_123 = arith.constant dense<0.000000e+00> : vector<8x8xf32>
    %359 = tpu.matmul %356, %357, %cst_123 {dimension_numbers = #tpu.dot_dimension_numbers<[1], [1], [0], [0], [0, 0, 1, 0], [], []>} : vector<8x16xf32>, vector<8x16xf32>, vector<8x8xf32> -> vector<8x8xf32>
    %cst_124 = arith.constant 2.500000e-01 : f32
    %360 = vector.broadcast %cst_124 : f32 to vector<8x8xf32>
    %361 = arith.mulf %359, %360 : vector<8x8xf32>
    %362 = vector.broadcast %337 : vector<1x8xf32> to vector<8x8xf32>
    %363 = arith.addf %361, %362 : vector<8x8xf32>
    %cst_125 = arith.constant dense<0xFF800000> : vector<8xf32>
    %364 = vector.multi_reduction <maximumf>, %363, %cst_125 [1] : vector<8x8xf32> to vector<8xf32>
    %365 = vector.shape_cast %364 : vector<8xf32> to vector<8x1xf32>
    %366 = vector.broadcast %365 : vector<8x1xf32> to vector<8x8xf32>
    %367 = arith.subf %363, %366 : vector<8x8xf32>
    %368 = math.exp %367 : vector<8x8xf32>
    %cst_126 = arith.constant dense<0.000000e+00> : vector<8xf32>
    %369 = vector.multi_reduction <add>, %368, %cst_126 [1] : vector<8x8xf32> to vector<8xf32>
    %370 = vector.shape_cast %369 : vector<8xf32> to vector<8x1xf32>
    %371 = vector.broadcast %370 : vector<8x1xf32> to vector<8x8xf32>
    %372 = arith.divf %368, %371 : vector<8x8xf32>
    %cst_127 = arith.constant dense<0.000000e+00> : vector<8x16xf32>
    %373 = tpu.matmul %372, %358, %cst_127 {dimension_numbers = #tpu.dot_dimension_numbers<[1], [0], [0], [1], [0, 0, 1, 1], [], []>} : vector<8x8xf32>, vector<8x16xf32>, vector<8x16xf32> -> vector<8x16xf32>
    %374 = vector.extract_strided_slice %262 {offsets = [8, 32], sizes = [8, 16], strides = [1, 1]} : vector<16x192xf32> to vector<8x16xf32>
    %375 = vector.extract_strided_slice %262 {offsets = [8, 96], sizes = [8, 16], strides = [1, 1]} : vector<16x192xf32> to vector<8x16xf32>
    %376 = vector.extract_strided_slice %262 {offsets = [8, 160], sizes = [8, 16], strides = [1, 1]} : vector<16x192xf32> to vector<8x16xf32>
    %cst_128 = arith.constant dense<0.000000e+00> : vector<8x8xf32>
    %377 = tpu.matmul %374, %375, %cst_128 {dimension_numbers = #tpu.dot_dimension_numbers<[1], [1], [0], [0], [0, 0, 1, 0], [], []>} : vector<8x16xf32>, vector<8x16xf32>, vector<8x8xf32> -> vector<8x8xf32>
    %cst_129 = arith.constant 2.500000e-01 : f32
    %378 = vector.broadcast %cst_129 : f32 to vector<8x8xf32>
    %379 = arith.mulf %377, %378 : vector<8x8xf32>
    %380 = vector.broadcast %337 : vector<1x8xf32> to vector<8x8xf32>
    %381 = arith.addf %379, %380 : vector<8x8xf32>
    %cst_130 = arith.constant dense<0xFF800000> : vector<8xf32>
    %382 = vector.multi_reduction <maximumf>, %381, %cst_130 [1] : vector<8x8xf32> to vector<8xf32>
    %383 = vector.shape_cast %382 : vector<8xf32> to vector<8x1xf32>
    %384 = vector.broadcast %383 : vector<8x1xf32> to vector<8x8xf32>
    %385 = arith.subf %381, %384 : vector<8x8xf32>
    %386 = math.exp %385 : vector<8x8xf32>
    %cst_131 = arith.constant dense<0.000000e+00> : vector<8xf32>
    %387 = vector.multi_reduction <add>, %386, %cst_131 [1] : vector<8x8xf32> to vector<8xf32>
    %388 = vector.shape_cast %387 : vector<8xf32> to vector<8x1xf32>
    %389 = vector.broadcast %388 : vector<8x1xf32> to vector<8x8xf32>
    %390 = arith.divf %386, %389 : vector<8x8xf32>
    %cst_132 = arith.constant dense<0.000000e+00> : vector<8x16xf32>
    %391 = tpu.matmul %390, %376, %cst_132 {dimension_numbers = #tpu.dot_dimension_numbers<[1], [0], [0], [1], [0, 0, 1, 1], [], []>} : vector<8x8xf32>, vector<8x16xf32>, vector<8x16xf32> -> vector<8x16xf32>
    %392 = vector.extract_strided_slice %262 {offsets = [8, 48], sizes = [8, 16], strides = [1, 1]} : vector<16x192xf32> to vector<8x16xf32>
    %393 = vector.extract_strided_slice %262 {offsets = [8, 112], sizes = [8, 16], strides = [1, 1]} : vector<16x192xf32> to vector<8x16xf32>
    %394 = vector.extract_strided_slice %262 {offsets = [8, 176], sizes = [8, 16], strides = [1, 1]} : vector<16x192xf32> to vector<8x16xf32>
    %cst_133 = arith.constant dense<0.000000e+00> : vector<8x8xf32>
    %395 = tpu.matmul %392, %393, %cst_133 {dimension_numbers = #tpu.dot_dimension_numbers<[1], [1], [0], [0], [0, 0, 1, 0], [], []>} : vector<8x16xf32>, vector<8x16xf32>, vector<8x8xf32> -> vector<8x8xf32>
    %cst_134 = arith.constant 2.500000e-01 : f32
    %396 = vector.broadcast %cst_134 : f32 to vector<8x8xf32>
    %397 = arith.mulf %395, %396 : vector<8x8xf32>
    %398 = vector.broadcast %337 : vector<1x8xf32> to vector<8x8xf32>
    %399 = arith.addf %397, %398 : vector<8x8xf32>
    %cst_135 = arith.constant dense<0xFF800000> : vector<8xf32>
    %400 = vector.multi_reduction <maximumf>, %399, %cst_135 [1] : vector<8x8xf32> to vector<8xf32>
    %401 = vector.shape_cast %400 : vector<8xf32> to vector<8x1xf32>
    %402 = vector.broadcast %401 : vector<8x1xf32> to vector<8x8xf32>
    %403 = arith.subf %399, %402 : vector<8x8xf32>
    %404 = math.exp %403 : vector<8x8xf32>
    %cst_136 = arith.constant dense<0.000000e+00> : vector<8xf32>
    %405 = vector.multi_reduction <add>, %404, %cst_136 [1] : vector<8x8xf32> to vector<8xf32>
    %406 = vector.shape_cast %405 : vector<8xf32> to vector<8x1xf32>
    %407 = vector.broadcast %406 : vector<8x1xf32> to vector<8x8xf32>
    %408 = arith.divf %404, %407 : vector<8x8xf32>
    %cst_137 = arith.constant dense<0.000000e+00> : vector<8x16xf32>
    %409 = tpu.matmul %408, %394, %cst_137 {dimension_numbers = #tpu.dot_dimension_numbers<[1], [0], [0], [1], [0, 0, 1, 1], [], []>} : vector<8x8xf32>, vector<8x16xf32>, vector<8x16xf32> -> vector<8x16xf32>
    %410 = tpu.concatenate %355, %373, %391, %409 in 1 : vector<8x16xf32>, vector<8x16xf32>, vector<8x16xf32>, vector<8x16xf32> -> vector<8x64xf32>
    %411 = tpu.concatenate %336, %410 in 0 : vector<8x64xf32>, vector<8x64xf32> -> vector<16x64xf32>
    %c0_138 = arith.constant 0 : index
    %c0_139 = arith.constant 0 : index
    %412 = vector.load %arg18[%c0_138, %c0_139] : memref<64x64xf32, #tpu.memory_space<vmem>>, vector<64x64xf32>
    %cst_140 = arith.constant dense<0.000000e+00> : vector<16x64xf32>
    %413 = tpu.matmul %411, %412, %cst_140 {dimension_numbers = #tpu.dot_dimension_numbers<[1], [0], [0], [1], [0, 0, 1, 1], [], []>} : vector<16x64xf32>, vector<64x64xf32>, vector<16x64xf32> -> vector<16x64xf32>
    %c0_141 = arith.constant 0 : index
    %c0_142 = arith.constant 0 : index
    %414 = vector.load %arg19[%c0_141, %c0_142] : memref<1x64xf32, #tpu.memory_space<vmem>>, vector<1x64xf32>
    %415 = vector.broadcast %414 : vector<1x64xf32> to vector<16x64xf32>
    %416 = arith.addf %413, %415 : vector<16x64xf32>
    %417 = arith.addf %416, %257 : vector<16x64xf32>
    %c0_143 = arith.constant 0 : index
    %c0_144 = arith.constant 0 : index
    %418 = vector.load %arg20[%c0_143, %c0_144] : memref<1x64xf32, #tpu.memory_space<vmem>>, vector<1x64xf32>
    %c0_145 = arith.constant 0 : index
    %c0_146 = arith.constant 0 : index
    %419 = vector.load %arg21[%c0_145, %c0_146] : memref<1x64xf32, #tpu.memory_space<vmem>>, vector<1x64xf32>
    %cst_147 = arith.constant dense<0.000000e+00> : vector<16xf32>
    %420 = vector.multi_reduction <add>, %417, %cst_147 [1] : vector<16x64xf32> to vector<16xf32>
    %421 = vector.shape_cast %420 : vector<16xf32> to vector<16x1xf32>
    %cst_148 = arith.constant 6.400000e+01 : f32
    %422 = vector.broadcast %cst_148 : f32 to vector<16x1xf32>
    %423 = arith.divf %421, %422 : vector<16x1xf32>
    %424 = vector.broadcast %423 : vector<16x1xf32> to vector<16x64xf32>
    %425 = arith.subf %417, %424 : vector<16x64xf32>
    %426 = arith.mulf %425, %425 : vector<16x64xf32>
    %cst_149 = arith.constant dense<0.000000e+00> : vector<16xf32>
    %427 = vector.multi_reduction <add>, %426, %cst_149 [1] : vector<16x64xf32> to vector<16xf32>
    %428 = vector.shape_cast %427 : vector<16xf32> to vector<16x1xf32>
    %cst_150 = arith.constant 6.400000e+01 : f32
    %429 = vector.broadcast %cst_150 : f32 to vector<16x1xf32>
    %430 = arith.divf %428, %429 : vector<16x1xf32>
    %431 = vector.broadcast %423 : vector<16x1xf32> to vector<16x64xf32>
    %432 = arith.subf %417, %431 : vector<16x64xf32>
    %cst_151 = arith.constant 9.99999996E-13 : f32
    %433 = vector.broadcast %cst_151 : f32 to vector<16x1xf32>
    %434 = arith.addf %430, %433 : vector<16x1xf32>
    %435 = math.rsqrt %434 : vector<16x1xf32>
    %436 = vector.broadcast %435 : vector<16x1xf32> to vector<16x64xf32>
    %437 = arith.mulf %432, %436 : vector<16x64xf32>
    %438 = vector.broadcast %418 : vector<1x64xf32> to vector<16x64xf32>
    %439 = arith.mulf %437, %438 : vector<16x64xf32>
    %440 = vector.broadcast %419 : vector<1x64xf32> to vector<16x64xf32>
    %441 = arith.addf %439, %440 : vector<16x64xf32>
    %442 = vector.extract_strided_slice %441 {offsets = [0, 0], sizes = [1, 64], strides = [1, 1]} : vector<16x64xf32> to vector<1x64xf32>
    %443 = vector.extract_strided_slice %441 {offsets = [8, 0], sizes = [1, 64], strides = [1, 1]} : vector<16x64xf32> to vector<1x64xf32>
    %444 = tpu.concatenate %442, %443 in 0 : vector<1x64xf32>, vector<1x64xf32> -> vector<2x64xf32>
    %c0_152 = arith.constant 0 : index
    %c0_153 = arith.constant 0 : index
    %445 = vector.load %arg22[%c0_152, %c0_153] : memref<64x128xf32, #tpu.memory_space<vmem>>, vector<64x128xf32>
    %cst_154 = arith.constant dense<0.000000e+00> : vector<2x128xf32>
    %446 = tpu.matmul %444, %445, %cst_154 {dimension_numbers = #tpu.dot_dimension_numbers<[1], [0], [0], [1], [0, 0, 1, 1], [], []>} : vector<2x64xf32>, vector<64x128xf32>, vector<2x128xf32> -> vector<2x128xf32>
    %c0_155 = arith.constant 0 : index
    %c0_156 = arith.constant 0 : index
    %447 = vector.load %arg23[%c0_155, %c0_156] : memref<1x128xf32, #tpu.memory_space<vmem>>, vector<1x128xf32>
    %448 = vector.broadcast %447 : vector<1x128xf32> to vector<2x128xf32>
    %449 = arith.addf %446, %448 : vector<2x128xf32>
    %450 = arith.mulf %449, %449 : vector<2x128xf32>
    %451 = arith.mulf %449, %450 : vector<2x128xf32>
    %cst_157 = arith.constant 4.471500e-02 : f32
    %452 = vector.broadcast %cst_157 : f32 to vector<2x128xf32>
    %453 = arith.mulf %452, %451 : vector<2x128xf32>
    %454 = arith.addf %449, %453 : vector<2x128xf32>
    %cst_158 = arith.constant 0.797884583 : f32
    %455 = vector.broadcast %cst_158 : f32 to vector<2x128xf32>
    %456 = arith.mulf %455, %454 : vector<2x128xf32>
    %457 = math.tanh %456 : vector<2x128xf32>
    %cst_159 = arith.constant 1.000000e+00 : f32
    %458 = vector.broadcast %cst_159 : f32 to vector<2x128xf32>
    %459 = arith.addf %458, %457 : vector<2x128xf32>
    %cst_160 = arith.constant 5.000000e-01 : f32
    %460 = vector.broadcast %cst_160 : f32 to vector<2x128xf32>
    %461 = arith.mulf %460, %459 : vector<2x128xf32>
    %462 = arith.mulf %449, %461 : vector<2x128xf32>
    %c0_161 = arith.constant 0 : index
    %c0_162 = arith.constant 0 : index
    %463 = vector.load %arg24[%c0_161, %c0_162] : memref<128x64xf32, #tpu.memory_space<vmem>>, vector<128x64xf32>
    %cst_163 = arith.constant dense<0.000000e+00> : vector<2x64xf32>
    %464 = tpu.matmul %462, %463, %cst_163 {dimension_numbers = #tpu.dot_dimension_numbers<[1], [0], [0], [1], [0, 0, 1, 1], [], []>} : vector<2x128xf32>, vector<128x64xf32>, vector<2x64xf32> -> vector<2x64xf32>
    %c0_164 = arith.constant 0 : index
    %c0_165 = arith.constant 0 : index
    %465 = vector.load %arg25[%c0_164, %c0_165] : memref<1x64xf32, #tpu.memory_space<vmem>>, vector<1x64xf32>
    %466 = vector.broadcast %465 : vector<1x64xf32> to vector<2x64xf32>
    %467 = arith.addf %464, %466 : vector<2x64xf32>
    %468 = arith.addf %467, %444 : vector<2x64xf32>
    %c0_166 = arith.constant 0 : index
    %c0_167 = arith.constant 0 : index
    %469 = vector.load %arg26[%c0_166, %c0_167] : memref<1x64xf32, #tpu.memory_space<vmem>>, vector<1x64xf32>
    %c0_168 = arith.constant 0 : index
    %c0_169 = arith.constant 0 : index
    %470 = vector.load %arg27[%c0_168, %c0_169] : memref<1x64xf32, #tpu.memory_space<vmem>>, vector<1x64xf32>
    %cst_170 = arith.constant dense<0.000000e+00> : vector<2xf32>
    %471 = vector.multi_reduction <add>, %468, %cst_170 [1] : vector<2x64xf32> to vector<2xf32>
    %472 = vector.shape_cast %471 : vector<2xf32> to vector<2x1xf32>
    %cst_171 = arith.constant 6.400000e+01 : f32
    %473 = vector.broadcast %cst_171 : f32 to vector<2x1xf32>
    %474 = arith.divf %472, %473 : vector<2x1xf32>
    %475 = vector.broadcast %474 : vector<2x1xf32> to vector<2x64xf32>
    %476 = arith.subf %468, %475 : vector<2x64xf32>
    %477 = arith.mulf %476, %476 : vector<2x64xf32>
    %cst_172 = arith.constant dense<0.000000e+00> : vector<2xf32>
    %478 = vector.multi_reduction <add>, %477, %cst_172 [1] : vector<2x64xf32> to vector<2xf32>
    %479 = vector.shape_cast %478 : vector<2xf32> to vector<2x1xf32>
    %cst_173 = arith.constant 6.400000e+01 : f32
    %480 = vector.broadcast %cst_173 : f32 to vector<2x1xf32>
    %481 = arith.divf %479, %480 : vector<2x1xf32>
    %482 = vector.broadcast %474 : vector<2x1xf32> to vector<2x64xf32>
    %483 = arith.subf %468, %482 : vector<2x64xf32>
    %cst_174 = arith.constant 9.99999996E-13 : f32
    %484 = vector.broadcast %cst_174 : f32 to vector<2x1xf32>
    %485 = arith.addf %481, %484 : vector<2x1xf32>
    %486 = math.rsqrt %485 : vector<2x1xf32>
    %487 = vector.broadcast %486 : vector<2x1xf32> to vector<2x64xf32>
    %488 = arith.mulf %483, %487 : vector<2x64xf32>
    %489 = vector.broadcast %469 : vector<1x64xf32> to vector<2x64xf32>
    %490 = arith.mulf %488, %489 : vector<2x64xf32>
    %491 = vector.broadcast %470 : vector<1x64xf32> to vector<2x64xf32>
    %492 = arith.addf %490, %491 : vector<2x64xf32>
    %c0_175 = arith.constant 0 : index
    %c0_176 = arith.constant 0 : index
    %493 = vector.load %arg28[%c0_175, %c0_176] : memref<64x64xf32, #tpu.memory_space<vmem>>, vector<64x64xf32>
    %cst_177 = arith.constant dense<0.000000e+00> : vector<2x64xf32>
    %494 = tpu.matmul %492, %493, %cst_177 {dimension_numbers = #tpu.dot_dimension_numbers<[1], [0], [0], [1], [0, 0, 1, 1], [], []>} : vector<2x64xf32>, vector<64x64xf32>, vector<2x64xf32> -> vector<2x64xf32>
    %c0_178 = arith.constant 0 : index
    %c0_179 = arith.constant 0 : index
    %495 = vector.load %arg29[%c0_178, %c0_179] : memref<1x64xf32, #tpu.memory_space<vmem>>, vector<1x64xf32>
    %496 = vector.broadcast %495 : vector<1x64xf32> to vector<2x64xf32>
    %497 = arith.addf %494, %496 : vector<2x64xf32>
    %498 = math.tanh %497 : vector<2x64xf32>
    %c0_180 = arith.constant 0 : index
    %c0_181 = arith.constant 0 : index
    %499 = vector.load %arg30[%c0_180, %c0_181] : memref<2x64xf32, #tpu.memory_space<vmem>>, vector<2x64xf32>
    tpu.vector_store %arg30[%c0_180, %c0_181], %498 {strides = array<i32>} : memref<2x64xf32, #tpu.memory_space<vmem>>, vector<2x64xf32>,
    return
  }
}

</mosaic_0001>

<llo_original>
// kernel: _lambda_.1
$region0: #{_lambda_.1}
  #allocation0 [shape = 'u32[]', space=smem, size = 0x4, offset = 0x4, fixed_abs, tag = 'smem constant byte address 0x4 - core index']
  #allocation1 [shape = 'u32[144,128]{1,0:T(1,128)}', space=vmem, size = 0x12000, scoped, tag = 'internal scratch']
  %s0 = inlined_call_operand.smem [shape: u32[31], index: -1, kind: input, shape index: {}]
  %s1 = sld [smem:[%s0]]
  %s2 = scalar_lea.smem %s0, 1
  %s3 = sld [smem:[%s2]]
  %s4 = scalar_lea.smem %s0, 2
  %s5 = sld [smem:[%s4]]
  %s6 = scalar_lea.smem %s0, 3
  %s7 = sld [smem:[%s6]]
  %s8 = scalar_lea.smem %s0, 4
  %s9 = sld [smem:[%s8]]
  %s10 = scalar_lea.smem %s0, 5
  %s11 = sld [smem:[%s10]]
  %s12 = scalar_lea.smem %s0, 6
  %s13 = sld [smem:[%s12]]
  %s14 = scalar_lea.smem %s0, 7
  %s15 = sld [smem:[%s14]]
  %s16 = scalar_lea.smem %s0, 8
  %s17 = sld [smem:[%s16]]
  %s18 = scalar_lea.smem %s0, 9
  %s19 = sld [smem:[%s18]]
  %s20 = scalar_lea.smem %s0, 10
  %s21 = sld [smem:[%s20]]
  %s22 = scalar_lea.smem %s0, 11
  %s23 = sld [smem:[%s22]]
  %s24 = scalar_lea.smem %s0, 12
  %s25 = sld [smem:[%s24]]
  %s26 = scalar_lea.smem %s0, 13
  %s27 = sld [smem:[%s26]]
  %s28 = scalar_lea.smem %s0, 14
  %s29 = sld [smem:[%s28]]
  %s30 = scalar_lea.smem %s0, 15
  %s31 = sld [smem:[%s30]]
  %s32 = scalar_lea.smem %s0, 16
  %s33 = sld [smem:[%s32]]
  %s34 = scalar_lea.smem %s0, 17
  %s35 = sld [smem:[%s34]]
  %s36 = scalar_lea.smem %s0, 18
  %s37 = sld [smem:[%s36]]
  %s38 = scalar_lea.smem %s0, 19
  %s39 = sld [smem:[%s38]]
  %s40 = scalar_lea.smem %s0, 20
  %s41 = sld [smem:[%s40]]
  %s42 = scalar_lea.smem %s0, 21
  %s43 = sld [smem:[%s42]]
  %s44 = scalar_lea.smem %s0, 22
  %s45 = sld [smem:[%s44]]
  %s46 = scalar_lea.smem %s0, 23
  %s47 = sld [smem:[%s46]]
  %s48 = scalar_lea.smem %s0, 24
  %s49 = sld [smem:[%s48]]
  %s50 = scalar_lea.smem %s0, 25
  %s51 = sld [smem:[%s50]]
  %s52 = scalar_lea.smem %s0, 26
  %s53 = sld [smem:[%s52]]
  %s54 = scalar_lea.smem %s0, 27
  %s55 = sld [smem:[%s54]]
  %s56 = scalar_lea.smem %s0, 28
  %s57 = sld [smem:[%s56]]
  %s58 = scalar_lea.smem %s0, 29
  %s59 = sld [smem:[%s58]]
  %s60 = scalar_lea.smem %s0, 30
  %s61 = sld [smem:[%s60]]
  %s62 = sld [smem:[#allocation0]]
  $region158: #{_lambda_.1} parent=0
    _
  %s64 = ssub.s32 1, %s62
  %s65 = scalar_select 0, %s64, %s62
  $region1: #{_lambda_.1} parent=0
    #allocation2 [shape = 'u8[32768]{0}', space=vmem, size = 0x8000, scoped, tag = 'input window, operand 10, single buffered']
    #allocation3 [shape = 's32[1]{0}', space=sflag, size = 0x4, scoped, tag = 'scoped memory for _lambda_.1']
    #allocation4 [shape = 's32[1]{0}', space=sflag, size = 0x4, scoped, tag = 'scoped memory for _lambda_.1']
    #allocation5 [shape = 'u8[65536]{0}', space=vmem, size = 0x10000, scoped, tag = 'input window, operand 12, single buffered']
    #allocation6 [shape = 's32[1]{0}', space=sflag, size = 0x4, scoped, tag = 'scoped memory for _lambda_.1']
    #allocation7 [shape = 'u8[65536]{0}', space=vmem, size = 0x10000, scoped, tag = 'input window, operand 16, single buffered']
    #allocation8 [shape = 'u8[32768]{0}', space=vmem, size = 0x8000, scoped, tag = 'input window, operand 18, single buffered']
    #allocation9 [shape = 's32[1]{0}', space=sflag, size = 0x4, scoped, tag = 'scoped memory for _lambda_.1']
    #allocation10 [shape = 'u8[32768]{0}', space=vmem, size = 0x8000, scoped, tag = 'input window, operand 22, single buffered']
    #allocation11 [shape = 'u8[65536]{0}', space=vmem, size = 0x10000, scoped, tag = 'input window, operand 24, single buffered']
    #allocation12 [shape = 's32[1]{0}', space=sflag, size = 0x4, scoped, tag = 'scoped memory for _lambda_.1']
    #allocation13 [shape = 'u8[32768]{0}', space=vmem, size = 0x8000, scoped, tag = 'input window, operand 28, single buffered']
    #allocation14 [shape = 'u8[1024]{0}', space=vmem, size = 0x400, scoped, tag = 'output window, operand 0, single buffered']
    %66 = vsyncpa [#allocation3], 0
    %67 = vsyncpa [#allocation6], 0
    %68 = vsyncpa [#allocation9], 0
    %69 = vsyncpa [#allocation12], 0
    %70 = vsyncpa [#allocation4], 0
    // Predicated region
    $region2: #{_lambda_.1} parent=1 // pred_check
      _
    $region3: #{_lambda_.1} parent=1 // pred_check_branch
      %72 = sbr.rel (0) target = $region5
    $region4: #{_lambda_.1} parent=1 // pred_region
      _
    $region5: #{_lambda_.1} parent=1 // pred_fallthru
      _
    // Predicated region
    $region6: #{_lambda_.1} parent=1 // pred_check
      _
    $region7: #{_lambda_.1} parent=1 // pred_check_branch
      %74 = sbr.rel (0) target = $region9
    $region8: #{_lambda_.1} parent=1 // pred_region
      _
    $region9: #{_lambda_.1} parent=1 // pred_fallthru
      _
    // Predicated region
    $region10: #{_lambda_.1} parent=1 // pred_check
      _
    $region11: #{_lambda_.1} parent=1 // pred_check_branch
      %76 = sbr.rel (0) target = $region13
    $region12: #{_lambda_.1} parent=1 // pred_region
      _
    $region13: #{_lambda_.1} parent=1 // pred_fallthru
      _
    // Predicated region
    $region14: #{_lambda_.1} parent=1 // pred_check
      _
    $region15: #{_lambda_.1} parent=1 // pred_check_branch
      %78 = sbr.rel (0) target = $region17
    $region16: #{_lambda_.1} parent=1 // pred_region
      _
    $region17: #{_lambda_.1} parent=1 // pred_fallthru
      _
    // Predicated region
    $region18: #{_lambda_.1} parent=1 // pred_check
      _
    $region19: #{_lambda_.1} parent=1 // pred_check_branch
      %80 = sbr.rel (0) target = $region21
    $region20: #{_lambda_.1} parent=1 // pred_region
      _
    $region21: #{_lambda_.1} parent=1 // pred_fallthru
      _
    // Predicated region
    $region22: #{_lambda_.1} parent=1 // pred_check
      _
    $region23: #{_lambda_.1} parent=1 // pred_check_branch
      %82 = sbr.rel (0) target = $region25
    $region24: #{_lambda_.1} parent=1 // pred_region
      _
    $region25: #{_lambda_.1} parent=1 // pred_fallthru
      _
    // Predicated region
    $region26: #{_lambda_.1} parent=1 // pred_check
      _
    $region27: #{_lambda_.1} parent=1 // pred_check_branch
      %84 = sbr.rel (0) target = $region29
    $region28: #{_lambda_.1} parent=1 // pred_region
      _
    $region29: #{_lambda_.1} parent=1 // pred_fallthru
      _
    // Predicated region
    $region30: #{_lambda_.1} parent=1 // pred_check
      _
    $region31: #{_lambda_.1} parent=1 // pred_check_branch
      %86 = sbr.rel (0) target = $region33
    $region32: #{_lambda_.1} parent=1 // pred_region
      _
    $region33: #{_lambda_.1} parent=1 // pred_fallthru
      _
    // Predicated region
    $region34: #{_lambda_.1} parent=1 // pred_check
      _
    $region35: #{_lambda_.1} parent=1 // pred_check_branch
      %88 = sbr.rel (0) target = $region37
    $region36: #{_lambda_.1} parent=1 // pred_region
      _
    $region37: #{_lambda_.1} parent=1 // pred_fallthru
      _
    // Predicated region
    $region38: #{_lambda_.1} parent=1 // pred_check
      _
    $region39: #{_lambda_.1} parent=1 // pred_check_branch
      %90 = sbr.rel (0) target = $region41
    $region40: #{_lambda_.1} parent=1 // pred_region
      _
    $region41: #{_lambda_.1} parent=1 // pred_fallthru
      _
    // Predicated region
    $region42: #{_lambda_.1} parent=1 // pred_check
      _
    $region43: #{_lambda_.1} parent=1 // pred_check_branch
      %92 = sbr.rel (0) target = $region45
    $region44: #{_lambda_.1} parent=1 // pred_region
      %s94 = ssub.s32 1024, 1024
      %95 = vsyncadd [#allocation3], %s94
      %s96 = sshll.u32 [#allocation2], 4
      %s97 = int_to_ptr.vmem [resolvable:$true] %s96
      %102 = dma.hbm_to_vmem [thread:$0]  %s21, 1024, %s97, [#allocation3], 128, 128, 8
    $region45: #{_lambda_.1} parent=1 // pred_fallthru
      _
    // Predicated region
    $region46: #{_lambda_.1} parent=1 // pred_check
      _
    $region47: #{_lambda_.1} parent=1 // pred_check_branch
      %104 = sbr.rel (0) target = $region49
    $region48: #{_lambda_.1} parent=1 // pred_region
      _
    $region49: #{_lambda_.1} parent=1 // pred_fallthru
      _
    // Predicated region
    $region50: #{_lambda_.1} parent=1 // pred_check
      _
    $region51: #{_lambda_.1} parent=1 // pred_check_branch
      %106 = sbr.rel (0) target = $region53
    $region52: #{_lambda_.1} parent=1 // pred_region
      %s108 = ssub.s32 2048, 2048
      %109 = vsyncadd [#allocation6], %s108
      %s110 = sshll.u32 [#allocation5], 4
      %s111 = int_to_ptr.vmem [resolvable:$true] %s110
      %116 = dma.hbm_to_vmem [thread:$0]  %s25, 2048, %s111, [#allocation6], 128, 128, 8
    $region53: #{_lambda_.1} parent=1 // pred_fallthru
      _
    // Predicated region
    $region54: #{_lambda_.1} parent=1 // pred_check
      _
    $region55: #{_lambda_.1} parent=1 // pred_check_branch
      %118 = sbr.rel (0) target = $region57
    $region56: #{_lambda_.1} parent=1 // pred_region
      _
    $region57: #{_lambda_.1} parent=1 // pred_fallthru
      _
    // Predicated region
    $region58: #{_lambda_.1} parent=1 // pred_check
      _
    $region59: #{_lambda_.1} parent=1 // pred_check_branch
      %120 = sbr.rel (0) target = $region61
    $region60: #{_lambda_.1} parent=1 // pred_region
      _
    $region61: #{_lambda_.1} parent=1 // pred_fallthru
      _
    // Predicated region
    $region62: #{_lambda_.1} parent=1 // pred_check
      _
    $region63: #{_lambda_.1} parent=1 // pred_check_branch
      %122 = sbr.rel (0) target = $region65
    $region64: #{_lambda_.1} parent=1 // pred_region
      _
    $region65: #{_lambda_.1} parent=1 // pred_fallthru
      _
    // Predicated region
    $region66: #{_lambda_.1} parent=1 // pred_check
      _
    $region67: #{_lambda_.1} parent=1 // pred_check_branch
      %124 = sbr.rel (0) target = $region69
    $region68: #{_lambda_.1} parent=1 // pred_region
      %s126 = ssub.s32 2048, 2048
      %127 = vsyncadd [#allocation6], %s126
      %s128 = sshll.u32 [#allocation7], 4
      %s129 = int_to_ptr.vmem [resolvable:$true] %s128
      %134 = dma.hbm_to_vmem [thread:$0]  %s33, 2048, %s129, [#allocation6], 256, 256, 16
    $region69: #{_lambda_.1} parent=1 // pred_fallthru
      _
    // Predicated region
    $region70: #{_lambda_.1} parent=1 // pred_check
      _
    $region71: #{_lambda_.1} parent=1 // pred_check_branch
      %136 = sbr.rel (0) target = $region73
    $region72: #{_lambda_.1} parent=1 // pred_region
      _
    $region73: #{_lambda_.1} parent=1 // pred_fallthru
      _
    // Predicated region
    $region74: #{_lambda_.1} parent=1 // pred_check
      _
    $region75: #{_lambda_.1} parent=1 // pred_check_branch
      %138 = sbr.rel (0) target = $region77
    $region76: #{_lambda_.1} parent=1 // pred_region
      %s140 = ssub.s32 1024, 1024
      %141 = vsyncadd [#allocation9], %s140
      %s142 = sshll.u32 [#allocation8], 4
      %s143 = int_to_ptr.vmem [resolvable:$true] %s142
      %148 = dma.hbm_to_vmem [thread:$0]  %s37, 1024, %s143, [#allocation9], 128, 128, 8
    $region77: #{_lambda_.1} parent=1 // pred_fallthru
      _
    // Predicated region
    $region78: #{_lambda_.1} parent=1 // pred_check
      _
    $region79: #{_lambda_.1} parent=1 // pred_check_branch
      %150 = sbr.rel (0) target = $region81
    $region80: #{_lambda_.1} parent=1 // pred_region
      _
    $region81: #{_lambda_.1} parent=1 // pred_fallthru
      _
    // Predicated region
    $region82: #{_lambda_.1} parent=1 // pred_check
      _
    $region83: #{_lambda_.1} parent=1 // pred_check_branch
      %152 = sbr.rel (0) target = $region85
    $region84: #{_lambda_.1} parent=1 // pred_region
      _
    $region85: #{_lambda_.1} parent=1 // pred_fallthru
      _
    // Predicated region
    $region86: #{_lambda_.1} parent=1 // pred_check
      _
    $region87: #{_lambda_.1} parent=1 // pred_check_branch
      %154 = sbr.rel (0) target = $region89
    $region88: #{_lambda_.1} parent=1 // pred_region
      _
    $region89: #{_lambda_.1} parent=1 // pred_fallthru
      _
    // Predicated region
    $region90: #{_lambda_.1} parent=1 // pred_check
      _
    $region91: #{_lambda_.1} parent=1 // pred_check_branch
      %156 = sbr.rel (0) target = $region93
    $region92: #{_lambda_.1} parent=1 // pred_region
      %s158 = ssub.s32 1024, 1024
      %159 = vsyncadd [#allocation9], %s158
      %s160 = sshll.u32 [#allocation10], 4
      %s161 = int_to_ptr.vmem [resolvable:$true] %s160
      %166 = dma.hbm_to_vmem [thread:$0]  %s45, 1024, %s161, [#allocation9], 128, 128, 8
    $region93: #{_lambda_.1} parent=1 // pred_fallthru
      _
    // Predicated region
    $region94: #{_lambda_.1} parent=1 // pred_check
      _
    $region95: #{_lambda_.1} parent=1 // pred_check_branch
      %168 = sbr.rel (0) target = $region97
    $region96: #{_lambda_.1} parent=1 // pred_region
      _
    $region97: #{_lambda_.1} parent=1 // pred_fallthru
      _
    // Predicated region
    $region98: #{_lambda_.1} parent=1 // pred_check
      _
    $region99: #{_lambda_.1} parent=1 // pred_check_branch
      %170 = sbr.rel (0) target = $region101
    $region100: #{_lambda_.1} parent=1 // pred_region
      %s172 = ssub.s32 2048, 2048
      %173 = vsyncadd [#allocation12], %s172
      %s174 = sshll.u32 [#allocation11], 4
      %s175 = int_to_ptr.vmem [resolvable:$true] %s174
      %180 = dma.hbm_to_vmem [thread:$0]  %s49, 2048, %s175, [#allocation12], 128, 128, 8
    $region101: #{_lambda_.1} parent=1 // pred_fallthru
      _
    // Predicated region
    $region102: #{_lambda_.1} parent=1 // pred_check
      _
    $region103: #{_lambda_.1} parent=1 // pred_check_branch
      %182 = sbr.rel (0) target = $region105
    $region104: #{_lambda_.1} parent=1 // pred_region
      _
    $region105: #{_lambda_.1} parent=1 // pred_fallthru
      _
    // Predicated region
    $region106: #{_lambda_.1} parent=1 // pred_check
      _
    $region107: #{_lambda_.1} parent=1 // pred_check_branch
      %184 = sbr.rel (0) target = $region109
    $region108: #{_lambda_.1} parent=1 // pred_region
      _
    $region109: #{_lambda_.1} parent=1 // pred_fallthru
      _
    // Predicated region
    $region110: #{_lambda_.1} parent=1 // pred_check
      _
    $region111: #{_lambda_.1} parent=1 // pred_check_branch
      %186 = sbr.rel (0) target = $region113
    $region112: #{_lambda_.1} parent=1 // pred_region
      _
    $region113: #{_lambda_.1} parent=1 // pred_fallthru
      _
    // Predicated region
    $region114: #{_lambda_.1} parent=1 // pred_check
      _
    $region115: #{_lambda_.1} parent=1 // pred_check_branch
      %188 = sbr.rel (0) target = $region117
    $region116: #{_lambda_.1} parent=1 // pred_region
      %s190 = ssub.s32 1024, 1024
      %191 = vsyncadd [#allocation12], %s190
      %s192 = sshll.u32 [#allocation13], 4
      %s193 = int_to_ptr.vmem [resolvable:$true] %s192
      %198 = dma.hbm_to_vmem [thread:$0]  %s57, 1024, %s193, [#allocation12], 128, 128, 8
    $region117: #{_lambda_.1} parent=1 // pred_fallthru
      _
    // Predicated region
    $region118: #{_lambda_.1} parent=1 // pred_check
      _
    $region119: #{_lambda_.1} parent=1 // pred_check_branch
      %200 = sbr.rel (0) target = $region121
    $region120: #{_lambda_.1} parent=1 // pred_region
      _
    $region121: #{_lambda_.1} parent=1 // pred_fallthru
      _
    // Predicated region
    $region122: #{_lambda_.1} parent=1 // pred_check
      _
    $region123: #{_lambda_.1} parent=1 // pred_check_branch
      %202 = sbr.rel (0) target = $region125
    $region124: #{_lambda_.1} parent=1 // pred_region
      %203 = dma.done [#allocation3], 1024
    $region125: #{_lambda_.1} parent=1 // pred_fallthru
      _
    // Predicated region
    $region126: #{_lambda_.1} parent=1 // pred_check
      _
    $region127: #{_lambda_.1} parent=1 // pred_check_branch
      %205 = sbr.rel (0) target = $region129
    $region128: #{_lambda_.1} parent=1 // pred_region
      %206 = dma.done [#allocation6], 2048
    $region129: #{_lambda_.1} parent=1 // pred_fallthru
      _
    // Predicated region
    $region130: #{_lambda_.1} parent=1 // pred_check
      _
    $region131: #{_lambda_.1} parent=1 // pred_check_branch
      %208 = sbr.rel (0) target = $region133
    $region132: #{_lambda_.1} parent=1 // pred_region
      %209 = dma.done [#allocation6], 2048
    $region133: #{_lambda_.1} parent=1 // pred_fallthru
      _
    // Predicated region
    $region134: #{_lambda_.1} parent=1 // pred_check
      _
    $region135: #{_lambda_.1} parent=1 // pred_check_branch
      %211 = sbr.rel (0) target = $region137
    $region136: #{_lambda_.1} parent=1 // pred_region
      %212 = dma.done [#allocation9], 1024
    $region137: #{_lambda_.1} parent=1 // pred_fallthru
      _
    // Predicated region
    $region138: #{_lambda_.1} parent=1 // pred_check
      _
    $region139: #{_lambda_.1} parent=1 // pred_check_branch
      %214 = sbr.rel (0) target = $region141
    $region140: #{_lambda_.1} parent=1 // pred_region
      %215 = dma.done [#allocation9], 1024
    $region141: #{_lambda_.1} parent=1 // pred_fallthru
      _
    // Predicated region
    $region142: #{_lambda_.1} parent=1 // pred_check
      _
    $region143: #{_lambda_.1} parent=1 // pred_check_branch
      %217 = sbr.rel (0) target = $region145
    $region144: #{_lambda_.1} parent=1 // pred_region
      %218 = dma.done [#allocation12], 2048
    $region145: #{_lambda_.1} parent=1 // pred_fallthru
      _
    // Predicated region
    $region146: #{_lambda_.1} parent=1 // pred_check
      _
    $region147: #{_lambda_.1} parent=1 // pred_check_branch
      %220 = sbr.rel (0) target = $region149
    $region148: #{_lambda_.1} parent=1 // pred_region
      %221 = dma.done [#allocation12], 1024
    $region149: #{_lambda_.1} parent=1 // pred_fallthru
      _
    %v222 = vld [vmem:[%s3] sm:$0x3]
    %v223 = vld [vmem:[%s1] sm:$0xff]
    %v224 = vld [vmem:[%s1 + $0x8] sm:$0xff]
    %v225 = vld [vmem:[%s5] sm:$0x1]
    %v226 = vld [vmem:[%s7] sm:$0x1]
    %vm227 = vcmask 523264
    %v228 = vsel %vm227, %v223, 0.0
    %229 = vadd.xlane.f32.xlu0 %v228
    %v230 = vpop.xlane.xlu0 %229
    %v231 = vsel %vm227, %v224, 0.0
    %232 = vadd.xlane.f32.xlu0 %v231
    %v233 = vpop.xlane.xlu0 %232
    %v234 = vrcp.pop 64.0
    %v235 = vmul.f32 %v230, %v234
    %v236 = vmul.f32 %v233, %v234
    %v237 = vsub.f32 %v223, %v235
    %v238 = vsub.f32 %v224, %v236
    %v239 = vmul.f32 %v237, %v237
    %v240 = vmul.f32 %v238, %v238
    %v241 = vsel %vm227, %v239, 0.0
    %242 = vadd.xlane.f32.xlu0 %v241
    %v243 = vpop.xlane.xlu0 %242
    %v244 = vsel %vm227, %v240, 0.0
    %245 = vadd.xlane.f32.xlu0 %v244
    %v246 = vpop.xlane.xlu0 %245
    %v247 = vmul.f32 %v243, %v234
    %v248 = vmul.f32 %v246, %v234
    %v249 = vadd.f32 %v247, 1e-12
    %v250 = vadd.f32 %v248, 1e-12
    %v251 = vrsqrt.pop %v249
    %v252 = vrsqrt.pop %v250
    %v253 = vmul.f32 %v237, %v251
    %v254 = vmul.f32 %v238, %v252
    %v256 = vlaneseq
    %v257 = vshrl.u32 %v256, 7
    %v258 = vsub.s32 0, %v257
    %v259 = vrot.slane %v225, %v258
    %v261 = vmul.f32 %v253, %v259
    %v262 = vmul.f32 %v254, %v259
    %v264 = vlaneseq
    %v265 = vshrl.u32 %v264, 7
    %v266 = vsub.s32 0, %v265
    %v267 = vrot.slane %v226, %v266
    %v269 = vadd.f32 %v261, %v267
    %v270 = vadd.f32 %v262, %v267
    %v271 = vld [vmem:[%s9] sm:$0xff]
    %v272 = vld [vmem:[%s9 + $0x8] sm:$0xff]
    %v273 = vld [vmem:[%s9 + $0x10] sm:$0xff]
    %v274 = vld [vmem:[%s9 + $0x18] sm:$0xff]
    %v275 = vld [vmem:[%s9 + $0x20] sm:$0xff]
    %v276 = vld [vmem:[%s9 + $0x28] sm:$0xff]
    %v277 = vld [vmem:[%s9 + $0x30] sm:$0xff]
    %v278 = vld [vmem:[%s9 + $0x38] sm:$0xff]
    %v279 = vld [vmem:[%s9 + $0x40] sm:$0xff]
    %v280 = vld [vmem:[%s9 + $0x48] sm:$0xff]
    %v281 = vld [vmem:[%s9 + $0x50] sm:$0xff]
    %v282 = vld [vmem:[%s9 + $0x58] sm:$0xff]
    %v283 = vld [vmem:[%s9 + $0x60] sm:$0xff]
    %v284 = vld [vmem:[%s9 + $0x68] sm:$0xff]
    %v285 = vld [vmem:[%s9 + $0x70] sm:$0xff]
    %v286 = vld [vmem:[%s9 + $0x78] sm:$0xff]
    %v287 = vld [vmem:[%s11] sm:$0x3]
    %v289 = vlaneseq
    %v290 = vshrl.u32 %v289, 7
    %v291 = vsub.s32 0, %v290
    %v292 = vrot.slane %v287, %v291
    %v293 = vlaneseq
    %v294 = vshrl.u32 %v293, 7
    %v295 = vsub.s32 1, %v294
    %v296 = vrot.slane %v287, %v295
    %v300 = vsel %vm227, %v269, 0
    %v303 = vsel %vm227, %v270, 0
    %305 = vmatprep.subr.mxu0 0.0
    %306 = vmatpush1.msra.mxu0 0.0
    %307 = vmatprep.subr.mxu0 0.0
    %308 = vmatpush1.msra.mxu0 0.0
    %309 = vmatprep.subr.mxu0 0.0
    %310 = vmatpush1.msra.mxu0 0.0
    %311 = vmatprep.subr.mxu0 0.0
    %312 = vmatpush1.msra.mxu0 0.0
    %313 = vmatprep.subr.mxu0 0.0
    %314 = vmatpush1.msra.mxu0 0.0
    %315 = vmatprep.subr.mxu0 0.0
    %316 = vmatpush1.msra.mxu0 0.0
    %317 = vmatprep.subr.mxu0 0.0
    %318 = vmatpush1.msra.mxu0 0.0
    %319 = vmatprep.subr.mxu0 0.0
    %320 = vmatpush1.msra.mxu0 0.0
    %321 = vmatprep.subr.mxu0 %v286
    %322 = vmatpush1.msra.mxu0 %v285
    %323 = vmatprep.subr.mxu0 %v284
    %324 = vmatpush1.msra.mxu0 %v283
    %325 = vmatprep.subr.mxu0 %v282
    %326 = vmatpush1.msra.mxu0 %v281
    %327 = vmatprep.subr.mxu0 %v280
    %328 = vmatpush1.msra.mxu0 %v279
    %329 = vmatprep.subr.mxu0 %v278
    %330 = vmatpush1.msra.mxu0 %v277
    %331 = vmatprep.subr.mxu0 %v276
    %332 = vmatpush1.msra.mxu0 %v275
    %333 = vmatprep.subr.mxu0 %v274
    %334 = vmatpush1.msra.mxu0 %v273
    %335 = vmatprep.subr.mxu0 %v272
    %336 = vmatpush1.msra.mxu0 %v271
    %337 = vmatprep.subr.mxu0 0.0
    %338 = vmatpush2.msra.mxu0 0.0
    %339 = vmatprep.subr.mxu0 0.0
    %340 = vmatpush2.msra.mxu0 0.0
    %341 = vmatprep.subr.mxu0 0.0
    %342 = vmatpush2.msra.mxu0 0.0
    %343 = vmatprep.subr.mxu0 0.0
    %344 = vmatpush2.msra.mxu0 0.0
    %345 = vmatprep.subr.mxu0 0.0
    %346 = vmatpush2.msra.mxu0 0.0
    %347 = vmatprep.subr.mxu0 0.0
    %348 = vmatpush2.msra.mxu0 0.0
    %349 = vmatprep.subr.mxu0 0.0
    %350 = vmatpush2.msra.mxu0 0.0
    %351 = vmatprep.subr.mxu0 0.0
    %352 = vmatpush2.msra.mxu0 0.0
    %353 = vmatprep.subr.mxu0 0.0
    %354 = vmatpush2.msra.mxu0 0.0
    %355 = vmatprep.subr.mxu0 0.0
    %356 = vmatpush2.msra.mxu0 0.0
    %357 = vmatprep.subr.mxu0 0.0
    %358 = vmatpush2.msra.mxu0 0.0
    %359 = vmatprep.subr.mxu0 0.0
    %360 = vmatpush2.msra.mxu0 0.0
    %361 = vmatprep.subr.mxu0 0.0
    %362 = vmatpush2.msra.mxu0 0.0
    %363 = vmatprep.subr.mxu0 0.0
    %364 = vmatpush2.msra.mxu0 0.0
    %365 = vmatprep.subr.mxu0 0.0
    %366 = vmatpush2.msra.mxu0 0.0
    %367 = vmatprep.subr.mxu0 0.0
    %368 = vmatpush2.msra.mxu0 0.0
    %369 = vmatprep.mubr.f32.mxu0 0.0
    %370 = vmatmul.mubr.f32.gmra.mxu0 %v300
    %v371 = vpop.f32.mrf.mxu0
    %v372 = vadd.f32 %v292, %v371
    %v373 = vpop.f32.mrf.mxu0
    %v374 = vadd.f32 %v296, %v373
    %375 = vmatprep.mubr.f32.mxu0 0.0
    %376 = vmatmul.mubr.f32.gmra.mxu0 %v303
    %v377 = vpop.f32.mrf.mxu0
    %v378 = vadd.f32 %v292, %v377
    %v379 = vpop.f32.mrf.mxu0
    %v380 = vadd.f32 %v296, %v379
    %381 = vdwg.mxu0
    %383 = vrot.lane.b32.xlu0 %v372, 64
    %v384 = vpop.permute.xlu0 %383
    %vm385 = vcmask 130048
    %v386 = vsel %vm385, %v372, 0
    %v388 = vsel %vm385, %v384, 0
    %390 = vmatprep.subr.mxu0 0.0
    %391 = vmatpush1.xpose.msra.mxu0 0.0
    %392 = vmatprep.subr.mxu0 0.0
    %393 = vmatpush1.xpose.msra.mxu0 0.0
    %394 = vmatprep.subr.mxu0 0.0
    %395 = vmatpush1.xpose.msra.mxu0 0.0
    %396 = vmatprep.subr.mxu0 0.0
    %397 = vmatpush1.xpose.msra.mxu0 0.0
    %398 = vmatprep.subr.mxu0 0.0
    %399 = vmatpush1.xpose.msra.mxu0 0.0
    %400 = vmatprep.subr.mxu0 0.0
    %401 = vmatpush1.xpose.msra.mxu0 0.0
    %402 = vmatprep.subr.mxu0 0.0
    %403 = vmatpush1.xpose.msra.mxu0 0.0
    %404 = vmatprep.subr.mxu0 0.0
    %405 = vmatpush1.xpose.msra.mxu0 0.0
    %406 = vmatprep.subr.mxu0 0.0
    %407 = vmatpush1.xpose.msra.mxu0 0.0
    %408 = vmatprep.subr.mxu0 0.0
    %409 = vmatpush1.xpose.msra.mxu0 0.0
    %410 = vmatprep.subr.mxu0 0.0
    %411 = vmatpush1.xpose.msra.mxu0 0.0
    %412 = vmatprep.subr.mxu0 0.0
    %413 = vmatpush1.xpose.msra.mxu0 0.0
    %414 = vmatprep.subr.mxu0 0.0
    %415 = vmatpush1.xpose.msra.mxu0 0.0
    %416 = vmatprep.subr.mxu0 0.0
    %417 = vmatpush1.xpose.msra.mxu0 0.0
    %418 = vmatprep.subr.mxu0 0.0
    %419 = vmatpush1.xpose.msra.mxu0 0.0
    %420 = vmatprep.subr.mxu0 0.0
    %421 = vmatpush1.xpose.msra.mxu0 %v388
    %422 = vmatprep.subr.mxu0 0.0
    %423 = vmatpush2.xpose.msra.mxu0 0.0
    %424 = vmatprep.subr.mxu0 0.0
    %425 = vmatpush2.xpose.msra.mxu0 0.0
    %426 = vmatprep.subr.mxu0 0.0
    %427 = vmatpush2.xpose.msra.mxu0 0.0
    %428 = vmatprep.subr.mxu0 0.0
    %429 = vmatpush2.xpose.msra.mxu0 0.0
    %430 = vmatprep.subr.mxu0 0.0
    %431 = vmatpush2.xpose.msra.mxu0 0.0
    %432 = vmatprep.subr.mxu0 0.0
    %433 = vmatpush2.xpose.msra.mxu0 0.0
    %434 = vmatprep.subr.mxu0 0.0
    %435 = vmatpush2.xpose.msra.mxu0 0.0
    %436 = vmatprep.subr.mxu0 0.0
    %437 = vmatpush2.xpose.msra.mxu0 0.0
    %438 = vmatprep.subr.mxu0 0.0
    %439 = vmatpush2.xpose.msra.mxu0 0.0
    %440 = vmatprep.subr.mxu0 0.0
    %441 = vmatpush2.xpose.msra.mxu0 0.0
    %442 = vmatprep.subr.mxu0 0.0
    %443 = vmatpush2.xpose.msra.mxu0 0.0
    %444 = vmatprep.subr.mxu0 0.0
    %445 = vmatpush2.xpose.msra.mxu0 0.0
    %446 = vmatprep.subr.mxu0 0.0
    %447 = vmatpush2.xpose.msra.mxu0 0.0
    %448 = vmatprep.subr.mxu0 0.0
    %449 = vmatpush2.xpose.msra.mxu0 0.0
    %450 = vmatprep.subr.mxu0 0.0
    %451 = vmatpush2.xpose.msra.mxu0 0.0
    %452 = vmatprep.subr.mxu0 0.0
    %453 = vmatpush2.xpose.msra.mxu0 0.0
    %454 = vmatprep.mubr.f32.mxu0 0.0
    %455 = vmatmul.mubr.f32.gmra.mxu0 %v386
    %v456 = vpop.f32.mrf.mxu0
    %v457 = vadd.f32 0.0, %v456
    %v458 = vpop.f32.mrf.mxu0
    %459 = vdwg.mxu0
    %v460 = vmul.f32 %v457, 0.25
    %v461 = vlaneseq
    %v462 = vshrl.u32 %v461, 7
    %v463 = vsub.s32 0, %v462
    %v464 = vrot.slane %v222, %v463
    %v465 = vadd.f32 %v460, %v464
    %vm466 = vcmask 64512
    %v467 = vsel %vm466, %v465, -inf
    %468 = vmax.xlane.f32.xlu0 %v467
    %v469 = vpop.xlane.xlu0 %468
    %v470 = vsub.f32 %v465, %v469
    %v471 = vmul.f32 %v470, 1.442695
    %v472 = vpow.pop %v471
    %v473 = vsel %vm466, %v472, 0.0
    %474 = vadd.xlane.f32.xlu0 %v473
    %v475 = vpop.xlane.xlu0 %474
    %v476 = vrcp.pop %v475
    %v477 = vmul.f32 %v472, %v476
    %v479 = vsel %vm466, %v477, 0
    %481 = vmatprep.subr.mxu0 0.0
    %482 = vmatpush1.msra.mxu0 0.0
    %483 = vmatprep.subr.mxu0 0.0
    %484 = vmatpush1.msra.mxu0 0.0
    %485 = vmatprep.subr.mxu0 0.0
    %486 = vmatpush1.msra.mxu0 0.0
    %487 = vmatprep.subr.mxu0 0.0
    %488 = vmatpush1.msra.mxu0 0.0
    %489 = vmatprep.subr.mxu0 0.0
    %490 = vmatpush1.msra.mxu0 0.0
    %491 = vmatprep.subr.mxu0 0.0
    %492 = vmatpush1.msra.mxu0 0.0
    %493 = vmatprep.subr.mxu0 0.0
    %494 = vmatpush1.msra.mxu0 0.0
    %495 = vmatprep.subr.mxu0 0.0
    %496 = vmatpush1.msra.mxu0 0.0
    %497 = vmatprep.subr.mxu0 0.0
    %498 = vmatpush1.msra.mxu0 0.0
    %499 = vmatprep.subr.mxu0 0.0
    %500 = vmatpush1.msra.mxu0 0.0
    %501 = vmatprep.subr.mxu0 0.0
    %502 = vmatpush1.msra.mxu0 0.0
    %503 = vmatprep.subr.mxu0 0.0
    %504 = vmatpush1.msra.mxu0 0.0
    %505 = vmatprep.subr.mxu0 0.0
    %506 = vmatpush1.msra.mxu0 0.0
    %507 = vmatprep.subr.mxu0 0.0
    %508 = vmatpush1.msra.mxu0 0.0
    %509 = vmatprep.subr.mxu0 0.0
    %510 = vmatpush1.msra.mxu0 0.0
    %511 = vmatprep.subr.mxu0 0.0
    %512 = vmatpush1.msra.mxu0 %v374
    %513 = vmatprep.subr.mxu0 0.0
    %514 = vmatpush2.msra.mxu0 0.0
    %515 = vmatprep.subr.mxu0 0.0
    %516 = vmatpush2.msra.mxu0 0.0
    %517 = vmatprep.subr.mxu0 0.0
    %518 = vmatpush2.msra.mxu0 0.0
    %519 = vmatprep.subr.mxu0 0.0
    %520 = vmatpush2.msra.mxu0 0.0
    %521 = vmatprep.subr.mxu0 0.0
    %522 = vmatpush2.msra.mxu0 0.0
    %523 = vmatprep.subr.mxu0 0.0
    %524 = vmatpush2.msra.mxu0 0.0
    %525 = vmatprep.subr.mxu0 0.0
    %526 = vmatpush2.msra.mxu0 0.0
    %527 = vmatprep.subr.mxu0 0.0
    %528 = vmatpush2.msra.mxu0 0.0
    %529 = vmatprep.subr.mxu0 0.0
    %530 = vmatpush2.msra.mxu0 0.0
    %531 = vmatprep.subr.mxu0 0.0
    %532 = vmatpush2.msra.mxu0 0.0
    %533 = vmatprep.subr.mxu0 0.0
    %534 = vmatpush2.msra.mxu0 0.0
    %535 = vmatprep.subr.mxu0 0.0
    %536 = vmatpush2.msra.mxu0 0.0
    %537 = vmatprep.subr.mxu0 0.0
    %538 = vmatpush2.msra.mxu0 0.0
    %539 = vmatprep.subr.mxu0 0.0
    %540 = vmatpush2.msra.mxu0 0.0
    %541 = vmatprep.subr.mxu0 0.0
    %542 = vmatpush2.msra.mxu0 0.0
    %543 = vmatprep.subr.mxu0 0.0
    %544 = vmatpush2.msra.mxu0 0.0
    %545 = vmatprep.mubr.f32.mxu0 0.0
    %546 = vmatmul.mubr.f32.gmra.mxu0 %v479
    %v547 = vpop.f32.mrf.mxu0
    %v548 = vadd.f32 0.0, %v547
    %v549 = vpop.f32.mrf.mxu0
    %550 = vdwg.mxu0
    %551 = vrot.lane.b32.xlu0 %v372, 112
    %v552 = vpop.permute.xlu0 %551
    %553 = vrot.lane.b32.xlu0 %v372, 48
    %v554 = vpop.permute.xlu0 %553
    %v555 = vsel %vm385, %v552, 0
    %v557 = vsel %vm385, %v554, 0
    %559 = vmatprep.subr.mxu0 0.0
    %560 = vmatpush1.xpose.msra.mxu0 0.0
    %561 = vmatprep.subr.mxu0 0.0
    %562 = vmatpush1.xpose.msra.mxu0 0.0
    %563 = vmatprep.subr.mxu0 0.0
    %564 = vmatpush1.xpose.msra.mxu0 0.0
    %565 = vmatprep.subr.mxu0 0.0
    %566 = vmatpush1.xpose.msra.mxu0 0.0
    %567 = vmatprep.subr.mxu0 0.0
    %568 = vmatpush1.xpose.msra.mxu0 0.0
    %569 = vmatprep.subr.mxu0 0.0
    %570 = vmatpush1.xpose.msra.mxu0 0.0
    %571 = vmatprep.subr.mxu0 0.0
    %572 = vmatpush1.xpose.msra.mxu0 0.0
    %573 = vmatprep.subr.mxu0 0.0
    %574 = vmatpush1.xpose.msra.mxu0 0.0
    %575 = vmatprep.subr.mxu0 0.0
    %576 = vmatpush1.xpose.msra.mxu0 0.0
    %577 = vmatprep.subr.mxu0 0.0
    %578 = vmatpush1.xpose.msra.mxu0 0.0
    %579 = vmatprep.subr.mxu0 0.0
    %580 = vmatpush1.xpose.msra.mxu0 0.0
    %581 = vmatprep.subr.mxu0 0.0
    %582 = vmatpush1.xpose.msra.mxu0 0.0
    %583 = vmatprep.subr.mxu0 0.0
    %584 = vmatpush1.xpose.msra.mxu0 0.0
    %585 = vmatprep.subr.mxu0 0.0
    %586 = vmatpush1.xpose.msra.mxu0 0.0
    %587 = vmatprep.subr.mxu0 0.0
    %588 = vmatpush1.xpose.msra.mxu0 0.0
    %589 = vmatprep.subr.mxu0 0.0
    %590 = vmatpush1.xpose.msra.mxu0 %v557
    %591 = vmatprep.subr.mxu0 0.0
    %592 = vmatpush2.xpose.msra.mxu0 0.0
    %593 = vmatprep.subr.mxu0 0.0
    %594 = vmatpush2.xpose.msra.mxu0 0.0
    %595 = vmatprep.subr.mxu0 0.0
    %596 = vmatpush2.xpose.msra.mxu0 0.0
    %597 = vmatprep.subr.mxu0 0.0
    %598 = vmatpush2.xpose.msra.mxu0 0.0
    %599 = vmatprep.subr.mxu0 0.0
    %600 = vmatpush2.xpose.msra.mxu0 0.0
    %601 = vmatprep.subr.mxu0 0.0
    %602 = vmatpush2.xpose.msra.mxu0 0.0
    %603 = vmatprep.subr.mxu0 0.0
    %604 = vmatpush2.xpose.msra.mxu0 0.0
    %605 = vmatprep.subr.mxu0 0.0
    %606 = vmatpush2.xpose.msra.mxu0 0.0
    %607 = vmatprep.subr.mxu0 0.0
    %608 = vmatpush2.xpose.msra.mxu0 0.0
    %609 = vmatprep.subr.mxu0 0.0
    %610 = vmatpush2.xpose.msra.mxu0 0.0
    %611 = vmatprep.subr.mxu0 0.0
    %612 = vmatpush2.xpose.msra.mxu0 0.0
    %613 = vmatprep.subr.mxu0 0.0
    %614 = vmatpush2.xpose.msra.mxu0 0.0
    %615 = vmatprep.subr.mxu0 0.0
    %616 = vmatpush2.xpose.msra.mxu0 0.0
    %617 = vmatprep.subr.mxu0 0.0
    %618 = vmatpush2.xpose.msra.mxu0 0.0
    %619 = vmatprep.subr.mxu0 0.0
    %620 = vmatpush2.xpose.msra.mxu0 0.0
    %621 = vmatprep.subr.mxu0 0.0
    %622 = vmatpush2.xpose.msra.mxu0 0.0
    %623 = vmatprep.mubr.f32.mxu0 0.0
    %624 = vmatmul.mubr.f32.gmra.mxu0 %v555
    %v625 = vpop.f32.mrf.mxu0
    %v626 = vadd.f32 0.0, %v625
    %v627 = vpop.f32.mrf.mxu0
    %628 = vdwg.mxu0
    %v629 = vmul.f32 %v626, 0.25
    %v630 = vadd.f32 %v629, %v464
    %v631 = vsel %vm466, %v630, -inf
    %632 = vmax.xlane.f32.xlu0 %v631
    %v633 = vpop.xlane.xlu0 %632
    %v634 = vsub.f32 %v630, %v633
    %v635 = vmul.f32 %v634, 1.442695
    %v636 = vpow.pop %v635
    %v637 = vsel %vm466, %v636, 0.0
    %638 = vadd.xlane.f32.xlu0 %v637
    %v639 = vpop.xlane.xlu0 %638
    %v640 = vrcp.pop %v639
    %v641 = vmul.f32 %v636, %v640
    %643 = vrot.lane.b32.xlu0 %v374, 112
    %v644 = vpop.permute.xlu0 %643
    %v647 = vsel %vm466, %v641, 0
    %649 = vmatprep.subr.mxu0 0.0
    %650 = vmatpush1.msra.mxu0 0.0
    %651 = vmatprep.subr.mxu0 0.0
    %652 = vmatpush1.msra.mxu0 0.0
    %653 = vmatprep.subr.mxu0 0.0
    %654 = vmatpush1.msra.mxu0 0.0
    %655 = vmatprep.subr.mxu0 0.0
    %656 = vmatpush1.msra.mxu0 0.0
    %657 = vmatprep.subr.mxu0 0.0
    %658 = vmatpush1.msra.mxu0 0.0
    %659 = vmatprep.subr.mxu0 0.0
    %660 = vmatpush1.msra.mxu0 0.0
    %661 = vmatprep.subr.mxu0 0.0
    %662 = vmatpush1.msra.mxu0 0.0
    %663 = vmatprep.subr.mxu0 0.0
    %664 = vmatpush1.msra.mxu0 0.0
    %665 = vmatprep.subr.mxu0 0.0
    %666 = vmatpush1.msra.mxu0 0.0
    %667 = vmatprep.subr.mxu0 0.0
    %668 = vmatpush1.msra.mxu0 0.0
    %669 = vmatprep.subr.mxu0 0.0
    %670 = vmatpush1.msra.mxu0 0.0
    %671 = vmatprep.subr.mxu0 0.0
    %672 = vmatpush1.msra.mxu0 0.0
    %673 = vmatprep.subr.mxu0 0.0
    %674 = vmatpush1.msra.mxu0 0.0
    %675 = vmatprep.subr.mxu0 0.0
    %676 = vmatpush1.msra.mxu0 0.0
    %677 = vmatprep.subr.mxu0 0.0
    %678 = vmatpush1.msra.mxu0 0.0
    %679 = vmatprep.subr.mxu0 0.0
    %680 = vmatpush1.msra.mxu0 %v644
    %681 = vmatprep.subr.mxu0 0.0
    %682 = vmatpush2.msra.mxu0 0.0
    %683 = vmatprep.subr.mxu0 0.0
    %684 = vmatpush2.msra.mxu0 0.0
    %685 = vmatprep.subr.mxu0 0.0
    %686 = vmatpush2.msra.mxu0 0.0
    %687 = vmatprep.subr.mxu0 0.0
    %688 = vmatpush2.msra.mxu0 0.0
    %689 = vmatprep.subr.mxu0 0.0
    %690 = vmatpush2.msra.mxu0 0.0
    %691 = vmatprep.subr.mxu0 0.0
    %692 = vmatpush2.msra.mxu0 0.0
    %693 = vmatprep.subr.mxu0 0.0
    %694 = vmatpush2.msra.mxu0 0.0
    %695 = vmatprep.subr.mxu0 0.0
    %696 = vmatpush2.msra.mxu0 0.0
    %697 = vmatprep.subr.mxu0 0.0
    %698 = vmatpush2.msra.mxu0 0.0
    %699 = vmatprep.subr.mxu0 0.0
    %700 = vmatpush2.msra.mxu0 0.0
    %701 = vmatprep.subr.mxu0 0.0
    %702 = vmatpush2.msra.mxu0 0.0
    %703 = vmatprep.subr.mxu0 0.0
    %704 = vmatpush2.msra.mxu0 0.0
    %705 = vmatprep.subr.mxu0 0.0
    %706 = vmatpush2.msra.mxu0 0.0
    %707 = vmatprep.subr.mxu0 0.0
    %708 = vmatpush2.msra.mxu0 0.0
    %709 = vmatprep.subr.mxu0 0.0
    %710 = vmatpush2.msra.mxu0 0.0
    %711 = vmatprep.subr.mxu0 0.0
    %712 = vmatpush2.msra.mxu0 0.0
    %713 = vmatprep.mubr.f32.mxu0 0.0
    %714 = vmatmul.mubr.f32.gmra.mxu0 %v647
    %v715 = vpop.f32.mrf.mxu0
    %v716 = vadd.f32 0.0, %v715
    %v717 = vpop.f32.mrf.mxu0
    %718 = vdwg.mxu0
    %719 = vrot.lane.b32.xlu0 %v372, 96
    %v720 = vpop.permute.xlu0 %719
    %721 = vrot.lane.b32.xlu0 %v372, 32
    %v722 = vpop.permute.xlu0 %721
    %v723 = vsel %vm385, %v720, 0
    %v725 = vsel %vm385, %v722, 0
    %727 = vmatprep.subr.mxu0 0.0
    %728 = vmatpush1.xpose.msra.mxu0 0.0
    %729 = vmatprep.subr.mxu0 0.0
    %730 = vmatpush1.xpose.msra.mxu0 0.0
    %731 = vmatprep.subr.mxu0 0.0
    %732 = vmatpush1.xpose.msra.mxu0 0.0
    %733 = vmatprep.subr.mxu0 0.0
    %734 = vmatpush1.xpose.msra.mxu0 0.0
    %735 = vmatprep.subr.mxu0 0.0
    %736 = vmatpush1.xpose.msra.mxu0 0.0
    %737 = vmatprep.subr.mxu0 0.0
    %738 = vmatpush1.xpose.msra.mxu0 0.0
    %739 = vmatprep.subr.mxu0 0.0
    %740 = vmatpush1.xpose.msra.mxu0 0.0
    %741 = vmatprep.subr.mxu0 0.0
    %742 = vmatpush1.xpose.msra.mxu0 0.0
    %743 = vmatprep.subr.mxu0 0.0
    %744 = vmatpush1.xpose.msra.mxu0 0.0
    %745 = vmatprep.subr.mxu0 0.0
    %746 = vmatpush1.xpose.msra.mxu0 0.0
    %747 = vmatprep.subr.mxu0 0.0
    %748 = vmatpush1.xpose.msra.mxu0 0.0
    %749 = vmatprep.subr.mxu0 0.0
    %750 = vmatpush1.xpose.msra.mxu0 0.0
    %751 = vmatprep.subr.mxu0 0.0
    %752 = vmatpush1.xpose.msra.mxu0 0.0
    %753 = vmatprep.subr.mxu0 0.0
    %754 = vmatpush1.xpose.msra.mxu0 0.0
    %755 = vmatprep.subr.mxu0 0.0
    %756 = vmatpush1.xpose.msra.mxu0 0.0
    %757 = vmatprep.subr.mxu0 0.0
    %758 = vmatpush1.xpose.msra.mxu0 %v725
    %759 = vmatprep.subr.mxu0 0.0
    %760 = vmatpush2.xpose.msra.mxu0 0.0
    %761 = vmatprep.subr.mxu0 0.0
    %762 = vmatpush2.xpose.msra.mxu0 0.0
    %763 = vmatprep.subr.mxu0 0.0
    %764 = vmatpush2.xpose.msra.mxu0 0.0
    %765 = vmatprep.subr.mxu0 0.0
    %766 = vmatpush2.xpose.msra.mxu0 0.0
    %767 = vmatprep.subr.mxu0 0.0
    %768 = vmatpush2.xpose.msra.mxu0 0.0
    %769 = vmatprep.subr.mxu0 0.0
    %770 = vmatpush2.xpose.msra.mxu0 0.0
    %771 = vmatprep.subr.mxu0 0.0
    %772 = vmatpush2.xpose.msra.mxu0 0.0
    %773 = vmatprep.subr.mxu0 0.0
    %774 = vmatpush2.xpose.msra.mxu0 0.0
    %775 = vmatprep.subr.mxu0 0.0
    %776 = vmatpush2.xpose.msra.mxu0 0.0
    %777 = vmatprep.subr.mxu0 0.0
    %778 = vmatpush2.xpose.msra.mxu0 0.0
    %779 = vmatprep.subr.mxu0 0.0
    %780 = vmatpush2.xpose.msra.mxu0 0.0
    %781 = vmatprep.subr.mxu0 0.0
    %782 = vmatpush2.xpose.msra.mxu0 0.0
    %783 = vmatprep.subr.mxu0 0.0
    %784 = vmatpush2.xpose.msra.mxu0 0.0
    %785 = vmatprep.subr.mxu0 0.0
    %786 = vmatpush2.xpose.msra.mxu0 0.0
    %787 = vmatprep.subr.mxu0 0.0
    %788 = vmatpush2.xpose.msra.mxu0 0.0
    %789 = vmatprep.subr.mxu0 0.0
    %790 = vmatpush2.xpose.msra.mxu0 0.0
    %791 = vmatprep.mubr.f32.mxu0 0.0
    %792 = vmatmul.mubr.f32.gmra.mxu0 %v723
    %v793 = vpop.f32.mrf.mxu0
    %v794 = vadd.f32 0.0, %v793
    %v795 = vpop.f32.mrf.mxu0
    %796 = vdwg.mxu0
    %v797 = vmul.f32 %v794, 0.25
    %v798 = vadd.f32 %v797, %v464
    %v799 = vsel %vm466, %v798, -inf
    %800 = vmax.xlane.f32.xlu0 %v799
    %v801 = vpop.xlane.xlu0 %800
    %v802 = vsub.f32 %v798, %v801
    %v803 = vmul.f32 %v802, 1.442695
    %v804 = vpow.pop %v803
    %v805 = vsel %vm466, %v804, 0.0
    %806 = vadd.xlane.f32.xlu0 %v805
    %v807 = vpop.xlane.xlu0 %806
    %v808 = vrcp.pop %v807
    %v809 = vmul.f32 %v804, %v808
    %810 = vrot.lane.b32.xlu0 %v374, 96
    %v811 = vpop.permute.xlu0 %810
    %v814 = vsel %vm466, %v809, 0
    %816 = vmatprep.subr.mxu0 0.0
    %817 = vmatpush1.msra.mxu0 0.0
    %818 = vmatprep.subr.mxu0 0.0
    %819 = vmatpush1.msra.mxu0 0.0
    %820 = vmatprep.subr.mxu0 0.0
    %821 = vmatpush1.msra.mxu0 0.0
    %822 = vmatprep.subr.mxu0 0.0
    %823 = vmatpush1.msra.mxu0 0.0
    %824 = vmatprep.subr.mxu0 0.0
    %825 = vmatpush1.msra.mxu0 0.0
    %826 = vmatprep.subr.mxu0 0.0
    %827 = vmatpush1.msra.mxu0 0.0
    %828 = vmatprep.subr.mxu0 0.0
    %829 = vmatpush1.msra.mxu0 0.0
    %830 = vmatprep.subr.mxu0 0.0
    %831 = vmatpush1.msra.mxu0 0.0
    %832 = vmatprep.subr.mxu0 0.0
    %833 = vmatpush1.msra.mxu0 0.0
    %834 = vmatprep.subr.mxu0 0.0
    %835 = vmatpush1.msra.mxu0 0.0
    %836 = vmatprep.subr.mxu0 0.0
    %837 = vmatpush1.msra.mxu0 0.0
    %838 = vmatprep.subr.mxu0 0.0
    %839 = vmatpush1.msra.mxu0 0.0
    %840 = vmatprep.subr.mxu0 0.0
    %841 = vmatpush1.msra.mxu0 0.0
    %842 = vmatprep.subr.mxu0 0.0
    %843 = vmatpush1.msra.mxu0 0.0
    %844 = vmatprep.subr.mxu0 0.0
    %845 = vmatpush1.msra.mxu0 0.0
    %846 = vmatprep.subr.mxu0 0.0
    %847 = vmatpush1.msra.mxu0 %v811
    %848 = vmatprep.subr.mxu0 0.0
    %849 = vmatpush2.msra.mxu0 0.0
    %850 = vmatprep.subr.mxu0 0.0
    %851 = vmatpush2.msra.mxu0 0.0
    %852 = vmatprep.subr.mxu0 0.0
    %853 = vmatpush2.msra.mxu0 0.0
    %854 = vmatprep.subr.mxu0 0.0
    %855 = vmatpush2.msra.mxu0 0.0
    %856 = vmatprep.subr.mxu0 0.0
    %857 = vmatpush2.msra.mxu0 0.0
    %858 = vmatprep.subr.mxu0 0.0
    %859 = vmatpush2.msra.mxu0 0.0
    %860 = vmatprep.subr.mxu0 0.0
    %861 = vmatpush2.msra.mxu0 0.0
    %862 = vmatprep.subr.mxu0 0.0
    %863 = vmatpush2.msra.mxu0 0.0
    %864 = vmatprep.subr.mxu0 0.0
    %865 = vmatpush2.msra.mxu0 0.0
    %866 = vmatprep.subr.mxu0 0.0
    %867 = vmatpush2.msra.mxu0 0.0
    %868 = vmatprep.subr.mxu0 0.0
    %869 = vmatpush2.msra.mxu0 0.0
    %870 = vmatprep.subr.mxu0 0.0
    %871 = vmatpush2.msra.mxu0 0.0
    %872 = vmatprep.subr.mxu0 0.0
    %873 = vmatpush2.msra.mxu0 0.0
    %874 = vmatprep.subr.mxu0 0.0
    %875 = vmatpush2.msra.mxu0 0.0
    %876 = vmatprep.subr.mxu0 0.0
    %877 = vmatpush2.msra.mxu0 0.0
    %878 = vmatprep.subr.mxu0 0.0
    %879 = vmatpush2.msra.mxu0 0.0
    %880 = vmatprep.mubr.f32.mxu0 0.0
    %881 = vmatmul.mubr.f32.gmra.mxu0 %v814
    %v882 = vpop.f32.mrf.mxu0
    %v883 = vadd.f32 0.0, %v882
    %v884 = vpop.f32.mrf.mxu0
    %885 = vdwg.mxu0
    %886 = vrot.lane.b32.xlu0 %v372, 80
    %v887 = vpop.permute.xlu0 %886
    %888 = vrot.lane.b32.xlu0 %v372, 16
    %v889 = vpop.permute.xlu0 %888
    %v890 = vsel %vm385, %v887, 0
    %v892 = vsel %vm385, %v889, 0
    %894 = vmatprep.subr.mxu0 0.0
    %895 = vmatpush1.xpose.msra.mxu0 0.0
    %896 = vmatprep.subr.mxu0 0.0
    %897 = vmatpush1.xpose.msra.mxu0 0.0
    %898 = vmatprep.subr.mxu0 0.0
    %899 = vmatpush1.xpose.msra.mxu0 0.0
    %900 = vmatprep.subr.mxu0 0.0
    %901 = vmatpush1.xpose.msra.mxu0 0.0
    %902 = vmatprep.subr.mxu0 0.0
    %903 = vmatpush1.xpose.msra.mxu0 0.0
    %904 = vmatprep.subr.mxu0 0.0
    %905 = vmatpush1.xpose.msra.mxu0 0.0
    %906 = vmatprep.subr.mxu0 0.0
    %907 = vmatpush1.xpose.msra.mxu0 0.0
    %908 = vmatprep.subr.mxu0 0.0
    %909 = vmatpush1.xpose.msra.mxu0 0.0
    %910 = vmatprep.subr.mxu0 0.0
    %911 = vmatpush1.xpose.msra.mxu0 0.0
    %912 = vmatprep.subr.mxu0 0.0
    %913 = vmatpush1.xpose.msra.mxu0 0.0
    %914 = vmatprep.subr.mxu0 0.0
    %915 = vmatpush1.xpose.msra.mxu0 0.0
    %916 = vmatprep.subr.mxu0 0.0
    %917 = vmatpush1.xpose.msra.mxu0 0.0
    %918 = vmatprep.subr.mxu0 0.0
    %919 = vmatpush1.xpose.msra.mxu0 0.0
    %920 = vmatprep.subr.mxu0 0.0
    %921 = vmatpush1.xpose.msra.mxu0 0.0
    %922 = vmatprep.subr.mxu0 0.0
    %923 = vmatpush1.xpose.msra.mxu0 0.0
    %924 = vmatprep.subr.mxu0 0.0
    %925 = vmatpush1.xpose.msra.mxu0 %v892
    %926 = vmatprep.subr.mxu0 0.0
    %927 = vmatpush2.xpose.msra.mxu0 0.0
    %928 = vmatprep.subr.mxu0 0.0
    %929 = vmatpush2.xpose.msra.mxu0 0.0
    %930 = vmatprep.subr.mxu0 0.0
    %931 = vmatpush2.xpose.msra.mxu0 0.0
    %932 = vmatprep.subr.mxu0 0.0
    %933 = vmatpush2.xpose.msra.mxu0 0.0
    %934 = vmatprep.subr.mxu0 0.0
    %935 = vmatpush2.xpose.msra.mxu0 0.0
    %936 = vmatprep.subr.mxu0 0.0
    %937 = vmatpush2.xpose.msra.mxu0 0.0
    %938 = vmatprep.subr.mxu0 0.0
    %939 = vmatpush2.xpose.msra.mxu0 0.0
    %940 = vmatprep.subr.mxu0 0.0
    %941 = vmatpush2.xpose.msra.mxu0 0.0
    %942 = vmatprep.subr.mxu0 0.0
    %943 = vmatpush2.xpose.msra.mxu0 0.0
    %944 = vmatprep.subr.mxu0 0.0
    %945 = vmatpush2.xpose.msra.mxu0 0.0
    %946 = vmatprep.subr.mxu0 0.0
    %947 = vmatpush2.xpose.msra.mxu0 0.0
    %948 = vmatprep.subr.mxu0 0.0
    %949 = vmatpush2.xpose.msra.mxu0 0.0
    %950 = vmatprep.subr.mxu0 0.0
    %951 = vmatpush2.xpose.msra.mxu0 0.0
    %952 = vmatprep.subr.mxu0 0.0
    %953 = vmatpush2.xpose.msra.mxu0 0.0
    %954 = vmatprep.subr.mxu0 0.0
    %955 = vmatpush2.xpose.msra.mxu0 0.0
    %956 = vmatprep.subr.mxu0 0.0
    %957 = vmatpush2.xpose.msra.mxu0 0.0
    %958 = vmatprep.mubr.f32.mxu0 0.0
    %959 = vmatmul.mubr.f32.gmra.mxu0 %v890
    %v960 = vpop.f32.mrf.mxu0
    %v961 = vadd.f32 0.0, %v960
    %v962 = vpop.f32.mrf.mxu0
    %963 = vdwg.mxu0
    %v964 = vmul.f32 %v961, 0.25
    %v965 = vadd.f32 %v964, %v464
    %v966 = vsel %vm466, %v965, -inf
    %967 = vmax.xlane.f32.xlu0 %v966
    %v968 = vpop.xlane.xlu0 %967
    %v969 = vsub.f32 %v965, %v968
    %v970 = vmul.f32 %v969, 1.442695
    %v971 = vpow.pop %v970
    %v972 = vsel %vm466, %v971, 0.0
    %973 = vadd.xlane.f32.xlu0 %v972
    %v974 = vpop.xlane.xlu0 %973
    %v975 = vrcp.pop %v974
    %v976 = vmul.f32 %v971, %v975
    %977 = vrot.lane.b32.xlu0 %v374, 80
    %v978 = vpop.permute.xlu0 %977
    %v981 = vsel %vm466, %v976, 0
    %983 = vmatprep.subr.mxu0 0.0
    %984 = vmatpush1.msra.mxu0 0.0
    %985 = vmatprep.subr.mxu0 0.0
    %986 = vmatpush1.msra.mxu0 0.0
    %987 = vmatprep.subr.mxu0 0.0
    %988 = vmatpush1.msra.mxu0 0.0
    %989 = vmatprep.subr.mxu0 0.0
    %990 = vmatpush1.msra.mxu0 0.0
    %991 = vmatprep.subr.mxu0 0.0
    %992 = vmatpush1.msra.mxu0 0.0
    %993 = vmatprep.subr.mxu0 0.0
    %994 = vmatpush1.msra.mxu0 0.0
    %995 = vmatprep.subr.mxu0 0.0
    %996 = vmatpush1.msra.mxu0 0.0
    %997 = vmatprep.subr.mxu0 0.0
    %998 = vmatpush1.msra.mxu0 0.0
    %999 = vmatprep.subr.mxu0 0.0
    %1000 = vmatpush1.msra.mxu0 0.0
    %1001 = vmatprep.subr.mxu0 0.0
    %1002 = vmatpush1.msra.mxu0 0.0
    %1003 = vmatprep.subr.mxu0 0.0
    %1004 = vmatpush1.msra.mxu0 0.0
    %1005 = vmatprep.subr.mxu0 0.0
    %1006 = vmatpush1.msra.mxu0 0.0
    %1007 = vmatprep.subr.mxu0 0.0
    %1008 = vmatpush1.msra.mxu0 0.0
    %1009 = vmatprep.subr.mxu0 0.0
    %1010 = vmatpush1.msra.mxu0 0.0
    %1011 = vmatprep.subr.mxu0 0.0
    %1012 = vmatpush1.msra.mxu0 0.0
    %1013 = vmatprep.subr.mxu0 0.0
    %1014 = vmatpush1.msra.mxu0 %v978
    %1015 = vmatprep.subr.mxu0 0.0
    %1016 = vmatpush2.msra.mxu0 0.0
    %1017 = vmatprep.subr.mxu0 0.0
    %1018 = vmatpush2.msra.mxu0 0.0
    %1019 = vmatprep.subr.mxu0 0.0
    %1020 = vmatpush2.msra.mxu0 0.0
    %1021 = vmatprep.subr.mxu0 0.0
    %1022 = vmatpush2.msra.mxu0 0.0
    %1023 = vmatprep.subr.mxu0 0.0
    %1024 = vmatpush2.msra.mxu0 0.0
    %1025 = vmatprep.subr.mxu0 0.0
    %1026 = vmatpush2.msra.mxu0 0.0
    %1027 = vmatprep.subr.mxu0 0.0
    %1028 = vmatpush2.msra.mxu0 0.0
    %1029 = vmatprep.subr.mxu0 0.0
    %1030 = vmatpush2.msra.mxu0 0.0
    %1031 = vmatprep.subr.mxu0 0.0
    %1032 = vmatpush2.msra.mxu0 0.0
    %1033 = vmatprep.subr.mxu0 0.0
    %1034 = vmatpush2.msra.mxu0 0.0
    %1035 = vmatprep.subr.mxu0 0.0
    %1036 = vmatpush2.msra.mxu0 0.0
    %1037 = vmatprep.subr.mxu0 0.0
    %1038 = vmatpush2.msra.mxu0 0.0
    %1039 = vmatprep.subr.mxu0 0.0
    %1040 = vmatpush2.msra.mxu0 0.0
    %1041 = vmatprep.subr.mxu0 0.0
    %1042 = vmatpush2.msra.mxu0 0.0
    %1043 = vmatprep.subr.mxu0 0.0
    %1044 = vmatpush2.msra.mxu0 0.0
    %1045 = vmatprep.subr.mxu0 0.0
    %1046 = vmatpush2.msra.mxu0 0.0
    %1047 = vmatprep.mubr.f32.mxu0 0.0
    %1048 = vmatmul.mubr.f32.gmra.mxu0 %v981
    %v1049 = vpop.f32.mrf.mxu0
    %v1050 = vadd.f32 0.0, %v1049
    %v1051 = vpop.f32.mrf.mxu0
    %1052 = vdwg.mxu0
    %1054 = vrot.lane.b32.xlu0 %v716, 16
    %v1055 = vpop.permute.xlu0 %1054
    %1058 = vrot.lane.b32.xlu0 %v883, 32
    %v1059 = vpop.permute.xlu0 %1058
    %1062 = vrot.lane.b32.xlu0 %v1050, 48
    %v1063 = vpop.permute.xlu0 %1062
    %v1065 = vsel %vm385, %v548, %v1055
    %vm1066 = vcmask 261120
    %v1067 = vsel %vm1066, %v1065, %v1059
    %vm1068 = vcmask 392192
    %v1069 = vsel %vm1068, %v1067, %v1063
    %1071 = vrot.lane.b32.xlu0 %v378, 64
    %v1072 = vpop.permute.xlu0 %1071
    %v1073 = vsel %vm385, %v378, 0
    %v1075 = vsel %vm385, %v1072, 0
    %1077 = vmatprep.subr.mxu0 0.0
    %1078 = vmatpush1.xpose.msra.mxu0 0.0
    %1079 = vmatprep.subr.mxu0 0.0
    %1080 = vmatpush1.xpose.msra.mxu0 0.0
    %1081 = vmatprep.subr.mxu0 0.0
    %1082 = vmatpush1.xpose.msra.mxu0 0.0
    %1083 = vmatprep.subr.mxu0 0.0
    %1084 = vmatpush1.xpose.msra.mxu0 0.0
    %1085 = vmatprep.subr.mxu0 0.0
    %1086 = vmatpush1.xpose.msra.mxu0 0.0
    %1087 = vmatprep.subr.mxu0 0.0
    %1088 = vmatpush1.xpose.msra.mxu0 0.0
    %1089 = vmatprep.subr.mxu0 0.0
    %1090 = vmatpush1.xpose.msra.mxu0 0.0
    %1091 = vmatprep.subr.mxu0 0.0
    %1092 = vmatpush1.xpose.msra.mxu0 0.0
    %1093 = vmatprep.subr.mxu0 0.0
    %1094 = vmatpush1.xpose.msra.mxu0 0.0
    %1095 = vmatprep.subr.mxu0 0.0
    %1096 = vmatpush1.xpose.msra.mxu0 0.0
    %1097 = vmatprep.subr.mxu0 0.0
    %1098 = vmatpush1.xpose.msra.mxu0 0.0
    %1099 = vmatprep.subr.mxu0 0.0
    %1100 = vmatpush1.xpose.msra.mxu0 0.0
    %1101 = vmatprep.subr.mxu0 0.0
    %1102 = vmatpush1.xpose.msra.mxu0 0.0
    %1103 = vmatprep.subr.mxu0 0.0
    %1104 = vmatpush1.xpose.msra.mxu0 0.0
    %1105 = vmatprep.subr.mxu0 0.0
    %1106 = vmatpush1.xpose.msra.mxu0 0.0
    %1107 = vmatprep.subr.mxu0 0.0
    %1108 = vmatpush1.xpose.msra.mxu0 %v1075
    %1109 = vmatprep.subr.mxu0 0.0
    %1110 = vmatpush2.xpose.msra.mxu0 0.0
    %1111 = vmatprep.subr.mxu0 0.0
    %1112 = vmatpush2.xpose.msra.mxu0 0.0
    %1113 = vmatprep.subr.mxu0 0.0
    %1114 = vmatpush2.xpose.msra.mxu0 0.0
    %1115 = vmatprep.subr.mxu0 0.0
    %1116 = vmatpush2.xpose.msra.mxu0 0.0
    %1117 = vmatprep.subr.mxu0 0.0
    %1118 = vmatpush2.xpose.msra.mxu0 0.0
    %1119 = vmatprep.subr.mxu0 0.0
    %1120 = vmatpush2.xpose.msra.mxu0 0.0
    %1121 = vmatprep.subr.mxu0 0.0
    %1122 = vmatpush2.xpose.msra.mxu0 0.0
    %1123 = vmatprep.subr.mxu0 0.0
    %1124 = vmatpush2.xpose.msra.mxu0 0.0
    %1125 = vmatprep.subr.mxu0 0.0
    %1126 = vmatpush2.xpose.msra.mxu0 0.0
    %1127 = vmatprep.subr.mxu0 0.0
    %1128 = vmatpush2.xpose.msra.mxu0 0.0
    %1129 = vmatprep.subr.mxu0 0.0
    %1130 = vmatpush2.xpose.msra.mxu0 0.0
    %1131 = vmatprep.subr.mxu0 0.0
    %1132 = vmatpush2.xpose.msra.mxu0 0.0
    %1133 = vmatprep.subr.mxu0 0.0
    %1134 = vmatpush2.xpose.msra.mxu0 0.0
    %1135 = vmatprep.subr.mxu0 0.0
    %1136 = vmatpush2.xpose.msra.mxu0 0.0
    %1137 = vmatprep.subr.mxu0 0.0
    %1138 = vmatpush2.xpose.msra.mxu0 0.0
    %1139 = vmatprep.subr.mxu0 0.0
    %1140 = vmatpush2.xpose.msra.mxu0 0.0
    %1141 = vmatprep.mubr.f32.mxu0 0.0
    %1142 = vmatmul.mubr.f32.gmra.mxu0 %v1073
    %v1143 = vpop.f32.mrf.mxu0
    %v1144 = vadd.f32 0.0, %v1143
    %v1145 = vpop.f32.mrf.mxu0
    %1146 = vdwg.mxu0
    %v1147 = vmul.f32 %v1144, 0.25
    %v1148 = vlaneseq
    %v1149 = vshrl.u32 %v1148, 7
    %v1150 = vsub.s32 1, %v1149
    %v1151 = vrot.slane %v222, %v1150
    %v1152 = vadd.f32 %v1147, %v1151
    %v1153 = vsel %vm466, %v1152, -inf
    %1154 = vmax.xlane.f32.xlu0 %v1153
    %v1155 = vpop.xlane.xlu0 %1154
    %v1156 = vsub.f32 %v1152, %v1155
    %v1157 = vmul.f32 %v1156, 1.442695
    %v1158 = vpow.pop %v1157
    %v1159 = vsel %vm466, %v1158, 0.0
    %1160 = vadd.xlane.f32.xlu0 %v1159
    %v1161 = vpop.xlane.xlu0 %1160
    %v1162 = vrcp.pop %v1161
    %v1163 = vmul.f32 %v1158, %v1162
    %v1165 = vsel %vm466, %v1163, 0
    %1167 = vmatprep.subr.mxu0 0.0
    %1168 = vmatpush1.msra.mxu0 0.0
    %1169 = vmatprep.subr.mxu0 0.0
    %1170 = vmatpush1.msra.mxu0 0.0
    %1171 = vmatprep.subr.mxu0 0.0
    %1172 = vmatpush1.msra.mxu0 0.0
    %1173 = vmatprep.subr.mxu0 0.0
    %1174 = vmatpush1.msra.mxu0 0.0
    %1175 = vmatprep.subr.mxu0 0.0
    %1176 = vmatpush1.msra.mxu0 0.0
    %1177 = vmatprep.subr.mxu0 0.0
    %1178 = vmatpush1.msra.mxu0 0.0
    %1179 = vmatprep.subr.mxu0 0.0
    %1180 = vmatpush1.msra.mxu0 0.0
    %1181 = vmatprep.subr.mxu0 0.0
    %1182 = vmatpush1.msra.mxu0 0.0
    %1183 = vmatprep.subr.mxu0 0.0
    %1184 = vmatpush1.msra.mxu0 0.0
    %1185 = vmatprep.subr.mxu0 0.0
    %1186 = vmatpush1.msra.mxu0 0.0
    %1187 = vmatprep.subr.mxu0 0.0
    %1188 = vmatpush1.msra.mxu0 0.0
    %1189 = vmatprep.subr.mxu0 0.0
    %1190 = vmatpush1.msra.mxu0 0.0
    %1191 = vmatprep.subr.mxu0 0.0
    %1192 = vmatpush1.msra.mxu0 0.0
    %1193 = vmatprep.subr.mxu0 0.0
    %1194 = vmatpush1.msra.mxu0 0.0
    %1195 = vmatprep.subr.mxu0 0.0
    %1196 = vmatpush1.msra.mxu0 0.0
    %1197 = vmatprep.subr.mxu0 0.0
    %1198 = vmatpush1.msra.mxu0 %v380
    %1199 = vmatprep.subr.mxu0 0.0
    %1200 = vmatpush2.msra.mxu0 0.0
    %1201 = vmatprep.subr.mxu0 0.0
    %1202 = vmatpush2.msra.mxu0 0.0
    %1203 = vmatprep.subr.mxu0 0.0
    %1204 = vmatpush2.msra.mxu0 0.0
    %1205 = vmatprep.subr.mxu0 0.0
    %1206 = vmatpush2.msra.mxu0 0.0
    %1207 = vmatprep.subr.mxu0 0.0
    %1208 = vmatpush2.msra.mxu0 0.0
    %1209 = vmatprep.subr.mxu0 0.0
    %1210 = vmatpush2.msra.mxu0 0.0
    %1211 = vmatprep.subr.mxu0 0.0
    %1212 = vmatpush2.msra.mxu0 0.0
    %1213 = vmatprep.subr.mxu0 0.0
    %1214 = vmatpush2.msra.mxu0 0.0
    %1215 = vmatprep.subr.mxu0 0.0
    %1216 = vmatpush2.msra.mxu0 0.0
    %1217 = vmatprep.subr.mxu0 0.0
    %1218 = vmatpush2.msra.mxu0 0.0
    %1219 = vmatprep.subr.mxu0 0.0
    %1220 = vmatpush2.msra.mxu0 0.0
    %1221 = vmatprep.subr.mxu0 0.0
    %1222 = vmatpush2.msra.mxu0 0.0
    %1223 = vmatprep.subr.mxu0 0.0
    %1224 = vmatpush2.msra.mxu0 0.0
    %1225 = vmatprep.subr.mxu0 0.0
    %1226 = vmatpush2.msra.mxu0 0.0
    %1227 = vmatprep.subr.mxu0 0.0
    %1228 = vmatpush2.msra.mxu0 0.0
    %1229 = vmatprep.subr.mxu0 0.0
    %1230 = vmatpush2.msra.mxu0 0.0
    %1231 = vmatprep.mubr.f32.mxu0 0.0
    %1232 = vmatmul.mubr.f32.gmra.mxu0 %v1165
    %v1233 = vpop.f32.mrf.mxu0
    %v1234 = vadd.f32 0.0, %v1233
    %v1235 = vpop.f32.mrf.mxu0
    %1236 = vdwg.mxu0
    %1237 = vrot.lane.b32.xlu0 %v378, 112
    %v1238 = vpop.permute.xlu0 %1237
    %1239 = vrot.lane.b32.xlu0 %v378, 48
    %v1240 = vpop.permute.xlu0 %1239
    %v1241 = vsel %vm385, %v1238, 0
    %v1243 = vsel %vm385, %v1240, 0
    %1245 = vmatprep.subr.mxu0 0.0
    %1246 = vmatpush1.xpose.msra.mxu0 0.0
    %1247 = vmatprep.subr.mxu0 0.0
    %1248 = vmatpush1.xpose.msra.mxu0 0.0
    %1249 = vmatprep.subr.mxu0 0.0
    %1250 = vmatpush1.xpose.msra.mxu0 0.0
    %1251 = vmatprep.subr.mxu0 0.0
    %1252 = vmatpush1.xpose.msra.mxu0 0.0
    %1253 = vmatprep.subr.mxu0 0.0
    %1254 = vmatpush1.xpose.msra.mxu0 0.0
    %1255 = vmatprep.subr.mxu0 0.0
    %1256 = vmatpush1.xpose.msra.mxu0 0.0
    %1257 = vmatprep.subr.mxu0 0.0
    %1258 = vmatpush1.xpose.msra.mxu0 0.0
    %1259 = vmatprep.subr.mxu0 0.0
    %1260 = vmatpush1.xpose.msra.mxu0 0.0
    %1261 = vmatprep.subr.mxu0 0.0
    %1262 = vmatpush1.xpose.msra.mxu0 0.0
    %1263 = vmatprep.subr.mxu0 0.0
    %1264 = vmatpush1.xpose.msra.mxu0 0.0
    %1265 = vmatprep.subr.mxu0 0.0
    %1266 = vmatpush1.xpose.msra.mxu0 0.0
    %1267 = vmatprep.subr.mxu0 0.0
    %1268 = vmatpush1.xpose.msra.mxu0 0.0
    %1269 = vmatprep.subr.mxu0 0.0
    %1270 = vmatpush1.xpose.msra.mxu0 0.0
    %1271 = vmatprep.subr.mxu0 0.0
    %1272 = vmatpush1.xpose.msra.mxu0 0.0
    %1273 = vmatprep.subr.mxu0 0.0
    %1274 = vmatpush1.xpose.msra.mxu0 0.0
    %1275 = vmatprep.subr.mxu0 0.0
    %1276 = vmatpush1.xpose.msra.mxu0 %v1243
    %1277 = vmatprep.subr.mxu0 0.0
    %1278 = vmatpush2.xpose.msra.mxu0 0.0
    %1279 = vmatprep.subr.mxu0 0.0
    %1280 = vmatpush2.xpose.msra.mxu0 0.0
    %1281 = vmatprep.subr.mxu0 0.0
    %1282 = vmatpush2.xpose.msra.mxu0 0.0
    %1283 = vmatprep.subr.mxu0 0.0
    %1284 = vmatpush2.xpose.msra.mxu0 0.0
    %1285 = vmatprep.subr.mxu0 0.0
    %1286 = vmatpush2.xpose.msra.mxu0 0.0
    %1287 = vmatprep.subr.mxu0 0.0
    %1288 = vmatpush2.xpose.msra.mxu0 0.0
    %1289 = vmatprep.subr.mxu0 0.0
    %1290 = vmatpush2.xpose.msra.mxu0 0.0
    %1291 = vmatprep.subr.mxu0 0.0
    %1292 = vmatpush2.xpose.msra.mxu0 0.0
    %1293 = vmatprep.subr.mxu0 0.0
    %1294 = vmatpush2.xpose.msra.mxu0 0.0
    %1295 = vmatprep.subr.mxu0 0.0
    %1296 = vmatpush2.xpose.msra.mxu0 0.0
    %1297 = vmatprep.subr.mxu0 0.0
    %1298 = vmatpush2.xpose.msra.mxu0 0.0
    %1299 = vmatprep.subr.mxu0 0.0
    %1300 = vmatpush2.xpose.msra.mxu0 0.0
    %1301 = vmatprep.subr.mxu0 0.0
    %1302 = vmatpush2.xpose.msra.mxu0 0.0
    %1303 = vmatprep.subr.mxu0 0.0
    %1304 = vmatpush2.xpose.msra.mxu0 0.0
    %1305 = vmatprep.subr.mxu0 0.0
    %1306 = vmatpush2.xpose.msra.mxu0 0.0
    %1307 = vmatprep.subr.mxu0 0.0
    %1308 = vmatpush2.xpose.msra.mxu0 0.0
    %1309 = vmatprep.mubr.f32.mxu0 0.0
    %1310 = vmatmul.mubr.f32.gmra.mxu0 %v1241
    %v1311 = vpop.f32.mrf.mxu0
    %v1312 = vadd.f32 0.0, %v1311
    %v1313 = vpop.f32.mrf.mxu0
    %1314 = vdwg.mxu0
    %v1315 = vmul.f32 %v1312, 0.25
    %v1316 = vadd.f32 %v1315, %v1151
    %v1317 = vsel %vm466, %v1316, -inf
    %1318 = vmax.xlane.f32.xlu0 %v1317
    %v1319 = vpop.xlane.xlu0 %1318
    %v1320 = vsub.f32 %v1316, %v1319
    %v1321 = vmul.f32 %v1320, 1.442695
    %v1322 = vpow.pop %v1321
    %v1323 = vsel %vm466, %v1322, 0.0
    %1324 = vadd.xlane.f32.xlu0 %v1323
    %v1325 = vpop.xlane.xlu0 %1324
    %v1326 = vrcp.pop %v1325
    %v1327 = vmul.f32 %v1322, %v1326
    %1329 = vrot.lane.b32.xlu0 %v380, 112
    %v1330 = vpop.permute.xlu0 %1329
    %v1333 = vsel %vm466, %v1327, 0
    %1335 = vmatprep.subr.mxu0 0.0
    %1336 = vmatpush1.msra.mxu0 0.0
    %1337 = vmatprep.subr.mxu0 0.0
    %1338 = vmatpush1.msra.mxu0 0.0
    %1339 = vmatprep.subr.mxu0 0.0
    %1340 = vmatpush1.msra.mxu0 0.0
    %1341 = vmatprep.subr.mxu0 0.0
    %1342 = vmatpush1.msra.mxu0 0.0
    %1343 = vmatprep.subr.mxu0 0.0
    %1344 = vmatpush1.msra.mxu0 0.0
    %1345 = vmatprep.subr.mxu0 0.0
    %1346 = vmatpush1.msra.mxu0 0.0
    %1347 = vmatprep.subr.mxu0 0.0
    %1348 = vmatpush1.msra.mxu0 0.0
    %1349 = vmatprep.subr.mxu0 0.0
    %1350 = vmatpush1.msra.mxu0 0.0
    %1351 = vmatprep.subr.mxu0 0.0
    %1352 = vmatpush1.msra.mxu0 0.0
    %1353 = vmatprep.subr.mxu0 0.0
    %1354 = vmatpush1.msra.mxu0 0.0
    %1355 = vmatprep.subr.mxu0 0.0
    %1356 = vmatpush1.msra.mxu0 0.0
    %1357 = vmatprep.subr.mxu0 0.0
    %1358 = vmatpush1.msra.mxu0 0.0
    %1359 = vmatprep.subr.mxu0 0.0
    %1360 = vmatpush1.msra.mxu0 0.0
    %1361 = vmatprep.subr.mxu0 0.0
    %1362 = vmatpush1.msra.mxu0 0.0
    %1363 = vmatprep.subr.mxu0 0.0
    %1364 = vmatpush1.msra.mxu0 0.0
    %1365 = vmatprep.subr.mxu0 0.0
    %1366 = vmatpush1.msra.mxu0 %v1330
    %1367 = vmatprep.subr.mxu0 0.0
    %1368 = vmatpush2.msra.mxu0 0.0
    %1369 = vmatprep.subr.mxu0 0.0
    %1370 = vmatpush2.msra.mxu0 0.0
    %1371 = vmatprep.subr.mxu0 0.0
    %1372 = vmatpush2.msra.mxu0 0.0
    %1373 = vmatprep.subr.mxu0 0.0
    %1374 = vmatpush2.msra.mxu0 0.0
    %1375 = vmatprep.subr.mxu0 0.0
    %1376 = vmatpush2.msra.mxu0 0.0
    %1377 = vmatprep.subr.mxu0 0.0
    %1378 = vmatpush2.msra.mxu0 0.0
    %1379 = vmatprep.subr.mxu0 0.0
    %1380 = vmatpush2.msra.mxu0 0.0
    %1381 = vmatprep.subr.mxu0 0.0
    %1382 = vmatpush2.msra.mxu0 0.0
    %1383 = vmatprep.subr.mxu0 0.0
    %1384 = vmatpush2.msra.mxu0 0.0
    %1385 = vmatprep.subr.mxu0 0.0
    %1386 = vmatpush2.msra.mxu0 0.0
    %1387 = vmatprep.subr.mxu0 0.0
    %1388 = vmatpush2.msra.mxu0 0.0
    %1389 = vmatprep.subr.mxu0 0.0
    %1390 = vmatpush2.msra.mxu0 0.0
    %1391 = vmatprep.subr.mxu0 0.0
    %1392 = vmatpush2.msra.mxu0 0.0
    %1393 = vmatprep.subr.mxu0 0.0
    %1394 = vmatpush2.msra.mxu0 0.0
    %1395 = vmatprep.subr.mxu0 0.0
    %1396 = vmatpush2.msra.mxu0 0.0
    %1397 = vmatprep.subr.mxu0 0.0
    %1398 = vmatpush2.msra.mxu0 0.0
    %1399 = vmatprep.mubr.f32.mxu0 0.0
    %1400 = vmatmul.mubr.f32.gmra.mxu0 %v1333
    %v1401 = vpop.f32.mrf.mxu0
    %v1402 = vadd.f32 0.0, %v1401
    %v1403 = vpop.f32.mrf.mxu0
    %1404 = vdwg.mxu0
    %1405 = vrot.lane.b32.xlu0 %v378, 96
    %v1406 = vpop.permute.xlu0 %1405
    %1407 = vrot.lane.b32.xlu0 %v378, 32
    %v1408 = vpop.permute.xlu0 %1407
    %v1409 = vsel %vm385, %v1406, 0
    %v1411 = vsel %vm385, %v1408, 0
    %1413 = vmatprep.subr.mxu0 0.0
    %1414 = vmatpush1.xpose.msra.mxu0 0.0
    %1415 = vmatprep.subr.mxu0 0.0
    %1416 = vmatpush1.xpose.msra.mxu0 0.0
    %1417 = vmatprep.subr.mxu0 0.0
    %1418 = vmatpush1.xpose.msra.mxu0 0.0
    %1419 = vmatprep.subr.mxu0 0.0
    %1420 = vmatpush1.xpose.msra.mxu0 0.0
    %1421 = vmatprep.subr.mxu0 0.0
    %1422 = vmatpush1.xpose.msra.mxu0 0.0
    %1423 = vmatprep.subr.mxu0 0.0
    %1424 = vmatpush1.xpose.msra.mxu0 0.0
    %1425 = vmatprep.subr.mxu0 0.0
    %1426 = vmatpush1.xpose.msra.mxu0 0.0
    %1427 = vmatprep.subr.mxu0 0.0
    %1428 = vmatpush1.xpose.msra.mxu0 0.0
    %1429 = vmatprep.subr.mxu0 0.0
    %1430 = vmatpush1.xpose.msra.mxu0 0.0
    %1431 = vmatprep.subr.mxu0 0.0
    %1432 = vmatpush1.xpose.msra.mxu0 0.0
    %1433 = vmatprep.subr.mxu0 0.0
    %1434 = vmatpush1.xpose.msra.mxu0 0.0
    %1435 = vmatprep.subr.mxu0 0.0
    %1436 = vmatpush1.xpose.msra.mxu0 0.0
    %1437 = vmatprep.subr.mxu0 0.0
    %1438 = vmatpush1.xpose.msra.mxu0 0.0
    %1439 = vmatprep.subr.mxu0 0.0
    %1440 = vmatpush1.xpose.msra.mxu0 0.0
    %1441 = vmatprep.subr.mxu0 0.0
    %1442 = vmatpush1.xpose.msra.mxu0 0.0
    %1443 = vmatprep.subr.mxu0 0.0
    %1444 = vmatpush1.xpose.msra.mxu0 %v1411
    %1445 = vmatprep.subr.mxu0 0.0
    %1446 = vmatpush2.xpose.msra.mxu0 0.0
    %1447 = vmatprep.subr.mxu0 0.0
    %1448 = vmatpush2.xpose.msra.mxu0 0.0
    %1449 = vmatprep.subr.mxu0 0.0
    %1450 = vmatpush2.xpose.msra.mxu0 0.0
    %1451 = vmatprep.subr.mxu0 0.0
    %1452 = vmatpush2.xpose.msra.mxu0 0.0
    %1453 = vmatprep.subr.mxu0 0.0
    %1454 = vmatpush2.xpose.msra.mxu0 0.0
    %1455 = vmatprep.subr.mxu0 0.0
    %1456 = vmatpush2.xpose.msra.mxu0 0.0
    %1457 = vmatprep.subr.mxu0 0.0
    %1458 = vmatpush2.xpose.msra.mxu0 0.0
    %1459 = vmatprep.subr.mxu0 0.0
    %1460 = vmatpush2.xpose.msra.mxu0 0.0
    %1461 = vmatprep.subr.mxu0 0.0
    %1462 = vmatpush2.xpose.msra.mxu0 0.0
    %1463 = vmatprep.subr.mxu0 0.0
    %1464 = vmatpush2.xpose.msra.mxu0 0.0
    %1465 = vmatprep.subr.mxu0 0.0
    %1466 = vmatpush2.xpose.msra.mxu0 0.0
    %1467 = vmatprep.subr.mxu0 0.0
    %1468 = vmatpush2.xpose.msra.mxu0 0.0
    %1469 = vmatprep.subr.mxu0 0.0
    %1470 = vmatpush2.xpose.msra.mxu0 0.0
    %1471 = vmatprep.subr.mxu0 0.0
    %1472 = vmatpush2.xpose.msra.mxu0 0.0
    %1473 = vmatprep.subr.mxu0 0.0
    %1474 = vmatpush2.xpose.msra.mxu0 0.0
    %1475 = vmatprep.subr.mxu0 0.0
    %1476 = vmatpush2.xpose.msra.mxu0 0.0
    %1477 = vmatprep.mubr.f32.mxu0 0.0
    %1478 = vmatmul.mubr.f32.gmra.mxu0 %v1409
    %v1479 = vpop.f32.mrf.mxu0
    %v1480 = vadd.f32 0.0, %v1479
    %v1481 = vpop.f32.mrf.mxu0
    %1482 = vdwg.mxu0
    %v1483 = vmul.f32 %v1480, 0.25
    %v1484 = vadd.f32 %v1483, %v1151
    %v1485 = vsel %vm466, %v1484, -inf
    %1486 = vmax.xlane.f32.xlu0 %v1485
    %v1487 = vpop.xlane.xlu0 %1486
    %v1488 = vsub.f32 %v1484, %v1487
    %v1489 = vmul.f32 %v1488, 1.442695
    %v1490 = vpow.pop %v1489
    %v1491 = vsel %vm466, %v1490, 0.0
    %1492 = vadd.xlane.f32.xlu0 %v1491
    %v1493 = vpop.xlane.xlu0 %1492
    %v1494 = vrcp.pop %v1493
    %v1495 = vmul.f32 %v1490, %v1494
    %1496 = vrot.lane.b32.xlu0 %v380, 96
    %v1497 = vpop.permute.xlu0 %1496
    %v1500 = vsel %vm466, %v1495, 0
    %1502 = vmatprep.subr.mxu0 0.0
    %1503 = vmatpush1.msra.mxu0 0.0
    %1504 = vmatprep.subr.mxu0 0.0
    %1505 = vmatpush1.msra.mxu0 0.0
    %1506 = vmatprep.subr.mxu0 0.0
    %1507 = vmatpush1.msra.mxu0 0.0
    %1508 = vmatprep.subr.mxu0 0.0
    %1509 = vmatpush1.msra.mxu0 0.0
    %1510 = vmatprep.subr.mxu0 0.0
    %1511 = vmatpush1.msra.mxu0 0.0
    %1512 = vmatprep.subr.mxu0 0.0
    %1513 = vmatpush1.msra.mxu0 0.0
    %1514 = vmatprep.subr.mxu0 0.0
    %1515 = vmatpush1.msra.mxu0 0.0
    %1516 = vmatprep.subr.mxu0 0.0
    %1517 = vmatpush1.msra.mxu0 0.0
    %1518 = vmatprep.subr.mxu0 0.0
    %1519 = vmatpush1.msra.mxu0 0.0
    %1520 = vmatprep.subr.mxu0 0.0
    %1521 = vmatpush1.msra.mxu0 0.0
    %1522 = vmatprep.subr.mxu0 0.0
    %1523 = vmatpush1.msra.mxu0 0.0
    %1524 = vmatprep.subr.mxu0 0.0
    %1525 = vmatpush1.msra.mxu0 0.0
    %1526 = vmatprep.subr.mxu0 0.0
    %1527 = vmatpush1.msra.mxu0 0.0
    %1528 = vmatprep.subr.mxu0 0.0
    %1529 = vmatpush1.msra.mxu0 0.0
    %1530 = vmatprep.subr.mxu0 0.0
    %1531 = vmatpush1.msra.mxu0 0.0
    %1532 = vmatprep.subr.mxu0 0.0
    %1533 = vmatpush1.msra.mxu0 %v1497
    %1534 = vmatprep.subr.mxu0 0.0
    %1535 = vmatpush2.msra.mxu0 0.0
    %1536 = vmatprep.subr.mxu0 0.0
    %1537 = vmatpush2.msra.mxu0 0.0
    %1538 = vmatprep.subr.mxu0 0.0
    %1539 = vmatpush2.msra.mxu0 0.0
    %1540 = vmatprep.subr.mxu0 0.0
    %1541 = vmatpush2.msra.mxu0 0.0
    %1542 = vmatprep.subr.mxu0 0.0
    %1543 = vmatpush2.msra.mxu0 0.0
    %1544 = vmatprep.subr.mxu0 0.0
    %1545 = vmatpush2.msra.mxu0 0.0
    %1546 = vmatprep.subr.mxu0 0.0
    %1547 = vmatpush2.msra.mxu0 0.0
    %1548 = vmatprep.subr.mxu0 0.0
    %1549 = vmatpush2.msra.mxu0 0.0
    %1550 = vmatprep.subr.mxu0 0.0
    %1551 = vmatpush2.msra.mxu0 0.0
    %1552 = vmatprep.subr.mxu0 0.0
    %1553 = vmatpush2.msra.mxu0 0.0
    %1554 = vmatprep.subr.mxu0 0.0
    %1555 = vmatpush2.msra.mxu0 0.0
    %1556 = vmatprep.subr.mxu0 0.0
    %1557 = vmatpush2.msra.mxu0 0.0
    %1558 = vmatprep.subr.mxu0 0.0
    %1559 = vmatpush2.msra.mxu0 0.0
    %1560 = vmatprep.subr.mxu0 0.0
    %1561 = vmatpush2.msra.mxu0 0.0
    %1562 = vmatprep.subr.mxu0 0.0
    %1563 = vmatpush2.msra.mxu0 0.0
    %1564 = vmatprep.subr.mxu0 0.0
    %1565 = vmatpush2.msra.mxu0 0.0
    %1566 = vmatprep.mubr.f32.mxu0 0.0
    %1567 = vmatmul.mubr.f32.gmra.mxu0 %v1500
    %v1568 = vpop.f32.mrf.mxu0
    %v1569 = vadd.f32 0.0, %v1568
    %v1570 = vpop.f32.mrf.mxu0
    %1571 = vdwg.mxu0
    %1572 = vrot.lane.b32.xlu0 %v378, 80
    %v1573 = vpop.permute.xlu0 %1572
    %1574 = vrot.lane.b32.xlu0 %v378, 16
    %v1575 = vpop.permute.xlu0 %1574
    %v1576 = vsel %vm385, %v1573, 0
    %v1578 = vsel %vm385, %v1575, 0
    %1580 = vmatprep.subr.mxu0 0.0
    %1581 = vmatpush1.xpose.msra.mxu0 0.0
    %1582 = vmatprep.subr.mxu0 0.0
    %1583 = vmatpush1.xpose.msra.mxu0 0.0
    %1584 = vmatprep.subr.mxu0 0.0
    %1585 = vmatpush1.xpose.msra.mxu0 0.0
    %1586 = vmatprep.subr.mxu0 0.0
    %1587 = vmatpush1.xpose.msra.mxu0 0.0
    %1588 = vmatprep.subr.mxu0 0.0
    %1589 = vmatpush1.xpose.msra.mxu0 0.0
    %1590 = vmatprep.subr.mxu0 0.0
    %1591 = vmatpush1.xpose.msra.mxu0 0.0
    %1592 = vmatprep.subr.mxu0 0.0
    %1593 = vmatpush1.xpose.msra.mxu0 0.0
    %1594 = vmatprep.subr.mxu0 0.0
    %1595 = vmatpush1.xpose.msra.mxu0 0.0
    %1596 = vmatprep.subr.mxu0 0.0
    %1597 = vmatpush1.xpose.msra.mxu0 0.0
    %1598 = vmatprep.subr.mxu0 0.0
    %1599 = vmatpush1.xpose.msra.mxu0 0.0
    %1600 = vmatprep.subr.mxu0 0.0
    %1601 = vmatpush1.xpose.msra.mxu0 0.0
    %1602 = vmatprep.subr.mxu0 0.0
    %1603 = vmatpush1.xpose.msra.mxu0 0.0
    %1604 = vmatprep.subr.mxu0 0.0
    %1605 = vmatpush1.xpose.msra.mxu0 0.0
    %1606 = vmatprep.subr.mxu0 0.0
    %1607 = vmatpush1.xpose.msra.mxu0 0.0
    %1608 = vmatprep.subr.mxu0 0.0
    %1609 = vmatpush1.xpose.msra.mxu0 0.0
    %1610 = vmatprep.subr.mxu0 0.0
    %1611 = vmatpush1.xpose.msra.mxu0 %v1578
    %1612 = vmatprep.subr.mxu0 0.0
    %1613 = vmatpush2.xpose.msra.mxu0 0.0
    %1614 = vmatprep.subr.mxu0 0.0
    %1615 = vmatpush2.xpose.msra.mxu0 0.0
    %1616 = vmatprep.subr.mxu0 0.0
    %1617 = vmatpush2.xpose.msra.mxu0 0.0
    %1618 = vmatprep.subr.mxu0 0.0
    %1619 = vmatpush2.xpose.msra.mxu0 0.0
    %1620 = vmatprep.subr.mxu0 0.0
    %1621 = vmatpush2.xpose.msra.mxu0 0.0
    %1622 = vmatprep.subr.mxu0 0.0
    %1623 = vmatpush2.xpose.msra.mxu0 0.0
    %1624 = vmatprep.subr.mxu0 0.0
    %1625 = vmatpush2.xpose.msra.mxu0 0.0
    %1626 = vmatprep.subr.mxu0 0.0
    %1627 = vmatpush2.xpose.msra.mxu0 0.0
    %1628 = vmatprep.subr.mxu0 0.0
    %1629 = vmatpush2.xpose.msra.mxu0 0.0
    %1630 = vmatprep.subr.mxu0 0.0
    %1631 = vmatpush2.xpose.msra.mxu0 0.0
    %1632 = vmatprep.subr.mxu0 0.0
    %1633 = vmatpush2.xpose.msra.mxu0 0.0
    %1634 = vmatprep.subr.mxu0 0.0
    %1635 = vmatpush2.xpose.msra.mxu0 0.0
    %1636 = vmatprep.subr.mxu0 0.0
    %1637 = vmatpush2.xpose.msra.mxu0 0.0
    %1638 = vmatprep.subr.mxu0 0.0
    %1639 = vmatpush2.xpose.msra.mxu0 0.0
    %1640 = vmatprep.subr.mxu0 0.0
    %1641 = vmatpush2.xpose.msra.mxu0 0.0
    %1642 = vmatprep.subr.mxu0 0.0
    %1643 = vmatpush2.xpose.msra.mxu0 0.0
    %1644 = vmatprep.mubr.f32.mxu0 0.0
    %1645 = vmatmul.mubr.f32.gmra.mxu0 %v1576
    %v1646 = vpop.f32.mrf.mxu0
    %v1647 = vadd.f32 0.0, %v1646
    %v1648 = vpop.f32.mrf.mxu0
    %1649 = vdwg.mxu0
    %v1650 = vmul.f32 %v1647, 0.25
    %v1651 = vadd.f32 %v1650, %v1151
    %v1652 = vsel %vm466, %v1651, -inf
    %1653 = vmax.xlane.f32.xlu0 %v1652
    %v1654 = vpop.xlane.xlu0 %1653
    %v1655 = vsub.f32 %v1651, %v1654
    %v1656 = vmul.f32 %v1655, 1.442695
    %v1657 = vpow.pop %v1656
    %v1658 = vsel %vm466, %v1657, 0.0
    %1659 = vadd.xlane.f32.xlu0 %v1658
    %v1660 = vpop.xlane.xlu0 %1659
    %v1661 = vrcp.pop %v1660
    %v1662 = vmul.f32 %v1657, %v1661
    %1663 = vrot.lane.b32.xlu0 %v380, 80
    %v1664 = vpop.permute.xlu0 %1663
    %v1667 = vsel %vm466, %v1662, 0
    %1669 = vmatprep.subr.mxu0 0.0
    %1670 = vmatpush1.msra.mxu0 0.0
    %1671 = vmatprep.subr.mxu0 0.0
    %1672 = vmatpush1.msra.mxu0 0.0
    %1673 = vmatprep.subr.mxu0 0.0
    %1674 = vmatpush1.msra.mxu0 0.0
    %1675 = vmatprep.subr.mxu0 0.0
    %1676 = vmatpush1.msra.mxu0 0.0
    %1677 = vmatprep.subr.mxu0 0.0
    %1678 = vmatpush1.msra.mxu0 0.0
    %1679 = vmatprep.subr.mxu0 0.0
    %1680 = vmatpush1.msra.mxu0 0.0
    %1681 = vmatprep.subr.mxu0 0.0
    %1682 = vmatpush1.msra.mxu0 0.0
    %1683 = vmatprep.subr.mxu0 0.0
    %1684 = vmatpush1.msra.mxu0 0.0
    %1685 = vmatprep.subr.mxu0 0.0
    %1686 = vmatpush1.msra.mxu0 0.0
    %1687 = vmatprep.subr.mxu0 0.0
    %1688 = vmatpush1.msra.mxu0 0.0
    %1689 = vmatprep.subr.mxu0 0.0
    %1690 = vmatpush1.msra.mxu0 0.0
    %1691 = vmatprep.subr.mxu0 0.0
    %1692 = vmatpush1.msra.mxu0 0.0
    %1693 = vmatprep.subr.mxu0 0.0
    %1694 = vmatpush1.msra.mxu0 0.0
    %1695 = vmatprep.subr.mxu0 0.0
    %1696 = vmatpush1.msra.mxu0 0.0
    %1697 = vmatprep.subr.mxu0 0.0
    %1698 = vmatpush1.msra.mxu0 0.0
    %1699 = vmatprep.subr.mxu0 0.0
    %1700 = vmatpush1.msra.mxu0 %v1664
    %1701 = vmatprep.subr.mxu0 0.0
    %1702 = vmatpush2.msra.mxu0 0.0
    %1703 = vmatprep.subr.mxu0 0.0
    %1704 = vmatpush2.msra.mxu0 0.0
    %1705 = vmatprep.subr.mxu0 0.0
    %1706 = vmatpush2.msra.mxu0 0.0
    %1707 = vmatprep.subr.mxu0 0.0
    %1708 = vmatpush2.msra.mxu0 0.0
    %1709 = vmatprep.subr.mxu0 0.0
    %1710 = vmatpush2.msra.mxu0 0.0
    %1711 = vmatprep.subr.mxu0 0.0
    %1712 = vmatpush2.msra.mxu0 0.0
    %1713 = vmatprep.subr.mxu0 0.0
    %1714 = vmatpush2.msra.mxu0 0.0
    %1715 = vmatprep.subr.mxu0 0.0
    %1716 = vmatpush2.msra.mxu0 0.0
    %1717 = vmatprep.subr.mxu0 0.0
    %1718 = vmatpush2.msra.mxu0 0.0
    %1719 = vmatprep.subr.mxu0 0.0
    %1720 = vmatpush2.msra.mxu0 0.0
    %1721 = vmatprep.subr.mxu0 0.0
    %1722 = vmatpush2.msra.mxu0 0.0
    %1723 = vmatprep.subr.mxu0 0.0
    %1724 = vmatpush2.msra.mxu0 0.0
    %1725 = vmatprep.subr.mxu0 0.0
    %1726 = vmatpush2.msra.mxu0 0.0
    %1727 = vmatprep.subr.mxu0 0.0
    %1728 = vmatpush2.msra.mxu0 0.0
    %1729 = vmatprep.subr.mxu0 0.0
    %1730 = vmatpush2.msra.mxu0 0.0
    %1731 = vmatprep.subr.mxu0 0.0
    %1732 = vmatpush2.msra.mxu0 0.0
    %1733 = vmatprep.mubr.f32.mxu0 0.0
    %1734 = vmatmul.mubr.f32.gmra.mxu0 %v1667
    %v1735 = vpop.f32.mrf.mxu0
    %v1736 = vadd.f32 0.0, %v1735
    %v1737 = vpop.f32.mrf.mxu0
    %1738 = vdwg.mxu0
    %1740 = vrot.lane.b32.xlu0 %v1402, 16
    %v1741 = vpop.permute.xlu0 %1740
    %1744 = vrot.lane.b32.xlu0 %v1569, 32
    %v1745 = vpop.permute.xlu0 %1744
    %1748 = vrot.lane.b32.xlu0 %v1736, 48
    %v1749 = vpop.permute.xlu0 %1748
    %v1751 = vsel %vm385, %v1234, %v1741
    %v1752 = vsel %vm1066, %v1751, %v1745
    %v1753 = vsel %vm1068, %v1752, %v1749
    %v1754 = vld [vmem:[%s13] sm:$0xff]
    %v1755 = vld [vmem:[%s13 + $0x8] sm:$0xff]
    %v1756 = vld [vmem:[%s13 + $0x10] sm:$0xff]
    %v1757 = vld [vmem:[%s13 + $0x18] sm:$0xff]
    %v1758 = vld [vmem:[%s13 + $0x20] sm:$0xff]
    %v1759 = vld [vmem:[%s13 + $0x28] sm:$0xff]
    %v1760 = vld [vmem:[%s13 + $0x30] sm:$0xff]
    %v1761 = vld [vmem:[%s13 + $0x38] sm:$0xff]
    %v1762 = vld [vmem:[%s15] sm:$0x1]
    %v1764 = vlaneseq
    %v1765 = vshrl.u32 %v1764, 7
    %v1766 = vsub.s32 0, %v1765
    %v1767 = vrot.slane %v1762, %v1766
    %v1770 = vsel %vm227, %v1069, 0
    %v1773 = vsel %vm227, %v1753, 0
    %1775 = vmatprep.subr.mxu0 0.0
    %1776 = vmatpush1.msra.mxu0 0.0
    %1777 = vmatprep.subr.mxu0 0.0
    %1778 = vmatpush1.msra.mxu0 0.0
    %1779 = vmatprep.subr.mxu0 0.0
    %1780 = vmatpush1.msra.mxu0 0.0
    %1781 = vmatprep.subr.mxu0 0.0
    %1782 = vmatpush1.msra.mxu0 0.0
    %1783 = vmatprep.subr.mxu0 0.0
    %1784 = vmatpush1.msra.mxu0 0.0
    %1785 = vmatprep.subr.mxu0 0.0
    %1786 = vmatpush1.msra.mxu0 0.0
    %1787 = vmatprep.subr.mxu0 0.0
    %1788 = vmatpush1.msra.mxu0 0.0
    %1789 = vmatprep.subr.mxu0 0.0
    %1790 = vmatpush1.msra.mxu0 0.0
    %1791 = vmatprep.subr.mxu0 0.0
    %1792 = vmatpush1.msra.mxu0 %v1761
    %1793 = vmatprep.subr.mxu0 0.0
    %1794 = vmatpush1.msra.mxu0 %v1760
    %1795 = vmatprep.subr.mxu0 0.0
    %1796 = vmatpush1.msra.mxu0 %v1759
    %1797 = vmatprep.subr.mxu0 0.0
    %1798 = vmatpush1.msra.mxu0 %v1758
    %1799 = vmatprep.subr.mxu0 0.0
    %1800 = vmatpush1.msra.mxu0 %v1757
    %1801 = vmatprep.subr.mxu0 0.0
    %1802 = vmatpush1.msra.mxu0 %v1756
    %1803 = vmatprep.subr.mxu0 0.0
    %1804 = vmatpush1.msra.mxu0 %v1755
    %1805 = vmatprep.subr.mxu0 0.0
    %1806 = vmatpush1.msra.mxu0 %v1754
    %1807 = vmatprep.subr.mxu0 0.0
    %1808 = vmatpush2.msra.mxu0 0.0
    %1809 = vmatprep.subr.mxu0 0.0
    %1810 = vmatpush2.msra.mxu0 0.0
    %1811 = vmatprep.subr.mxu0 0.0
    %1812 = vmatpush2.msra.mxu0 0.0
    %1813 = vmatprep.subr.mxu0 0.0
    %1814 = vmatpush2.msra.mxu0 0.0
    %1815 = vmatprep.subr.mxu0 0.0
    %1816 = vmatpush2.msra.mxu0 0.0
    %1817 = vmatprep.subr.mxu0 0.0
    %1818 = vmatpush2.msra.mxu0 0.0
    %1819 = vmatprep.subr.mxu0 0.0
    %1820 = vmatpush2.msra.mxu0 0.0
    %1821 = vmatprep.subr.mxu0 0.0
    %1822 = vmatpush2.msra.mxu0 0.0
    %1823 = vmatprep.subr.mxu0 0.0
    %1824 = vmatpush2.msra.mxu0 0.0
    %1825 = vmatprep.subr.mxu0 0.0
    %1826 = vmatpush2.msra.mxu0 0.0
    %1827 = vmatprep.subr.mxu0 0.0
    %1828 = vmatpush2.msra.mxu0 0.0
    %1829 = vmatprep.subr.mxu0 0.0
    %1830 = vmatpush2.msra.mxu0 0.0
    %1831 = vmatprep.subr.mxu0 0.0
    %1832 = vmatpush2.msra.mxu0 0.0
    %1833 = vmatprep.subr.mxu0 0.0
    %1834 = vmatpush2.msra.mxu0 0.0
    %1835 = vmatprep.subr.mxu0 0.0
    %1836 = vmatpush2.msra.mxu0 0.0
    %1837 = vmatprep.subr.mxu0 0.0
    %1838 = vmatpush2.msra.mxu0 0.0
    %1839 = vmatprep.mubr.f32.mxu0 0.0
    %1840 = vmatmul.mubr.f32.gmra.mxu0 %v1770
    %v1841 = vpop.f32.mrf.mxu0
    %v1842 = vadd.f32 %v1767, %v1841
    %v1843 = vpop.f32.mrf.mxu0
    %1844 = vmatprep.mubr.f32.mxu0 0.0
    %1845 = vmatmul.mubr.f32.gmra.mxu0 %v1773
    %v1846 = vpop.f32.mrf.mxu0
    %v1847 = vadd.f32 %v1767, %v1846
    %v1848 = vpop.f32.mrf.mxu0
    %1849 = vdwg.mxu0
    %v1850 = vadd.f32 %v1842, %v269
    %v1851 = vadd.f32 %v1847, %v270
    %v1852 = vld [vmem:[%s17] sm:$0x1]
    %v1853 = vld [vmem:[%s19] sm:$0x1]
    %v1854 = vsel %vm227, %v1850, 0.0
    %1855 = vadd.xlane.f32.xlu0 %v1854
    %v1856 = vpop.xlane.xlu0 %1855
    %v1857 = vsel %vm227, %v1851, 0.0
    %1858 = vadd.xlane.f32.xlu0 %v1857
    %v1859 = vpop.xlane.xlu0 %1858
    %v1860 = vmul.f32 %v1856, %v234
    %v1861 = vmul.f32 %v1859, %v234
    %v1862 = vsub.f32 %v1850, %v1860
    %v1863 = vsub.f32 %v1851, %v1861
    %v1864 = vmul.f32 %v1862, %v1862
    %v1865 = vmul.f32 %v1863, %v1863
    %v1866 = vsel %vm227, %v1864, 0.0
    %1867 = vadd.xlane.f32.xlu0 %v1866
    %v1868 = vpop.xlane.xlu0 %1867
    %v1869 = vsel %vm227, %v1865, 0.0
    %1870 = vadd.xlane.f32.xlu0 %v1869
    %v1871 = vpop.xlane.xlu0 %1870
    %v1872 = vmul.f32 %v1868, %v234
    %v1873 = vmul.f32 %v1871, %v234
    %v1874 = vadd.f32 %v1872, 1e-12
    %v1875 = vadd.f32 %v1873, 1e-12
    %v1876 = vrsqrt.pop %v1874
    %v1877 = vrsqrt.pop %v1875
    %v1878 = vmul.f32 %v1862, %v1876
    %v1879 = vmul.f32 %v1863, %v1877
    %v1881 = vlaneseq
    %v1882 = vshrl.u32 %v1881, 7
    %v1883 = vsub.s32 0, %v1882
    %v1884 = vrot.slane %v1852, %v1883
    %v1886 = vmul.f32 %v1878, %v1884
    %v1887 = vmul.f32 %v1879, %v1884
    %v1889 = vlaneseq
    %v1890 = vshrl.u32 %v1889, 7
    %v1891 = vsub.s32 0, %v1890
    %v1892 = vrot.slane %v1853, %v1891
    %v1894 = vadd.f32 %v1886, %v1892
    %v1895 = vadd.f32 %v1887, %v1892
    %v1896 = vld [vmem:[#allocation2] sm:$0xff]
    %v1897 = vld [vmem:[#allocation2 + $0x8] sm:$0xff]
    %v1898 = vld [vmem:[#allocation2 + $0x10] sm:$0xff]
    %v1899 = vld [vmem:[#allocation2 + $0x18] sm:$0xff]
    %v1900 = vld [vmem:[#allocation2 + $0x20] sm:$0xff]
    %v1901 = vld [vmem:[#allocation2 + $0x28] sm:$0xff]
    %v1902 = vld [vmem:[#allocation2 + $0x30] sm:$0xff]
    %v1903 = vld [vmem:[#allocation2 + $0x38] sm:$0xff]
    %v1904 = vld [vmem:[%s23] sm:$0x1]
    %v1906 = vlaneseq
    %v1907 = vshrl.u32 %v1906, 7
    %v1908 = vsub.s32 0, %v1907
    %v1909 = vrot.slane %v1904, %v1908
    %v1912 = vsel %vm227, %v1894, 0
    %v1915 = vsel %vm227, %v1895, 0
    %1917 = vmatprep.subr.mxu0 0.0
    %1918 = vmatpush1.msra.mxu0 0.0
    %1919 = vmatprep.subr.mxu0 0.0
    %1920 = vmatpush1.msra.mxu0 0.0
    %1921 = vmatprep.subr.mxu0 0.0
    %1922 = vmatpush1.msra.mxu0 0.0
    %1923 = vmatprep.subr.mxu0 0.0
    %1924 = vmatpush1.msra.mxu0 0.0
    %1925 = vmatprep.subr.mxu0 0.0
    %1926 = vmatpush1.msra.mxu0 0.0
    %1927 = vmatprep.subr.mxu0 0.0
    %1928 = vmatpush1.msra.mxu0 0.0
    %1929 = vmatprep.subr.mxu0 0.0
    %1930 = vmatpush1.msra.mxu0 0.0
    %1931 = vmatprep.subr.mxu0 0.0
    %1932 = vmatpush1.msra.mxu0 0.0
    %1933 = vmatprep.subr.mxu0 0.0
    %1934 = vmatpush1.msra.mxu0 %v1903
    %1935 = vmatprep.subr.mxu0 0.0
    %1936 = vmatpush1.msra.mxu0 %v1902
    %1937 = vmatprep.subr.mxu0 0.0
    %1938 = vmatpush1.msra.mxu0 %v1901
    %1939 = vmatprep.subr.mxu0 0.0
    %1940 = vmatpush1.msra.mxu0 %v1900
    %1941 = vmatprep.subr.mxu0 0.0
    %1942 = vmatpush1.msra.mxu0 %v1899
    %1943 = vmatprep.subr.mxu0 0.0
    %1944 = vmatpush1.msra.mxu0 %v1898
    %1945 = vmatprep.subr.mxu0 0.0
    %1946 = vmatpush1.msra.mxu0 %v1897
    %1947 = vmatprep.subr.mxu0 0.0
    %1948 = vmatpush1.msra.mxu0 %v1896
    %1949 = vmatprep.subr.mxu0 0.0
    %1950 = vmatpush2.msra.mxu0 0.0
    %1951 = vmatprep.subr.mxu0 0.0
    %1952 = vmatpush2.msra.mxu0 0.0
    %1953 = vmatprep.subr.mxu0 0.0
    %1954 = vmatpush2.msra.mxu0 0.0
    %1955 = vmatprep.subr.mxu0 0.0
    %1956 = vmatpush2.msra.mxu0 0.0
    %1957 = vmatprep.subr.mxu0 0.0
    %1958 = vmatpush2.msra.mxu0 0.0
    %1959 = vmatprep.subr.mxu0 0.0
    %1960 = vmatpush2.msra.mxu0 0.0
    %1961 = vmatprep.subr.mxu0 0.0
    %1962 = vmatpush2.msra.mxu0 0.0
    %1963 = vmatprep.subr.mxu0 0.0
    %1964 = vmatpush2.msra.mxu0 0.0
    %1965 = vmatprep.subr.mxu0 0.0
    %1966 = vmatpush2.msra.mxu0 0.0
    %1967 = vmatprep.subr.mxu0 0.0
    %1968 = vmatpush2.msra.mxu0 0.0
    %1969 = vmatprep.subr.mxu0 0.0
    %1970 = vmatpush2.msra.mxu0 0.0
    %1971 = vmatprep.subr.mxu0 0.0
    %1972 = vmatpush2.msra.mxu0 0.0
    %1973 = vmatprep.subr.mxu0 0.0
    %1974 = vmatpush2.msra.mxu0 0.0
    %1975 = vmatprep.subr.mxu0 0.0
    %1976 = vmatpush2.msra.mxu0 0.0
    %1977 = vmatprep.subr.mxu0 0.0
    %1978 = vmatpush2.msra.mxu0 0.0
    %1979 = vmatprep.subr.mxu0 0.0
    %1980 = vmatpush2.msra.mxu0 0.0
    %1981 = vmatprep.mubr.f32.mxu0 0.0
    %1982 = vmatmul.mubr.f32.gmra.mxu0 %v1912
    %v1983 = vpop.f32.mrf.mxu0
    %v1984 = vadd.f32 %v1909, %v1983
    %v1985 = vpop.f32.mrf.mxu0
    %1986 = vmatprep.mubr.f32.mxu0 0.0
    %1987 = vmatmul.mubr.f32.gmra.mxu0 %v1915
    %v1988 = vpop.f32.mrf.mxu0
    %v1989 = vadd.f32 %v1909, %v1988
    %v1990 = vpop.f32.mrf.mxu0
    %1991 = vdwg.mxu0
    %v1992 = vmul.f32 %v1984, %v1984
    %v1993 = vmul.f32 %v1989, %v1989
    %v1994 = vmul.f32 %v1984, %v1992
    %v1995 = vmul.f32 %v1989, %v1993
    %v1996 = vmul.f32 %v1994, 0.044715
    %v1997 = vmul.f32 %v1995, 0.044715
    %v1998 = vadd.f32 %v1984, %v1996
    %v1999 = vadd.f32 %v1989, %v1997
    %v2000 = vmul.f32 %v1998, 0.7978846
    %v2001 = vmul.f32 %v1999, 0.7978846
    %v2002 = vtanh.pop %v2000
    %v2003 = vtanh.pop %v2001
    %v2004 = vadd.f32 %v2002, 1.0
    %v2005 = vadd.f32 %v2003, 1.0
    %v2006 = vmul.f32 %v2004, 0.5
    %v2007 = vmul.f32 %v2005, 0.5
    %v2008 = vmul.f32 %v1984, %v2006
    %v2009 = vmul.f32 %v1989, %v2007
    %v2010 = vld [vmem:[#allocation5] sm:$0xff]
    %v2011 = vld [vmem:[#allocation5 + $0x8] sm:$0xff]
    %v2012 = vld [vmem:[#allocation5 + $0x10] sm:$0xff]
    %v2013 = vld [vmem:[#allocation5 + $0x18] sm:$0xff]
    %v2014 = vld [vmem:[#allocation5 + $0x20] sm:$0xff]
    %v2015 = vld [vmem:[#allocation5 + $0x28] sm:$0xff]
    %v2016 = vld [vmem:[#allocation5 + $0x30] sm:$0xff]
    %v2017 = vld [vmem:[#allocation5 + $0x38] sm:$0xff]
    %v2018 = vld [vmem:[#allocation5 + $0x40] sm:$0xff]
    %v2019 = vld [vmem:[#allocation5 + $0x48] sm:$0xff]
    %v2020 = vld [vmem:[#allocation5 + $0x50] sm:$0xff]
    %v2021 = vld [vmem:[#allocation5 + $0x58] sm:$0xff]
    %v2022 = vld [vmem:[#allocation5 + $0x60] sm:$0xff]
    %v2023 = vld [vmem:[#allocation5 + $0x68] sm:$0xff]
    %v2024 = vld [vmem:[#allocation5 + $0x70] sm:$0xff]
    %v2025 = vld [vmem:[#allocation5 + $0x78] sm:$0xff]
    %v2026 = vld [vmem:[%s27] sm:$0x1]
    %v2028 = vlaneseq
    %v2029 = vshrl.u32 %v2028, 7
    %v2030 = vsub.s32 0, %v2029
    %v2031 = vrot.slane %v2026, %v2030
    %2033 = vmatprep.subr.mxu0 0.0
    %2034 = vmatpush1.msra.mxu0 %v2025
    %2035 = vmatprep.subr.mxu0 0.0
    %2036 = vmatpush1.msra.mxu0 %v2024
    %2037 = vmatprep.subr.mxu0 0.0
    %2038 = vmatpush1.msra.mxu0 %v2023
    %2039 = vmatprep.subr.mxu0 0.0
    %2040 = vmatpush1.msra.mxu0 %v2022
    %2041 = vmatprep.subr.mxu0 0.0
    %2042 = vmatpush1.msra.mxu0 %v2021
    %2043 = vmatprep.subr.mxu0 0.0
    %2044 = vmatpush1.msra.mxu0 %v2020
    %2045 = vmatprep.subr.mxu0 0.0
    %2046 = vmatpush1.msra.mxu0 %v2019
    %2047 = vmatprep.subr.mxu0 0.0
    %2048 = vmatpush1.msra.mxu0 %v2018
    %2049 = vmatprep.subr.mxu0 0.0
    %2050 = vmatpush1.msra.mxu0 %v2017
    %2051 = vmatprep.subr.mxu0 0.0
    %2052 = vmatpush1.msra.mxu0 %v2016
    %2053 = vmatprep.subr.mxu0 0.0
    %2054 = vmatpush1.msra.mxu0 %v2015
    %2055 = vmatprep.subr.mxu0 0.0
    %2056 = vmatpush1.msra.mxu0 %v2014
    %2057 = vmatprep.subr.mxu0 0.0
    %2058 = vmatpush1.msra.mxu0 %v2013
    %2059 = vmatprep.subr.mxu0 0.0
    %2060 = vmatpush1.msra.mxu0 %v2012
    %2061 = vmatprep.subr.mxu0 0.0
    %2062 = vmatpush1.msra.mxu0 %v2011
    %2063 = vmatprep.subr.mxu0 0.0
    %2064 = vmatpush1.msra.mxu0 %v2010
    %2065 = vmatprep.subr.mxu0 0.0
    %2066 = vmatpush2.msra.mxu0 0.0
    %2067 = vmatprep.subr.mxu0 0.0
    %2068 = vmatpush2.msra.mxu0 0.0
    %2069 = vmatprep.subr.mxu0 0.0
    %2070 = vmatpush2.msra.mxu0 0.0
    %2071 = vmatprep.subr.mxu0 0.0
    %2072 = vmatpush2.msra.mxu0 0.0
    %2073 = vmatprep.subr.mxu0 0.0
    %2074 = vmatpush2.msra.mxu0 0.0
    %2075 = vmatprep.subr.mxu0 0.0
    %2076 = vmatpush2.msra.mxu0 0.0
    %2077 = vmatprep.subr.mxu0 0.0
    %2078 = vmatpush2.msra.mxu0 0.0
    %2079 = vmatprep.subr.mxu0 0.0
    %2080 = vmatpush2.msra.mxu0 0.0
    %2081 = vmatprep.subr.mxu0 0.0
    %2082 = vmatpush2.msra.mxu0 0.0
    %2083 = vmatprep.subr.mxu0 0.0
    %2084 = vmatpush2.msra.mxu0 0.0
    %2085 = vmatprep.subr.mxu0 0.0
    %2086 = vmatpush2.msra.mxu0 0.0
    %2087 = vmatprep.subr.mxu0 0.0
    %2088 = vmatpush2.msra.mxu0 0.0
    %2089 = vmatprep.subr.mxu0 0.0
    %2090 = vmatpush2.msra.mxu0 0.0
    %2091 = vmatprep.subr.mxu0 0.0
    %2092 = vmatpush2.msra.mxu0 0.0
    %2093 = vmatprep.subr.mxu0 0.0
    %2094 = vmatpush2.msra.mxu0 0.0
    %2095 = vmatprep.subr.mxu0 0.0
    %2096 = vmatpush2.msra.mxu0 0.0
    %2097 = vmatprep.mubr.f32.mxu0 0.0
    %2098 = vmatmul.mubr.f32.gmra.mxu0 %v2008
    %v2099 = vpop.f32.mrf.mxu0
    %v2100 = vadd.f32 %v2031, %v2099
    %v2101 = vpop.f32.mrf.mxu0
    %2102 = vmatprep.mubr.f32.mxu0 0.0
    %2103 = vmatmul.mubr.f32.gmra.mxu0 %v2009
    %v2104 = vpop.f32.mrf.mxu0
    %v2105 = vadd.f32 %v2031, %v2104
    %v2106 = vpop.f32.mrf.mxu0
    %2107 = vdwg.mxu0
    %v2108 = vadd.f32 %v2100, %v1894
    %v2109 = vadd.f32 %v2105, %v1895
    %v2110 = vld [vmem:[%s29] sm:$0x1]
    %v2111 = vld [vmem:[%s31] sm:$0x1]
    %v2112 = vsel %vm227, %v2108, 0.0
    %2113 = vadd.xlane.f32.xlu0 %v2112
    %v2114 = vpop.xlane.xlu0 %2113
    %v2115 = vsel %vm227, %v2109, 0.0
    %2116 = vadd.xlane.f32.xlu0 %v2115
    %v2117 = vpop.xlane.xlu0 %2116
    %v2118 = vmul.f32 %v2114, %v234
    %v2119 = vmul.f32 %v2117, %v234
    %v2120 = vsub.f32 %v2108, %v2118
    %v2121 = vsub.f32 %v2109, %v2119
    %v2122 = vmul.f32 %v2120, %v2120
    %v2123 = vmul.f32 %v2121, %v2121
    %v2124 = vsel %vm227, %v2122, 0.0
    %2125 = vadd.xlane.f32.xlu0 %v2124
    %v2126 = vpop.xlane.xlu0 %2125
    %v2127 = vsel %vm227, %v2123, 0.0
    %2128 = vadd.xlane.f32.xlu0 %v2127
    %v2129 = vpop.xlane.xlu0 %2128
    %v2130 = vmul.f32 %v2126, %v234
    %v2131 = vmul.f32 %v2129, %v234
    %v2132 = vadd.f32 %v2130, 1e-12
    %v2133 = vadd.f32 %v2131, 1e-12
    %v2134 = vrsqrt.pop %v2132
    %v2135 = vrsqrt.pop %v2133
    %v2136 = vmul.f32 %v2120, %v2134
    %v2137 = vmul.f32 %v2121, %v2135
    %v2139 = vlaneseq
    %v2140 = vshrl.u32 %v2139, 7
    %v2141 = vsub.s32 0, %v2140
    %v2142 = vrot.slane %v2110, %v2141
    %v2144 = vmul.f32 %v2136, %v2142
    %v2145 = vmul.f32 %v2137, %v2142
    %v2147 = vlaneseq
    %v2148 = vshrl.u32 %v2147, 7
    %v2149 = vsub.s32 0, %v2148
    %v2150 = vrot.slane %v2111, %v2149
    %v2152 = vadd.f32 %v2144, %v2150
    %v2153 = vadd.f32 %v2145, %v2150
    %v2154 = vld [vmem:[#allocation7] sm:$0xff]
    %v2155 = vld [vmem:[#allocation7 + $0x8] sm:$0xff]
    %v2156 = vld [vmem:[#allocation7 + $0x10] sm:$0xff]
    %v2157 = vld [vmem:[#allocation7 + $0x18] sm:$0xff]
    %v2158 = vld [vmem:[#allocation7 + $0x20] sm:$0xff]
    %v2159 = vld [vmem:[#allocation7 + $0x28] sm:$0xff]
    %v2160 = vld [vmem:[#allocation7 + $0x30] sm:$0xff]
    %v2161 = vld [vmem:[#allocation7 + $0x38] sm:$0xff]
    %v2162 = vld [vmem:[#allocation7 + $0x40] sm:$0xff]
    %v2163 = vld [vmem:[#allocation7 + $0x48] sm:$0xff]
    %v2164 = vld [vmem:[#allocation7 + $0x50] sm:$0xff]
    %v2165 = vld [vmem:[#allocation7 + $0x58] sm:$0xff]
    %v2166 = vld [vmem:[#allocation7 + $0x60] sm:$0xff]
    %v2167 = vld [vmem:[#allocation7 + $0x68] sm:$0xff]
    %v2168 = vld [vmem:[#allocation7 + $0x70] sm:$0xff]
    %v2169 = vld [vmem:[#allocation7 + $0x78] sm:$0xff]
    %v2170 = vld [vmem:[%s35] sm:$0x3]
    %v2172 = vlaneseq
    %v2173 = vshrl.u32 %v2172, 7
    %v2174 = vsub.s32 0, %v2173
    %v2175 = vrot.slane %v2170, %v2174
    %v2176 = vlaneseq
    %v2177 = vshrl.u32 %v2176, 7
    %v2178 = vsub.s32 1, %v2177
    %v2179 = vrot.slane %v2170, %v2178
    %v2183 = vsel %vm227, %v2152, 0
    %v2186 = vsel %vm227, %v2153, 0
    %2188 = vmatprep.subr.mxu0 0.0
    %2189 = vmatpush1.msra.mxu0 0.0
    %2190 = vmatprep.subr.mxu0 0.0
    %2191 = vmatpush1.msra.mxu0 0.0
    %2192 = vmatprep.subr.mxu0 0.0
    %2193 = vmatpush1.msra.mxu0 0.0
    %2194 = vmatprep.subr.mxu0 0.0
    %2195 = vmatpush1.msra.mxu0 0.0
    %2196 = vmatprep.subr.mxu0 0.0
    %2197 = vmatpush1.msra.mxu0 0.0
    %2198 = vmatprep.subr.mxu0 0.0
    %2199 = vmatpush1.msra.mxu0 0.0
    %2200 = vmatprep.subr.mxu0 0.0
    %2201 = vmatpush1.msra.mxu0 0.0
    %2202 = vmatprep.subr.mxu0 0.0
    %2203 = vmatpush1.msra.mxu0 0.0
    %2204 = vmatprep.subr.mxu0 %v2169
    %2205 = vmatpush1.msra.mxu0 %v2168
    %2206 = vmatprep.subr.mxu0 %v2167
    %2207 = vmatpush1.msra.mxu0 %v2166
    %2208 = vmatprep.subr.mxu0 %v2165
    %2209 = vmatpush1.msra.mxu0 %v2164
    %2210 = vmatprep.subr.mxu0 %v2163
    %2211 = vmatpush1.msra.mxu0 %v2162
    %2212 = vmatprep.subr.mxu0 %v2161
    %2213 = vmatpush1.msra.mxu0 %v2160
    %2214 = vmatprep.subr.mxu0 %v2159
    %2215 = vmatpush1.msra.mxu0 %v2158
    %2216 = vmatprep.subr.mxu0 %v2157
    %2217 = vmatpush1.msra.mxu0 %v2156
    %2218 = vmatprep.subr.mxu0 %v2155
    %2219 = vmatpush1.msra.mxu0 %v2154
    %2220 = vmatprep.subr.mxu0 0.0
    %2221 = vmatpush2.msra.mxu0 0.0
    %2222 = vmatprep.subr.mxu0 0.0
    %2223 = vmatpush2.msra.mxu0 0.0
    %2224 = vmatprep.subr.mxu0 0.0
    %2225 = vmatpush2.msra.mxu0 0.0
    %2226 = vmatprep.subr.mxu0 0.0
    %2227 = vmatpush2.msra.mxu0 0.0
    %2228 = vmatprep.subr.mxu0 0.0
    %2229 = vmatpush2.msra.mxu0 0.0
    %2230 = vmatprep.subr.mxu0 0.0
    %2231 = vmatpush2.msra.mxu0 0.0
    %2232 = vmatprep.subr.mxu0 0.0
    %2233 = vmatpush2.msra.mxu0 0.0
    %2234 = vmatprep.subr.mxu0 0.0
    %2235 = vmatpush2.msra.mxu0 0.0
    %2236 = vmatprep.subr.mxu0 0.0
    %2237 = vmatpush2.msra.mxu0 0.0
    %2238 = vmatprep.subr.mxu0 0.0
    %2239 = vmatpush2.msra.mxu0 0.0
    %2240 = vmatprep.subr.mxu0 0.0
    %2241 = vmatpush2.msra.mxu0 0.0
    %2242 = vmatprep.subr.mxu0 0.0
    %2243 = vmatpush2.msra.mxu0 0.0
    %2244 = vmatprep.subr.mxu0 0.0
    %2245 = vmatpush2.msra.mxu0 0.0
    %2246 = vmatprep.subr.mxu0 0.0
    %2247 = vmatpush2.msra.mxu0 0.0
    %2248 = vmatprep.subr.mxu0 0.0
    %2249 = vmatpush2.msra.mxu0 0.0
    %2250 = vmatprep.subr.mxu0 0.0
    %2251 = vmatpush2.msra.mxu0 0.0
    %2252 = vmatprep.mubr.f32.mxu0 0.0
    %2253 = vmatmul.mubr.f32.gmra.mxu0 %v2183
    %v2254 = vpop.f32.mrf.mxu0
    %v2255 = vadd.f32 %v2175, %v2254
    %v2256 = vpop.f32.mrf.mxu0
    %v2257 = vadd.f32 %v2179, %v2256
    %2258 = vmatprep.mubr.f32.mxu0 0.0
    %2259 = vmatmul.mubr.f32.gmra.mxu0 %v2186
    %v2260 = vpop.f32.mrf.mxu0
    %v2261 = vadd.f32 %v2175, %v2260
    %v2262 = vpop.f32.mrf.mxu0
    %v2263 = vadd.f32 %v2179, %v2262
    %2264 = vdwg.mxu0
    %2266 = vrot.lane.b32.xlu0 %v2255, 64
    %v2267 = vpop.permute.xlu0 %2266
    %v2268 = vsel %vm385, %v2255, 0
    %v2270 = vsel %vm385, %v2267, 0
    %2272 = vmatprep.subr.mxu0 0.0
    %2273 = vmatpush1.xpose.msra.mxu0 0.0
    %2274 = vmatprep.subr.mxu0 0.0
    %2275 = vmatpush1.xpose.msra.mxu0 0.0
    %2276 = vmatprep.subr.mxu0 0.0
    %2277 = vmatpush1.xpose.msra.mxu0 0.0
    %2278 = vmatprep.subr.mxu0 0.0
    %2279 = vmatpush1.xpose.msra.mxu0 0.0
    %2280 = vmatprep.subr.mxu0 0.0
    %2281 = vmatpush1.xpose.msra.mxu0 0.0
    %2282 = vmatprep.subr.mxu0 0.0
    %2283 = vmatpush1.xpose.msra.mxu0 0.0
    %2284 = vmatprep.subr.mxu0 0.0
    %2285 = vmatpush1.xpose.msra.mxu0 0.0
    %2286 = vmatprep.subr.mxu0 0.0
    %2287 = vmatpush1.xpose.msra.mxu0 0.0
    %2288 = vmatprep.subr.mxu0 0.0
    %2289 = vmatpush1.xpose.msra.mxu0 0.0
    %2290 = vmatprep.subr.mxu0 0.0
    %2291 = vmatpush1.xpose.msra.mxu0 0.0
    %2292 = vmatprep.subr.mxu0 0.0
    %2293 = vmatpush1.xpose.msra.mxu0 0.0
    %2294 = vmatprep.subr.mxu0 0.0
    %2295 = vmatpush1.xpose.msra.mxu0 0.0
    %2296 = vmatprep.subr.mxu0 0.0
    %2297 = vmatpush1.xpose.msra.mxu0 0.0
    %2298 = vmatprep.subr.mxu0 0.0
    %2299 = vmatpush1.xpose.msra.mxu0 0.0
    %2300 = vmatprep.subr.mxu0 0.0
    %2301 = vmatpush1.xpose.msra.mxu0 0.0
    %2302 = vmatprep.subr.mxu0 0.0
    %2303 = vmatpush1.xpose.msra.mxu0 %v2270
    %2304 = vmatprep.subr.mxu0 0.0
    %2305 = vmatpush2.xpose.msra.mxu0 0.0
    %2306 = vmatprep.subr.mxu0 0.0
    %2307 = vmatpush2.xpose.msra.mxu0 0.0
    %2308 = vmatprep.subr.mxu0 0.0
    %2309 = vmatpush2.xpose.msra.mxu0 0.0
    %2310 = vmatprep.subr.mxu0 0.0
    %2311 = vmatpush2.xpose.msra.mxu0 0.0
    %2312 = vmatprep.subr.mxu0 0.0
    %2313 = vmatpush2.xpose.msra.mxu0 0.0
    %2314 = vmatprep.subr.mxu0 0.0
    %2315 = vmatpush2.xpose.msra.mxu0 0.0
    %2316 = vmatprep.subr.mxu0 0.0
    %2317 = vmatpush2.xpose.msra.mxu0 0.0
    %2318 = vmatprep.subr.mxu0 0.0
    %2319 = vmatpush2.xpose.msra.mxu0 0.0
    %2320 = vmatprep.subr.mxu0 0.0
    %2321 = vmatpush2.xpose.msra.mxu0 0.0
    %2322 = vmatprep.subr.mxu0 0.0
    %2323 = vmatpush2.xpose.msra.mxu0 0.0
    %2324 = vmatprep.subr.mxu0 0.0
    %2325 = vmatpush2.xpose.msra.mxu0 0.0
    %2326 = vmatprep.subr.mxu0 0.0
    %2327 = vmatpush2.xpose.msra.mxu0 0.0
    %2328 = vmatprep.subr.mxu0 0.0
    %2329 = vmatpush2.xpose.msra.mxu0 0.0
    %2330 = vmatprep.subr.mxu0 0.0
    %2331 = vmatpush2.xpose.msra.mxu0 0.0
    %2332 = vmatprep.subr.mxu0 0.0
    %2333 = vmatpush2.xpose.msra.mxu0 0.0
    %2334 = vmatprep.subr.mxu0 0.0
    %2335 = vmatpush2.xpose.msra.mxu0 0.0
    %2336 = vmatprep.mubr.f32.mxu0 0.0
    %2337 = vmatmul.mubr.f32.gmra.mxu0 %v2268
    %v2338 = vpop.f32.mrf.mxu0
    %v2339 = vadd.f32 0.0, %v2338
    %v2340 = vpop.f32.mrf.mxu0
    %2341 = vdwg.mxu0
    %v2342 = vmul.f32 %v2339, 0.25
    %v2343 = vadd.f32 %v2342, %v464
    %v2344 = vsel %vm466, %v2343, -inf
    %2345 = vmax.xlane.f32.xlu0 %v2344
    %v2346 = vpop.xlane.xlu0 %2345
    %v2347 = vsub.f32 %v2343, %v2346
    %v2348 = vmul.f32 %v2347, 1.442695
    %v2349 = vpow.pop %v2348
    %v2350 = vsel %vm466, %v2349, 0.0
    %2351 = vadd.xlane.f32.xlu0 %v2350
    %v2352 = vpop.xlane.xlu0 %2351
    %v2353 = vrcp.pop %v2352
    %v2354 = vmul.f32 %v2349, %v2353
    %v2356 = vsel %vm466, %v2354, 0
    %2358 = vmatprep.subr.mxu0 0.0
    %2359 = vmatpush1.msra.mxu0 0.0
    %2360 = vmatprep.subr.mxu0 0.0
    %2361 = vmatpush1.msra.mxu0 0.0
    %2362 = vmatprep.subr.mxu0 0.0
    %2363 = vmatpush1.msra.mxu0 0.0
    %2364 = vmatprep.subr.mxu0 0.0
    %2365 = vmatpush1.msra.mxu0 0.0
    %2366 = vmatprep.subr.mxu0 0.0
    %2367 = vmatpush1.msra.mxu0 0.0
    %2368 = vmatprep.subr.mxu0 0.0
    %2369 = vmatpush1.msra.mxu0 0.0
    %2370 = vmatprep.subr.mxu0 0.0
    %2371 = vmatpush1.msra.mxu0 0.0
    %2372 = vmatprep.subr.mxu0 0.0
    %2373 = vmatpush1.msra.mxu0 0.0
    %2374 = vmatprep.subr.mxu0 0.0
    %2375 = vmatpush1.msra.mxu0 0.0
    %2376 = vmatprep.subr.mxu0 0.0
    %2377 = vmatpush1.msra.mxu0 0.0
    %2378 = vmatprep.subr.mxu0 0.0
    %2379 = vmatpush1.msra.mxu0 0.0
    %2380 = vmatprep.subr.mxu0 0.0
    %2381 = vmatpush1.msra.mxu0 0.0
    %2382 = vmatprep.subr.mxu0 0.0
    %2383 = vmatpush1.msra.mxu0 0.0
    %2384 = vmatprep.subr.mxu0 0.0
    %2385 = vmatpush1.msra.mxu0 0.0
    %2386 = vmatprep.subr.mxu0 0.0
    %2387 = vmatpush1.msra.mxu0 0.0
    %2388 = vmatprep.subr.mxu0 0.0
    %2389 = vmatpush1.msra.mxu0 %v2257
    %2390 = vmatprep.subr.mxu0 0.0
    %2391 = vmatpush2.msra.mxu0 0.0
    %2392 = vmatprep.subr.mxu0 0.0
    %2393 = vmatpush2.msra.mxu0 0.0
    %2394 = vmatprep.subr.mxu0 0.0
    %2395 = vmatpush2.msra.mxu0 0.0
    %2396 = vmatprep.subr.mxu0 0.0
    %2397 = vmatpush2.msra.mxu0 0.0
    %2398 = vmatprep.subr.mxu0 0.0
    %2399 = vmatpush2.msra.mxu0 0.0
    %2400 = vmatprep.subr.mxu0 0.0
    %2401 = vmatpush2.msra.mxu0 0.0
    %2402 = vmatprep.subr.mxu0 0.0
    %2403 = vmatpush2.msra.mxu0 0.0
    %2404 = vmatprep.subr.mxu0 0.0
    %2405 = vmatpush2.msra.mxu0 0.0
    %2406 = vmatprep.subr.mxu0 0.0
    %2407 = vmatpush2.msra.mxu0 0.0
    %2408 = vmatprep.subr.mxu0 0.0
    %2409 = vmatpush2.msra.mxu0 0.0
    %2410 = vmatprep.subr.mxu0 0.0
    %2411 = vmatpush2.msra.mxu0 0.0
    %2412 = vmatprep.subr.mxu0 0.0
    %2413 = vmatpush2.msra.mxu0 0.0
    %2414 = vmatprep.subr.mxu0 0.0
    %2415 = vmatpush2.msra.mxu0 0.0
    %2416 = vmatprep.subr.mxu0 0.0
    %2417 = vmatpush2.msra.mxu0 0.0
    %2418 = vmatprep.subr.mxu0 0.0
    %2419 = vmatpush2.msra.mxu0 0.0
    %2420 = vmatprep.subr.mxu0 0.0
    %2421 = vmatpush2.msra.mxu0 0.0
    %2422 = vmatprep.mubr.f32.mxu0 0.0
    %2423 = vmatmul.mubr.f32.gmra.mxu0 %v2356
    %v2424 = vpop.f32.mrf.mxu0
    %v2425 = vadd.f32 0.0, %v2424
    %v2426 = vpop.f32.mrf.mxu0
    %2427 = vdwg.mxu0
    %2428 = vrot.lane.b32.xlu0 %v2255, 112
    %v2429 = vpop.permute.xlu0 %2428
    %2430 = vrot.lane.b32.xlu0 %v2255, 48
    %v2431 = vpop.permute.xlu0 %2430
    %v2432 = vsel %vm385, %v2429, 0
    %v2434 = vsel %vm385, %v2431, 0
    %2436 = vmatprep.subr.mxu0 0.0
    %2437 = vmatpush1.xpose.msra.mxu0 0.0
    %2438 = vmatprep.subr.mxu0 0.0
    %2439 = vmatpush1.xpose.msra.mxu0 0.0
    %2440 = vmatprep.subr.mxu0 0.0
    %2441 = vmatpush1.xpose.msra.mxu0 0.0
    %2442 = vmatprep.subr.mxu0 0.0
    %2443 = vmatpush1.xpose.msra.mxu0 0.0
    %2444 = vmatprep.subr.mxu0 0.0
    %2445 = vmatpush1.xpose.msra.mxu0 0.0
    %2446 = vmatprep.subr.mxu0 0.0
    %2447 = vmatpush1.xpose.msra.mxu0 0.0
    %2448 = vmatprep.subr.mxu0 0.0
    %2449 = vmatpush1.xpose.msra.mxu0 0.0
    %2450 = vmatprep.subr.mxu0 0.0
    %2451 = vmatpush1.xpose.msra.mxu0 0.0
    %2452 = vmatprep.subr.mxu0 0.0
    %2453 = vmatpush1.xpose.msra.mxu0 0.0
    %2454 = vmatprep.subr.mxu0 0.0
    %2455 = vmatpush1.xpose.msra.mxu0 0.0
    %2456 = vmatprep.subr.mxu0 0.0
    %2457 = vmatpush1.xpose.msra.mxu0 0.0
    %2458 = vmatprep.subr.mxu0 0.0
    %2459 = vmatpush1.xpose.msra.mxu0 0.0
    %2460 = vmatprep.subr.mxu0 0.0
    %2461 = vmatpush1.xpose.msra.mxu0 0.0
    %2462 = vmatprep.subr.mxu0 0.0
    %2463 = vmatpush1.xpose.msra.mxu0 0.0
    %2464 = vmatprep.subr.mxu0 0.0
    %2465 = vmatpush1.xpose.msra.mxu0 0.0
    %2466 = vmatprep.subr.mxu0 0.0
    %2467 = vmatpush1.xpose.msra.mxu0 %v2434
    %2468 = vmatprep.subr.mxu0 0.0
    %2469 = vmatpush2.xpose.msra.mxu0 0.0
    %2470 = vmatprep.subr.mxu0 0.0
    %2471 = vmatpush2.xpose.msra.mxu0 0.0
    %2472 = vmatprep.subr.mxu0 0.0
    %2473 = vmatpush2.xpose.msra.mxu0 0.0
    %2474 = vmatprep.subr.mxu0 0.0
    %2475 = vmatpush2.xpose.msra.mxu0 0.0
    %2476 = vmatprep.subr.mxu0 0.0
    %2477 = vmatpush2.xpose.msra.mxu0 0.0
    %2478 = vmatprep.subr.mxu0 0.0
    %2479 = vmatpush2.xpose.msra.mxu0 0.0
    %2480 = vmatprep.subr.mxu0 0.0
    %2481 = vmatpush2.xpose.msra.mxu0 0.0
    %2482 = vmatprep.subr.mxu0 0.0
    %2483 = vmatpush2.xpose.msra.mxu0 0.0
    %2484 = vmatprep.subr.mxu0 0.0
    %2485 = vmatpush2.xpose.msra.mxu0 0.0
    %2486 = vmatprep.subr.mxu0 0.0
    %2487 = vmatpush2.xpose.msra.mxu0 0.0
    %2488 = vmatprep.subr.mxu0 0.0
    %2489 = vmatpush2.xpose.msra.mxu0 0.0
    %2490 = vmatprep.subr.mxu0 0.0
    %2491 = vmatpush2.xpose.msra.mxu0 0.0
    %2492 = vmatprep.subr.mxu0 0.0
    %2493 = vmatpush2.xpose.msra.mxu0 0.0
    %2494 = vmatprep.subr.mxu0 0.0
    %2495 = vmatpush2.xpose.msra.mxu0 0.0
    %2496 = vmatprep.subr.mxu0 0.0
    %2497 = vmatpush2.xpose.msra.mxu0 0.0
    %2498 = vmatprep.subr.mxu0 0.0
    %2499 = vmatpush2.xpose.msra.mxu0 0.0
    %2500 = vmatprep.mubr.f32.mxu0 0.0
    %2501 = vmatmul.mubr.f32.gmra.mxu0 %v2432
    %v2502 = vpop.f32.mrf.mxu0
    %v2503 = vadd.f32 0.0, %v2502
    %v2504 = vpop.f32.mrf.mxu0
    %2505 = vdwg.mxu0
    %v2506 = vmul.f32 %v2503, 0.25
    %v2507 = vadd.f32 %v2506, %v464
    %v2508 = vsel %vm466, %v2507, -inf
    %2509 = vmax.xlane.f32.xlu0 %v2508
    %v2510 = vpop.xlane.xlu0 %2509
    %v2511 = vsub.f32 %v2507, %v2510
    %v2512 = vmul.f32 %v2511, 1.442695
    %v2513 = vpow.pop %v2512
    %v2514 = vsel %vm466, %v2513, 0.0
    %2515 = vadd.xlane.f32.xlu0 %v2514
    %v2516 = vpop.xlane.xlu0 %2515
    %v2517 = vrcp.pop %v2516
    %v2518 = vmul.f32 %v2513, %v2517
    %2520 = vrot.lane.b32.xlu0 %v2257, 112
    %v2521 = vpop.permute.xlu0 %2520
    %v2524 = vsel %vm466, %v2518, 0
    %2526 = vmatprep.subr.mxu0 0.0
    %2527 = vmatpush1.msra.mxu0 0.0
    %2528 = vmatprep.subr.mxu0 0.0
    %2529 = vmatpush1.msra.mxu0 0.0
    %2530 = vmatprep.subr.mxu0 0.0
    %2531 = vmatpush1.msra.mxu0 0.0
    %2532 = vmatprep.subr.mxu0 0.0
    %2533 = vmatpush1.msra.mxu0 0.0
    %2534 = vmatprep.subr.mxu0 0.0
    %2535 = vmatpush1.msra.mxu0 0.0
    %2536 = vmatprep.subr.mxu0 0.0
    %2537 = vmatpush1.msra.mxu0 0.0
    %2538 = vmatprep.subr.mxu0 0.0
    %2539 = vmatpush1.msra.mxu0 0.0
    %2540 = vmatprep.subr.mxu0 0.0
    %2541 = vmatpush1.msra.mxu0 0.0
    %2542 = vmatprep.subr.mxu0 0.0
    %2543 = vmatpush1.msra.mxu0 0.0
    %2544 = vmatprep.subr.mxu0 0.0
    %2545 = vmatpush1.msra.mxu0 0.0
    %2546 = vmatprep.subr.mxu0 0.0
    %2547 = vmatpush1.msra.mxu0 0.0
    %2548 = vmatprep.subr.mxu0 0.0
    %2549 = vmatpush1.msra.mxu0 0.0
    %2550 = vmatprep.subr.mxu0 0.0
    %2551 = vmatpush1.msra.mxu0 0.0
    %2552 = vmatprep.subr.mxu0 0.0
    %2553 = vmatpush1.msra.mxu0 0.0
    %2554 = vmatprep.subr.mxu0 0.0
    %2555 = vmatpush1.msra.mxu0 0.0
    %2556 = vmatprep.subr.mxu0 0.0
    %2557 = vmatpush1.msra.mxu0 %v2521
    %2558 = vmatprep.subr.mxu0 0.0
    %2559 = vmatpush2.msra.mxu0 0.0
    %2560 = vmatprep.subr.mxu0 0.0
    %2561 = vmatpush2.msra.mxu0 0.0
    %2562 = vmatprep.subr.mxu0 0.0
    %2563 = vmatpush2.msra.mxu0 0.0
    %2564 = vmatprep.subr.mxu0 0.0
    %2565 = vmatpush2.msra.mxu0 0.0
    %2566 = vmatprep.subr.mxu0 0.0
    %2567 = vmatpush2.msra.mxu0 0.0
    %2568 = vmatprep.subr.mxu0 0.0
    %2569 = vmatpush2.msra.mxu0 0.0
    %2570 = vmatprep.subr.mxu0 0.0
    %2571 = vmatpush2.msra.mxu0 0.0
    %2572 = vmatprep.subr.mxu0 0.0
    %2573 = vmatpush2.msra.mxu0 0.0
    %2574 = vmatprep.subr.mxu0 0.0
    %2575 = vmatpush2.msra.mxu0 0.0
    %2576 = vmatprep.subr.mxu0 0.0
    %2577 = vmatpush2.msra.mxu0 0.0
    %2578 = vmatprep.subr.mxu0 0.0
    %2579 = vmatpush2.msra.mxu0 0.0
    %2580 = vmatprep.subr.mxu0 0.0
    %2581 = vmatpush2.msra.mxu0 0.0
    %2582 = vmatprep.subr.mxu0 0.0
    %2583 = vmatpush2.msra.mxu0 0.0
    %2584 = vmatprep.subr.mxu0 0.0
    %2585 = vmatpush2.msra.mxu0 0.0
    %2586 = vmatprep.subr.mxu0 0.0
    %2587 = vmatpush2.msra.mxu0 0.0
    %2588 = vmatprep.subr.mxu0 0.0
    %2589 = vmatpush2.msra.mxu0 0.0
    %2590 = vmatprep.mubr.f32.mxu0 0.0
    %2591 = vmatmul.mubr.f32.gmra.mxu0 %v2524
    %v2592 = vpop.f32.mrf.mxu0
    %v2593 = vadd.f32 0.0, %v2592
    %v2594 = vpop.f32.mrf.mxu0
    %2595 = vdwg.mxu0
    %2596 = vrot.lane.b32.xlu0 %v2255, 96
    %v2597 = vpop.permute.xlu0 %2596
    %2598 = vrot.lane.b32.xlu0 %v2255, 32
    %v2599 = vpop.permute.xlu0 %2598
    %v2600 = vsel %vm385, %v2597, 0
    %v2602 = vsel %vm385, %v2599, 0
    %2604 = vmatprep.subr.mxu0 0.0
    %2605 = vmatpush1.xpose.msra.mxu0 0.0
    %2606 = vmatprep.subr.mxu0 0.0
    %2607 = vmatpush1.xpose.msra.mxu0 0.0
    %2608 = vmatprep.subr.mxu0 0.0
    %2609 = vmatpush1.xpose.msra.mxu0 0.0
    %2610 = vmatprep.subr.mxu0 0.0
    %2611 = vmatpush1.xpose.msra.mxu0 0.0
    %2612 = vmatprep.subr.mxu0 0.0
    %2613 = vmatpush1.xpose.msra.mxu0 0.0
    %2614 = vmatprep.subr.mxu0 0.0
    %2615 = vmatpush1.xpose.msra.mxu0 0.0
    %2616 = vmatprep.subr.mxu0 0.0
    %2617 = vmatpush1.xpose.msra.mxu0 0.0
    %2618 = vmatprep.subr.mxu0 0.0
    %2619 = vmatpush1.xpose.msra.mxu0 0.0
    %2620 = vmatprep.subr.mxu0 0.0
    %2621 = vmatpush1.xpose.msra.mxu0 0.0
    %2622 = vmatprep.subr.mxu0 0.0
    %2623 = vmatpush1.xpose.msra.mxu0 0.0
    %2624 = vmatprep.subr.mxu0 0.0
    %2625 = vmatpush1.xpose.msra.mxu0 0.0
    %2626 = vmatprep.subr.mxu0 0.0
    %2627 = vmatpush1.xpose.msra.mxu0 0.0
    %2628 = vmatprep.subr.mxu0 0.0
    %2629 = vmatpush1.xpose.msra.mxu0 0.0
    %2630 = vmatprep.subr.mxu0 0.0
    %2631 = vmatpush1.xpose.msra.mxu0 0.0
    %2632 = vmatprep.subr.mxu0 0.0
    %2633 = vmatpush1.xpose.msra.mxu0 0.0
    %2634 = vmatprep.subr.mxu0 0.0
    %2635 = vmatpush1.xpose.msra.mxu0 %v2602
    %2636 = vmatprep.subr.mxu0 0.0
    %2637 = vmatpush2.xpose.msra.mxu0 0.0
    %2638 = vmatprep.subr.mxu0 0.0
    %2639 = vmatpush2.xpose.msra.mxu0 0.0
    %2640 = vmatprep.subr.mxu0 0.0
    %2641 = vmatpush2.xpose.msra.mxu0 0.0
    %2642 = vmatprep.subr.mxu0 0.0
    %2643 = vmatpush2.xpose.msra.mxu0 0.0
    %2644 = vmatprep.subr.mxu0 0.0
    %2645 = vmatpush2.xpose.msra.mxu0 0.0
    %2646 = vmatprep.subr.mxu0 0.0
    %2647 = vmatpush2.xpose.msra.mxu0 0.0
    %2648 = vmatprep.subr.mxu0 0.0
    %2649 = vmatpush2.xpose.msra.mxu0 0.0
    %2650 = vmatprep.subr.mxu0 0.0
    %2651 = vmatpush2.xpose.msra.mxu0 0.0
    %2652 = vmatprep.subr.mxu0 0.0
    %2653 = vmatpush2.xpose.msra.mxu0 0.0
    %2654 = vmatprep.subr.mxu0 0.0
    %2655 = vmatpush2.xpose.msra.mxu0 0.0
    %2656 = vmatprep.subr.mxu0 0.0
    %2657 = vmatpush2.xpose.msra.mxu0 0.0
    %2658 = vmatprep.subr.mxu0 0.0
    %2659 = vmatpush2.xpose.msra.mxu0 0.0
    %2660 = vmatprep.subr.mxu0 0.0
    %2661 = vmatpush2.xpose.msra.mxu0 0.0
    %2662 = vmatprep.subr.mxu0 0.0
    %2663 = vmatpush2.xpose.msra.mxu0 0.0
    %2664 = vmatprep.subr.mxu0 0.0
    %2665 = vmatpush2.xpose.msra.mxu0 0.0
    %2666 = vmatprep.subr.mxu0 0.0
    %2667 = vmatpush2.xpose.msra.mxu0 0.0
    %2668 = vmatprep.mubr.f32.mxu0 0.0
    %2669 = vmatmul.mubr.f32.gmra.mxu0 %v2600
    %v2670 = vpop.f32.mrf.mxu0
    %v2671 = vadd.f32 0.0, %v2670
    %v2672 = vpop.f32.mrf.mxu0
    %2673 = vdwg.mxu0
    %v2674 = vmul.f32 %v2671, 0.25
    %v2675 = vadd.f32 %v2674, %v464
    %v2676 = vsel %vm466, %v2675, -inf
    %2677 = vmax.xlane.f32.xlu0 %v2676
    %v2678 = vpop.xlane.xlu0 %2677
    %v2679 = vsub.f32 %v2675, %v2678
    %v2680 = vmul.f32 %v2679, 1.442695
    %v2681 = vpow.pop %v2680
    %v2682 = vsel %vm466, %v2681, 0.0
    %2683 = vadd.xlane.f32.xlu0 %v2682
    %v2684 = vpop.xlane.xlu0 %2683
    %v2685 = vrcp.pop %v2684
    %v2686 = vmul.f32 %v2681, %v2685
    %2687 = vrot.lane.b32.xlu0 %v2257, 96
    %v2688 = vpop.permute.xlu0 %2687
    %v2691 = vsel %vm466, %v2686, 0
    %2693 = vmatprep.subr.mxu0 0.0
    %2694 = vmatpush1.msra.mxu0 0.0
    %2695 = vmatprep.subr.mxu0 0.0
    %2696 = vmatpush1.msra.mxu0 0.0
    %2697 = vmatprep.subr.mxu0 0.0
    %2698 = vmatpush1.msra.mxu0 0.0
    %2699 = vmatprep.subr.mxu0 0.0
    %2700 = vmatpush1.msra.mxu0 0.0
    %2701 = vmatprep.subr.mxu0 0.0
    %2702 = vmatpush1.msra.mxu0 0.0
    %2703 = vmatprep.subr.mxu0 0.0
    %2704 = vmatpush1.msra.mxu0 0.0
    %2705 = vmatprep.subr.mxu0 0.0
    %2706 = vmatpush1.msra.mxu0 0.0
    %2707 = vmatprep.subr.mxu0 0.0
    %2708 = vmatpush1.msra.mxu0 0.0
    %2709 = vmatprep.subr.mxu0 0.0
    %2710 = vmatpush1.msra.mxu0 0.0
    %2711 = vmatprep.subr.mxu0 0.0
    %2712 = vmatpush1.msra.mxu0 0.0
    %2713 = vmatprep.subr.mxu0 0.0
    %2714 = vmatpush1.msra.mxu0 0.0
    %2715 = vmatprep.subr.mxu0 0.0
    %2716 = vmatpush1.msra.mxu0 0.0
    %2717 = vmatprep.subr.mxu0 0.0
    %2718 = vmatpush1.msra.mxu0 0.0
    %2719 = vmatprep.subr.mxu0 0.0
    %2720 = vmatpush1.msra.mxu0 0.0
    %2721 = vmatprep.subr.mxu0 0.0
    %2722 = vmatpush1.msra.mxu0 0.0
    %2723 = vmatprep.subr.mxu0 0.0
    %2724 = vmatpush1.msra.mxu0 %v2688
    %2725 = vmatprep.subr.mxu0 0.0
    %2726 = vmatpush2.msra.mxu0 0.0
    %2727 = vmatprep.subr.mxu0 0.0
    %2728 = vmatpush2.msra.mxu0 0.0
    %2729 = vmatprep.subr.mxu0 0.0
    %2730 = vmatpush2.msra.mxu0 0.0
    %2731 = vmatprep.subr.mxu0 0.0
    %2732 = vmatpush2.msra.mxu0 0.0
    %2733 = vmatprep.subr.mxu0 0.0
    %2734 = vmatpush2.msra.mxu0 0.0
    %2735 = vmatprep.subr.mxu0 0.0
    %2736 = vmatpush2.msra.mxu0 0.0
    %2737 = vmatprep.subr.mxu0 0.0
    %2738 = vmatpush2.msra.mxu0 0.0
    %2739 = vmatprep.subr.mxu0 0.0
    %2740 = vmatpush2.msra.mxu0 0.0
    %2741 = vmatprep.subr.mxu0 0.0
    %2742 = vmatpush2.msra.mxu0 0.0
    %2743 = vmatprep.subr.mxu0 0.0
    %2744 = vmatpush2.msra.mxu0 0.0
    %2745 = vmatprep.subr.mxu0 0.0
    %2746 = vmatpush2.msra.mxu0 0.0
    %2747 = vmatprep.subr.mxu0 0.0
    %2748 = vmatpush2.msra.mxu0 0.0
    %2749 = vmatprep.subr.mxu0 0.0
    %2750 = vmatpush2.msra.mxu0 0.0
    %2751 = vmatprep.subr.mxu0 0.0
    %2752 = vmatpush2.msra.mxu0 0.0
    %2753 = vmatprep.subr.mxu0 0.0
    %2754 = vmatpush2.msra.mxu0 0.0
    %2755 = vmatprep.subr.mxu0 0.0
    %2756 = vmatpush2.msra.mxu0 0.0
    %2757 = vmatprep.mubr.f32.mxu0 0.0
    %2758 = vmatmul.mubr.f32.gmra.mxu0 %v2691
    %v2759 = vpop.f32.mrf.mxu0
    %v2760 = vadd.f32 0.0, %v2759
    %v2761 = vpop.f32.mrf.mxu0
    %2762 = vdwg.mxu0
    %2763 = vrot.lane.b32.xlu0 %v2255, 80
    %v2764 = vpop.permute.xlu0 %2763
    %2765 = vrot.lane.b32.xlu0 %v2255, 16
    %v2766 = vpop.permute.xlu0 %2765
    %v2767 = vsel %vm385, %v2764, 0
    %v2769 = vsel %vm385, %v2766, 0
    %2771 = vmatprep.subr.mxu0 0.0
    %2772 = vmatpush1.xpose.msra.mxu0 0.0
    %2773 = vmatprep.subr.mxu0 0.0
    %2774 = vmatpush1.xpose.msra.mxu0 0.0
    %2775 = vmatprep.subr.mxu0 0.0
    %2776 = vmatpush1.xpose.msra.mxu0 0.0
    %2777 = vmatprep.subr.mxu0 0.0
    %2778 = vmatpush1.xpose.msra.mxu0 0.0
    %2779 = vmatprep.subr.mxu0 0.0
    %2780 = vmatpush1.xpose.msra.mxu0 0.0
    %2781 = vmatprep.subr.mxu0 0.0
    %2782 = vmatpush1.xpose.msra.mxu0 0.0
    %2783 = vmatprep.subr.mxu0 0.0
    %2784 = vmatpush1.xpose.msra.mxu0 0.0
    %2785 = vmatprep.subr.mxu0 0.0
    %2786 = vmatpush1.xpose.msra.mxu0 0.0
    %2787 = vmatprep.subr.mxu0 0.0
    %2788 = vmatpush1.xpose.msra.mxu0 0.0
    %2789 = vmatprep.subr.mxu0 0.0
    %2790 = vmatpush1.xpose.msra.mxu0 0.0
    %2791 = vmatprep.subr.mxu0 0.0
    %2792 = vmatpush1.xpose.msra.mxu0 0.0
    %2793 = vmatprep.subr.mxu0 0.0
    %2794 = vmatpush1.xpose.msra.mxu0 0.0
    %2795 = vmatprep.subr.mxu0 0.0
    %2796 = vmatpush1.xpose.msra.mxu0 0.0
    %2797 = vmatprep.subr.mxu0 0.0
    %2798 = vmatpush1.xpose.msra.mxu0 0.0
    %2799 = vmatprep.subr.mxu0 0.0
    %2800 = vmatpush1.xpose.msra.mxu0 0.0
    %2801 = vmatprep.subr.mxu0 0.0
    %2802 = vmatpush1.xpose.msra.mxu0 %v2769
    %2803 = vmatprep.subr.mxu0 0.0
    %2804 = vmatpush2.xpose.msra.mxu0 0.0
    %2805 = vmatprep.subr.mxu0 0.0
    %2806 = vmatpush2.xpose.msra.mxu0 0.0
    %2807 = vmatprep.subr.mxu0 0.0
    %2808 = vmatpush2.xpose.msra.mxu0 0.0
    %2809 = vmatprep.subr.mxu0 0.0
    %2810 = vmatpush2.xpose.msra.mxu0 0.0
    %2811 = vmatprep.subr.mxu0 0.0
    %2812 = vmatpush2.xpose.msra.mxu0 0.0
    %2813 = vmatprep.subr.mxu0 0.0
    %2814 = vmatpush2.xpose.msra.mxu0 0.0
    %2815 = vmatprep.subr.mxu0 0.0
    %2816 = vmatpush2.xpose.msra.mxu0 0.0
    %2817 = vmatprep.subr.mxu0 0.0
    %2818 = vmatpush2.xpose.msra.mxu0 0.0
    %2819 = vmatprep.subr.mxu0 0.0
    %2820 = vmatpush2.xpose.msra.mxu0 0.0
    %2821 = vmatprep.subr.mxu0 0.0
    %2822 = vmatpush2.xpose.msra.mxu0 0.0
    %2823 = vmatprep.subr.mxu0 0.0
    %2824 = vmatpush2.xpose.msra.mxu0 0.0
    %2825 = vmatprep.subr.mxu0 0.0
    %2826 = vmatpush2.xpose.msra.mxu0 0.0
    %2827 = vmatprep.subr.mxu0 0.0
    %2828 = vmatpush2.xpose.msra.mxu0 0.0
    %2829 = vmatprep.subr.mxu0 0.0
    %2830 = vmatpush2.xpose.msra.mxu0 0.0
    %2831 = vmatprep.subr.mxu0 0.0
    %2832 = vmatpush2.xpose.msra.mxu0 0.0
    %2833 = vmatprep.subr.mxu0 0.0
    %2834 = vmatpush2.xpose.msra.mxu0 0.0
    %2835 = vmatprep.mubr.f32.mxu0 0.0
    %2836 = vmatmul.mubr.f32.gmra.mxu0 %v2767
    %v2837 = vpop.f32.mrf.mxu0
    %v2838 = vadd.f32 0.0, %v2837
    %v2839 = vpop.f32.mrf.mxu0
    %2840 = vdwg.mxu0
    %v2841 = vmul.f32 %v2838, 0.25
    %v2842 = vadd.f32 %v2841, %v464
    %v2843 = vsel %vm466, %v2842, -inf
    %2844 = vmax.xlane.f32.xlu0 %v2843
    %v2845 = vpop.xlane.xlu0 %2844
    %v2846 = vsub.f32 %v2842, %v2845
    %v2847 = vmul.f32 %v2846, 1.442695
    %v2848 = vpow.pop %v2847
    %v2849 = vsel %vm466, %v2848, 0.0
    %2850 = vadd.xlane.f32.xlu0 %v2849
    %v2851 = vpop.xlane.xlu0 %2850
    %v2852 = vrcp.pop %v2851
    %v2853 = vmul.f32 %v2848, %v2852
    %2854 = vrot.lane.b32.xlu0 %v2257, 80
    %v2855 = vpop.permute.xlu0 %2854
    %v2858 = vsel %vm466, %v2853, 0
    %2860 = vmatprep.subr.mxu0 0.0
    %2861 = vmatpush1.msra.mxu0 0.0
    %2862 = vmatprep.subr.mxu0 0.0
    %2863 = vmatpush1.msra.mxu0 0.0
    %2864 = vmatprep.subr.mxu0 0.0
    %2865 = vmatpush1.msra.mxu0 0.0
    %2866 = vmatprep.subr.mxu0 0.0
    %2867 = vmatpush1.msra.mxu0 0.0
    %2868 = vmatprep.subr.mxu0 0.0
    %2869 = vmatpush1.msra.mxu0 0.0
    %2870 = vmatprep.subr.mxu0 0.0
    %2871 = vmatpush1.msra.mxu0 0.0
    %2872 = vmatprep.subr.mxu0 0.0
    %2873 = vmatpush1.msra.mxu0 0.0
    %2874 = vmatprep.subr.mxu0 0.0
    %2875 = vmatpush1.msra.mxu0 0.0
    %2876 = vmatprep.subr.mxu0 0.0
    %2877 = vmatpush1.msra.mxu0 0.0
    %2878 = vmatprep.subr.mxu0 0.0
    %2879 = vmatpush1.msra.mxu0 0.0
    %2880 = vmatprep.subr.mxu0 0.0
    %2881 = vmatpush1.msra.mxu0 0.0
    %2882 = vmatprep.subr.mxu0 0.0
    %2883 = vmatpush1.msra.mxu0 0.0
    %2884 = vmatprep.subr.mxu0 0.0
    %2885 = vmatpush1.msra.mxu0 0.0
    %2886 = vmatprep.subr.mxu0 0.0
    %2887 = vmatpush1.msra.mxu0 0.0
    %2888 = vmatprep.subr.mxu0 0.0
    %2889 = vmatpush1.msra.mxu0 0.0
    %2890 = vmatprep.subr.mxu0 0.0
    %2891 = vmatpush1.msra.mxu0 %v2855
    %2892 = vmatprep.subr.mxu0 0.0
    %2893 = vmatpush2.msra.mxu0 0.0
    %2894 = vmatprep.subr.mxu0 0.0
    %2895 = vmatpush2.msra.mxu0 0.0
    %2896 = vmatprep.subr.mxu0 0.0
    %2897 = vmatpush2.msra.mxu0 0.0
    %2898 = vmatprep.subr.mxu0 0.0
    %2899 = vmatpush2.msra.mxu0 0.0
    %2900 = vmatprep.subr.mxu0 0.0
    %2901 = vmatpush2.msra.mxu0 0.0
    %2902 = vmatprep.subr.mxu0 0.0
    %2903 = vmatpush2.msra.mxu0 0.0
    %2904 = vmatprep.subr.mxu0 0.0
    %2905 = vmatpush2.msra.mxu0 0.0
    %2906 = vmatprep.subr.mxu0 0.0
    %2907 = vmatpush2.msra.mxu0 0.0
    %2908 = vmatprep.subr.mxu0 0.0
    %2909 = vmatpush2.msra.mxu0 0.0
    %2910 = vmatprep.subr.mxu0 0.0
    %2911 = vmatpush2.msra.mxu0 0.0
    %2912 = vmatprep.subr.mxu0 0.0
    %2913 = vmatpush2.msra.mxu0 0.0
    %2914 = vmatprep.subr.mxu0 0.0
    %2915 = vmatpush2.msra.mxu0 0.0
    %2916 = vmatprep.subr.mxu0 0.0
    %2917 = vmatpush2.msra.mxu0 0.0
    %2918 = vmatprep.subr.mxu0 0.0
    %2919 = vmatpush2.msra.mxu0 0.0
    %2920 = vmatprep.subr.mxu0 0.0
    %2921 = vmatpush2.msra.mxu0 0.0
    %2922 = vmatprep.subr.mxu0 0.0
    %2923 = vmatpush2.msra.mxu0 0.0
    %2924 = vmatprep.mubr.f32.mxu0 0.0
    %2925 = vmatmul.mubr.f32.gmra.mxu0 %v2858
    %v2926 = vpop.f32.mrf.mxu0
    %v2927 = vadd.f32 0.0, %v2926
    %v2928 = vpop.f32.mrf.mxu0
    %2929 = vdwg.mxu0
    %2931 = vrot.lane.b32.xlu0 %v2593, 16
    %v2932 = vpop.permute.xlu0 %2931
    %2935 = vrot.lane.b32.xlu0 %v2760, 32
    %v2936 = vpop.permute.xlu0 %2935
    %2939 = vrot.lane.b32.xlu0 %v2927, 48
    %v2940 = vpop.permute.xlu0 %2939
    %v2942 = vsel %vm385, %v2425, %v2932
    %v2943 = vsel %vm1066, %v2942, %v2936
    %v2944 = vsel %vm1068, %v2943, %v2940
    %2946 = vrot.lane.b32.xlu0 %v2261, 64
    %v2947 = vpop.permute.xlu0 %2946
    %v2948 = vsel %vm385, %v2261, 0
    %v2950 = vsel %vm385, %v2947, 0
    %2952 = vmatprep.subr.mxu0 0.0
    %2953 = vmatpush1.xpose.msra.mxu0 0.0
    %2954 = vmatprep.subr.mxu0 0.0
    %2955 = vmatpush1.xpose.msra.mxu0 0.0
    %2956 = vmatprep.subr.mxu0 0.0
    %2957 = vmatpush1.xpose.msra.mxu0 0.0
    %2958 = vmatprep.subr.mxu0 0.0
    %2959 = vmatpush1.xpose.msra.mxu0 0.0
    %2960 = vmatprep.subr.mxu0 0.0
    %2961 = vmatpush1.xpose.msra.mxu0 0.0
    %2962 = vmatprep.subr.mxu0 0.0
    %2963 = vmatpush1.xpose.msra.mxu0 0.0
    %2964 = vmatprep.subr.mxu0 0.0
    %2965 = vmatpush1.xpose.msra.mxu0 0.0
    %2966 = vmatprep.subr.mxu0 0.0
    %2967 = vmatpush1.xpose.msra.mxu0 0.0
    %2968 = vmatprep.subr.mxu0 0.0
    %2969 = vmatpush1.xpose.msra.mxu0 0.0
    %2970 = vmatprep.subr.mxu0 0.0
    %2971 = vmatpush1.xpose.msra.mxu0 0.0
    %2972 = vmatprep.subr.mxu0 0.0
    %2973 = vmatpush1.xpose.msra.mxu0 0.0
    %2974 = vmatprep.subr.mxu0 0.0
    %2975 = vmatpush1.xpose.msra.mxu0 0.0
    %2976 = vmatprep.subr.mxu0 0.0
    %2977 = vmatpush1.xpose.msra.mxu0 0.0
    %2978 = vmatprep.subr.mxu0 0.0
    %2979 = vmatpush1.xpose.msra.mxu0 0.0
    %2980 = vmatprep.subr.mxu0 0.0
    %2981 = vmatpush1.xpose.msra.mxu0 0.0
    %2982 = vmatprep.subr.mxu0 0.0
    %2983 = vmatpush1.xpose.msra.mxu0 %v2950
    %2984 = vmatprep.subr.mxu0 0.0
    %2985 = vmatpush2.xpose.msra.mxu0 0.0
    %2986 = vmatprep.subr.mxu0 0.0
    %2987 = vmatpush2.xpose.msra.mxu0 0.0
    %2988 = vmatprep.subr.mxu0 0.0
    %2989 = vmatpush2.xpose.msra.mxu0 0.0
    %2990 = vmatprep.subr.mxu0 0.0
    %2991 = vmatpush2.xpose.msra.mxu0 0.0
    %2992 = vmatprep.subr.mxu0 0.0
    %2993 = vmatpush2.xpose.msra.mxu0 0.0
    %2994 = vmatprep.subr.mxu0 0.0
    %2995 = vmatpush2.xpose.msra.mxu0 0.0
    %2996 = vmatprep.subr.mxu0 0.0
    %2997 = vmatpush2.xpose.msra.mxu0 0.0
    %2998 = vmatprep.subr.mxu0 0.0
    %2999 = vmatpush2.xpose.msra.mxu0 0.0
    %3000 = vmatprep.subr.mxu0 0.0
    %3001 = vmatpush2.xpose.msra.mxu0 0.0
    %3002 = vmatprep.subr.mxu0 0.0
    %3003 = vmatpush2.xpose.msra.mxu0 0.0
    %3004 = vmatprep.subr.mxu0 0.0
    %3005 = vmatpush2.xpose.msra.mxu0 0.0
    %3006 = vmatprep.subr.mxu0 0.0
    %3007 = vmatpush2.xpose.msra.mxu0 0.0
    %3008 = vmatprep.subr.mxu0 0.0
    %3009 = vmatpush2.xpose.msra.mxu0 0.0
    %3010 = vmatprep.subr.mxu0 0.0
    %3011 = vmatpush2.xpose.msra.mxu0 0.0
    %3012 = vmatprep.subr.mxu0 0.0
    %3013 = vmatpush2.xpose.msra.mxu0 0.0
    %3014 = vmatprep.subr.mxu0 0.0
    %3015 = vmatpush2.xpose.msra.mxu0 0.0
    %3016 = vmatprep.mubr.f32.mxu0 0.0
    %3017 = vmatmul.mubr.f32.gmra.mxu0 %v2948
    %v3018 = vpop.f32.mrf.mxu0
    %v3019 = vadd.f32 0.0, %v3018
    %v3020 = vpop.f32.mrf.mxu0
    %3021 = vdwg.mxu0
    %v3022 = vmul.f32 %v3019, 0.25
    %v3023 = vadd.f32 %v3022, %v1151
    %v3024 = vsel %vm466, %v3023, -inf
    %3025 = vmax.xlane.f32.xlu0 %v3024
    %v3026 = vpop.xlane.xlu0 %3025
    %v3027 = vsub.f32 %v3023, %v3026
    %v3028 = vmul.f32 %v3027, 1.442695
    %v3029 = vpow.pop %v3028
    %v3030 = vsel %vm466, %v3029, 0.0
    %3031 = vadd.xlane.f32.xlu0 %v3030
    %v3032 = vpop.xlane.xlu0 %3031
    %v3033 = vrcp.pop %v3032
    %v3034 = vmul.f32 %v3029, %v3033
    %v3036 = vsel %vm466, %v3034, 0
    %3038 = vmatprep.subr.mxu0 0.0
    %3039 = vmatpush1.msra.mxu0 0.0
    %3040 = vmatprep.subr.mxu0 0.0
    %3041 = vmatpush1.msra.mxu0 0.0
    %3042 = vmatprep.subr.mxu0 0.0
    %3043 = vmatpush1.msra.mxu0 0.0
    %3044 = vmatprep.subr.mxu0 0.0
    %3045 = vmatpush1.msra.mxu0 0.0
    %3046 = vmatprep.subr.mxu0 0.0
    %3047 = vmatpush1.msra.mxu0 0.0
    %3048 = vmatprep.subr.mxu0 0.0
    %3049 = vmatpush1.msra.mxu0 0.0
    %3050 = vmatprep.subr.mxu0 0.0
    %3051 = vmatpush1.msra.mxu0 0.0
    %3052 = vmatprep.subr.mxu0 0.0
    %3053 = vmatpush1.msra.mxu0 0.0
    %3054 = vmatprep.subr.mxu0 0.0
    %3055 = vmatpush1.msra.mxu0 0.0
    %3056 = vmatprep.subr.mxu0 0.0
    %3057 = vmatpush1.msra.mxu0 0.0
    %3058 = vmatprep.subr.mxu0 0.0
    %3059 = vmatpush1.msra.mxu0 0.0
    %3060 = vmatprep.subr.mxu0 0.0
    %3061 = vmatpush1.msra.mxu0 0.0
    %3062 = vmatprep.subr.mxu0 0.0
    %3063 = vmatpush1.msra.mxu0 0.0
    %3064 = vmatprep.subr.mxu0 0.0
    %3065 = vmatpush1.msra.mxu0 0.0
    %3066 = vmatprep.subr.mxu0 0.0
    %3067 = vmatpush1.msra.mxu0 0.0
    %3068 = vmatprep.subr.mxu0 0.0
    %3069 = vmatpush1.msra.mxu0 %v2263
    %3070 = vmatprep.subr.mxu0 0.0
    %3071 = vmatpush2.msra.mxu0 0.0
    %3072 = vmatprep.subr.mxu0 0.0
    %3073 = vmatpush2.msra.mxu0 0.0
    %3074 = vmatprep.subr.mxu0 0.0
    %3075 = vmatpush2.msra.mxu0 0.0
    %3076 = vmatprep.subr.mxu0 0.0
    %3077 = vmatpush2.msra.mxu0 0.0
    %3078 = vmatprep.subr.mxu0 0.0
    %3079 = vmatpush2.msra.mxu0 0.0
    %3080 = vmatprep.subr.mxu0 0.0
    %3081 = vmatpush2.msra.mxu0 0.0
    %3082 = vmatprep.subr.mxu0 0.0
    %3083 = vmatpush2.msra.mxu0 0.0
    %3084 = vmatprep.subr.mxu0 0.0
    %3085 = vmatpush2.msra.mxu0 0.0
    %3086 = vmatprep.subr.mxu0 0.0
    %3087 = vmatpush2.msra.mxu0 0.0
    %3088 = vmatprep.subr.mxu0 0.0
    %3089 = vmatpush2.msra.mxu0 0.0
    %3090 = vmatprep.subr.mxu0 0.0
    %3091 = vmatpush2.msra.mxu0 0.0
    %3092 = vmatprep.subr.mxu0 0.0
    %3093 = vmatpush2.msra.mxu0 0.0
    %3094 = vmatprep.subr.mxu0 0.0
    %3095 = vmatpush2.msra.mxu0 0.0
    %3096 = vmatprep.subr.mxu0 0.0
    %3097 = vmatpush2.msra.mxu0 0.0
    %3098 = vmatprep.subr.mxu0 0.0
    %3099 = vmatpush2.msra.mxu0 0.0
    %3100 = vmatprep.subr.mxu0 0.0
    %3101 = vmatpush2.msra.mxu0 0.0
    %3102 = vmatprep.mubr.f32.mxu0 0.0
    %3103 = vmatmul.mubr.f32.gmra.mxu0 %v3036
    %v3104 = vpop.f32.mrf.mxu0
    %v3105 = vadd.f32 0.0, %v3104
    %v3106 = vpop.f32.mrf.mxu0
    %3107 = vdwg.mxu0
    %3108 = vrot.lane.b32.xlu0 %v2261, 112
    %v3109 = vpop.permute.xlu0 %3108
    %3110 = vrot.lane.b32.xlu0 %v2261, 48
    %v3111 = vpop.permute.xlu0 %3110
    %v3112 = vsel %vm385, %v3109, 0
    %v3114 = vsel %vm385, %v3111, 0
    %3116 = vmatprep.subr.mxu0 0.0
    %3117 = vmatpush1.xpose.msra.mxu0 0.0
    %3118 = vmatprep.subr.mxu0 0.0
    %3119 = vmatpush1.xpose.msra.mxu0 0.0
    %3120 = vmatprep.subr.mxu0 0.0
    %3121 = vmatpush1.xpose.msra.mxu0 0.0
    %3122 = vmatprep.subr.mxu0 0.0
    %3123 = vmatpush1.xpose.msra.mxu0 0.0
    %3124 = vmatprep.subr.mxu0 0.0
    %3125 = vmatpush1.xpose.msra.mxu0 0.0
    %3126 = vmatprep.subr.mxu0 0.0
    %3127 = vmatpush1.xpose.msra.mxu0 0.0
    %3128 = vmatprep.subr.mxu0 0.0
    %3129 = vmatpush1.xpose.msra.mxu0 0.0
    %3130 = vmatprep.subr.mxu0 0.0
    %3131 = vmatpush1.xpose.msra.mxu0 0.0
    %3132 = vmatprep.subr.mxu0 0.0
    %3133 = vmatpush1.xpose.msra.mxu0 0.0
    %3134 = vmatprep.subr.mxu0 0.0
    %3135 = vmatpush1.xpose.msra.mxu0 0.0
    %3136 = vmatprep.subr.mxu0 0.0
    %3137 = vmatpush1.xpose.msra.mxu0 0.0
    %3138 = vmatprep.subr.mxu0 0.0
    %3139 = vmatpush1.xpose.msra.mxu0 0.0
    %3140 = vmatprep.subr.mxu0 0.0
    %3141 = vmatpush1.xpose.msra.mxu0 0.0
    %3142 = vmatprep.subr.mxu0 0.0
    %3143 = vmatpush1.xpose.msra.mxu0 0.0
    %3144 = vmatprep.subr.mxu0 0.0
    %3145 = vmatpush1.xpose.msra.mxu0 0.0
    %3146 = vmatprep.subr.mxu0 0.0
    %3147 = vmatpush1.xpose.msra.mxu0 %v3114
    %3148 = vmatprep.subr.mxu0 0.0
    %3149 = vmatpush2.xpose.msra.mxu0 0.0
    %3150 = vmatprep.subr.mxu0 0.0
    %3151 = vmatpush2.xpose.msra.mxu0 0.0
    %3152 = vmatprep.subr.mxu0 0.0
    %3153 = vmatpush2.xpose.msra.mxu0 0.0
    %3154 = vmatprep.subr.mxu0 0.0
    %3155 = vmatpush2.xpose.msra.mxu0 0.0
    %3156 = vmatprep.subr.mxu0 0.0
    %3157 = vmatpush2.xpose.msra.mxu0 0.0
    %3158 = vmatprep.subr.mxu0 0.0
    %3159 = vmatpush2.xpose.msra.mxu0 0.0
    %3160 = vmatprep.subr.mxu0 0.0
    %3161 = vmatpush2.xpose.msra.mxu0 0.0
    %3162 = vmatprep.subr.mxu0 0.0
    %3163 = vmatpush2.xpose.msra.mxu0 0.0
    %3164 = vmatprep.subr.mxu0 0.0
    %3165 = vmatpush2.xpose.msra.mxu0 0.0
    %3166 = vmatprep.subr.mxu0 0.0
    %3167 = vmatpush2.xpose.msra.mxu0 0.0
    %3168 = vmatprep.subr.mxu0 0.0
    %3169 = vmatpush2.xpose.msra.mxu0 0.0
    %3170 = vmatprep.subr.mxu0 0.0
    %3171 = vmatpush2.xpose.msra.mxu0 0.0
    %3172 = vmatprep.subr.mxu0 0.0
    %3173 = vmatpush2.xpose.msra.mxu0 0.0
    %3174 = vmatprep.subr.mxu0 0.0
    %3175 = vmatpush2.xpose.msra.mxu0 0.0
    %3176 = vmatprep.subr.mxu0 0.0
    %3177 = vmatpush2.xpose.msra.mxu0 0.0
    %3178 = vmatprep.subr.mxu0 0.0
    %3179 = vmatpush2.xpose.msra.mxu0 0.0
    %3180 = vmatprep.mubr.f32.mxu0 0.0
    %3181 = vmatmul.mubr.f32.gmra.mxu0 %v3112
    %v3182 = vpop.f32.mrf.mxu0
    %v3183 = vadd.f32 0.0, %v3182
    %v3184 = vpop.f32.mrf.mxu0
    %3185 = vdwg.mxu0
    %v3186 = vmul.f32 %v3183, 0.25
    %v3187 = vadd.f32 %v3186, %v1151
    %v3188 = vsel %vm466, %v3187, -inf
    %3189 = vmax.xlane.f32.xlu0 %v3188
    %v3190 = vpop.xlane.xlu0 %3189
    %v3191 = vsub.f32 %v3187, %v3190
    %v3192 = vmul.f32 %v3191, 1.442695
    %v3193 = vpow.pop %v3192
    %v3194 = vsel %vm466, %v3193, 0.0
    %3195 = vadd.xlane.f32.xlu0 %v3194
    %v3196 = vpop.xlane.xlu0 %3195
    %v3197 = vrcp.pop %v3196
    %v3198 = vmul.f32 %v3193, %v3197
    %3200 = vrot.lane.b32.xlu0 %v2263, 112
    %v3201 = vpop.permute.xlu0 %3200
    %v3204 = vsel %vm466, %v3198, 0
    %3206 = vmatprep.subr.mxu0 0.0
    %3207 = vmatpush1.msra.mxu0 0.0
    %3208 = vmatprep.subr.mxu0 0.0
    %3209 = vmatpush1.msra.mxu0 0.0
    %3210 = vmatprep.subr.mxu0 0.0
    %3211 = vmatpush1.msra.mxu0 0.0
    %3212 = vmatprep.subr.mxu0 0.0
    %3213 = vmatpush1.msra.mxu0 0.0
    %3214 = vmatprep.subr.mxu0 0.0
    %3215 = vmatpush1.msra.mxu0 0.0
    %3216 = vmatprep.subr.mxu0 0.0
    %3217 = vmatpush1.msra.mxu0 0.0
    %3218 = vmatprep.subr.mxu0 0.0
    %3219 = vmatpush1.msra.mxu0 0.0
    %3220 = vmatprep.subr.mxu0 0.0
    %3221 = vmatpush1.msra.mxu0 0.0
    %3222 = vmatprep.subr.mxu0 0.0
    %3223 = vmatpush1.msra.mxu0 0.0
    %3224 = vmatprep.subr.mxu0 0.0
    %3225 = vmatpush1.msra.mxu0 0.0
    %3226 = vmatprep.subr.mxu0 0.0
    %3227 = vmatpush1.msra.mxu0 0.0
    %3228 = vmatprep.subr.mxu0 0.0
    %3229 = vmatpush1.msra.mxu0 0.0
    %3230 = vmatprep.subr.mxu0 0.0
    %3231 = vmatpush1.msra.mxu0 0.0
    %3232 = vmatprep.subr.mxu0 0.0
    %3233 = vmatpush1.msra.mxu0 0.0
    %3234 = vmatprep.subr.mxu0 0.0
    %3235 = vmatpush1.msra.mxu0 0.0
    %3236 = vmatprep.subr.mxu0 0.0
    %3237 = vmatpush1.msra.mxu0 %v3201
    %3238 = vmatprep.subr.mxu0 0.0
    %3239 = vmatpush2.msra.mxu0 0.0
    %3240 = vmatprep.subr.mxu0 0.0
    %3241 = vmatpush2.msra.mxu0 0.0
    %3242 = vmatprep.subr.mxu0 0.0
    %3243 = vmatpush2.msra.mxu0 0.0
    %3244 = vmatprep.subr.mxu0 0.0
    %3245 = vmatpush2.msra.mxu0 0.0
    %3246 = vmatprep.subr.mxu0 0.0
    %3247 = vmatpush2.msra.mxu0 0.0
    %3248 = vmatprep.subr.mxu0 0.0
    %3249 = vmatpush2.msra.mxu0 0.0
    %3250 = vmatprep.subr.mxu0 0.0
    %3251 = vmatpush2.msra.mxu0 0.0
    %3252 = vmatprep.subr.mxu0 0.0
    %3253 = vmatpush2.msra.mxu0 0.0
    %3254 = vmatprep.subr.mxu0 0.0
    %3255 = vmatpush2.msra.mxu0 0.0
    %3256 = vmatprep.subr.mxu0 0.0
    %3257 = vmatpush2.msra.mxu0 0.0
    %3258 = vmatprep.subr.mxu0 0.0
    %3259 = vmatpush2.msra.mxu0 0.0
    %3260 = vmatprep.subr.mxu0 0.0
    %3261 = vmatpush2.msra.mxu0 0.0
    %3262 = vmatprep.subr.mxu0 0.0
    %3263 = vmatpush2.msra.mxu0 0.0
    %3264 = vmatprep.subr.mxu0 0.0
    %3265 = vmatpush2.msra.mxu0 0.0
    %3266 = vmatprep.subr.mxu0 0.0
    %3267 = vmatpush2.msra.mxu0 0.0
    %3268 = vmatprep.subr.mxu0 0.0
    %3269 = vmatpush2.msra.mxu0 0.0
    %3270 = vmatprep.mubr.f32.mxu0 0.0
    %3271 = vmatmul.mubr.f32.gmra.mxu0 %v3204
    %v3272 = vpop.f32.mrf.mxu0
    %v3273 = vadd.f32 0.0, %v3272
    %v3274 = vpop.f32.mrf.mxu0
    %3275 = vdwg.mxu0
    %3276 = vrot.lane.b32.xlu0 %v2261, 96
    %v3277 = vpop.permute.xlu0 %3276
    %3278 = vrot.lane.b32.xlu0 %v2261, 32
    %v3279 = vpop.permute.xlu0 %3278
    %v3280 = vsel %vm385, %v3277, 0
    %v3282 = vsel %vm385, %v3279, 0
    %3284 = vmatprep.subr.mxu0 0.0
    %3285 = vmatpush1.xpose.msra.mxu0 0.0
    %3286 = vmatprep.subr.mxu0 0.0
    %3287 = vmatpush1.xpose.msra.mxu0 0.0
    %3288 = vmatprep.subr.mxu0 0.0
    %3289 = vmatpush1.xpose.msra.mxu0 0.0
    %3290 = vmatprep.subr.mxu0 0.0
    %3291 = vmatpush1.xpose.msra.mxu0 0.0
    %3292 = vmatprep.subr.mxu0 0.0
    %3293 = vmatpush1.xpose.msra.mxu0 0.0
    %3294 = vmatprep.subr.mxu0 0.0
    %3295 = vmatpush1.xpose.msra.mxu0 0.0
    %3296 = vmatprep.subr.mxu0 0.0
    %3297 = vmatpush1.xpose.msra.mxu0 0.0
    %3298 = vmatprep.subr.mxu0 0.0
    %3299 = vmatpush1.xpose.msra.mxu0 0.0
    %3300 = vmatprep.subr.mxu0 0.0
    %3301 = vmatpush1.xpose.msra.mxu0 0.0
    %3302 = vmatprep.subr.mxu0 0.0
    %3303 = vmatpush1.xpose.msra.mxu0 0.0
    %3304 = vmatprep.subr.mxu0 0.0
    %3305 = vmatpush1.xpose.msra.mxu0 0.0
    %3306 = vmatprep.subr.mxu0 0.0
    %3307 = vmatpush1.xpose.msra.mxu0 0.0
    %3308 = vmatprep.subr.mxu0 0.0
    %3309 = vmatpush1.xpose.msra.mxu0 0.0
    %3310 = vmatprep.subr.mxu0 0.0
    %3311 = vmatpush1.xpose.msra.mxu0 0.0
    %3312 = vmatprep.subr.mxu0 0.0
    %3313 = vmatpush1.xpose.msra.mxu0 0.0
    %3314 = vmatprep.subr.mxu0 0.0
    %3315 = vmatpush1.xpose.msra.mxu0 %v3282
    %3316 = vmatprep.subr.mxu0 0.0
    %3317 = vmatpush2.xpose.msra.mxu0 0.0
    %3318 = vmatprep.subr.mxu0 0.0
    %3319 = vmatpush2.xpose.msra.mxu0 0.0
    %3320 = vmatprep.subr.mxu0 0.0
    %3321 = vmatpush2.xpose.msra.mxu0 0.0
    %3322 = vmatprep.subr.mxu0 0.0
    %3323 = vmatpush2.xpose.msra.mxu0 0.0
    %3324 = vmatprep.subr.mxu0 0.0
    %3325 = vmatpush2.xpose.msra.mxu0 0.0
    %3326 = vmatprep.subr.mxu0 0.0
    %3327 = vmatpush2.xpose.msra.mxu0 0.0
    %3328 = vmatprep.subr.mxu0 0.0
    %3329 = vmatpush2.xpose.msra.mxu0 0.0
    %3330 = vmatprep.subr.mxu0 0.0
    %3331 = vmatpush2.xpose.msra.mxu0 0.0
    %3332 = vmatprep.subr.mxu0 0.0
    %3333 = vmatpush2.xpose.msra.mxu0 0.0
    %3334 = vmatprep.subr.mxu0 0.0
    %3335 = vmatpush2.xpose.msra.mxu0 0.0
    %3336 = vmatprep.subr.mxu0 0.0
    %3337 = vmatpush2.xpose.msra.mxu0 0.0
    %3338 = vmatprep.subr.mxu0 0.0
    %3339 = vmatpush2.xpose.msra.mxu0 0.0
    %3340 = vmatprep.subr.mxu0 0.0
    %3341 = vmatpush2.xpose.msra.mxu0 0.0
    %3342 = vmatprep.subr.mxu0 0.0
    %3343 = vmatpush2.xpose.msra.mxu0 0.0
    %3344 = vmatprep.subr.mxu0 0.0
    %3345 = vmatpush2.xpose.msra.mxu0 0.0
    %3346 = vmatprep.subr.mxu0 0.0
    %3347 = vmatpush2.xpose.msra.mxu0 0.0
    %3348 = vmatprep.mubr.f32.mxu0 0.0
    %3349 = vmatmul.mubr.f32.gmra.mxu0 %v3280
    %v3350 = vpop.f32.mrf.mxu0
    %v3351 = vadd.f32 0.0, %v3350
    %v3352 = vpop.f32.mrf.mxu0
    %3353 = vdwg.mxu0
    %v3354 = vmul.f32 %v3351, 0.25
    %v3355 = vadd.f32 %v3354, %v1151
    %v3356 = vsel %vm466, %v3355, -inf
    %3357 = vmax.xlane.f32.xlu0 %v3356
    %v3358 = vpop.xlane.xlu0 %3357
    %v3359 = vsub.f32 %v3355, %v3358
    %v3360 = vmul.f32 %v3359, 1.442695
    %v3361 = vpow.pop %v3360
    %v3362 = vsel %vm466, %v3361, 0.0
    %3363 = vadd.xlane.f32.xlu0 %v3362
    %v3364 = vpop.xlane.xlu0 %3363
    %v3365 = vrcp.pop %v3364
    %v3366 = vmul.f32 %v3361, %v3365
    %3367 = vrot.lane.b32.xlu0 %v2263, 96
    %v3368 = vpop.permute.xlu0 %3367
    %v3371 = vsel %vm466, %v3366, 0
    %3373 = vmatprep.subr.mxu0 0.0
    %3374 = vmatpush1.msra.mxu0 0.0
    %3375 = vmatprep.subr.mxu0 0.0
    %3376 = vmatpush1.msra.mxu0 0.0
    %3377 = vmatprep.subr.mxu0 0.0
    %3378 = vmatpush1.msra.mxu0 0.0
    %3379 = vmatprep.subr.mxu0 0.0
    %3380 = vmatpush1.msra.mxu0 0.0
    %3381 = vmatprep.subr.mxu0 0.0
    %3382 = vmatpush1.msra.mxu0 0.0
    %3383 = vmatprep.subr.mxu0 0.0
    %3384 = vmatpush1.msra.mxu0 0.0
    %3385 = vmatprep.subr.mxu0 0.0
    %3386 = vmatpush1.msra.mxu0 0.0
    %3387 = vmatprep.subr.mxu0 0.0
    %3388 = vmatpush1.msra.mxu0 0.0
    %3389 = vmatprep.subr.mxu0 0.0
    %3390 = vmatpush1.msra.mxu0 0.0
    %3391 = vmatprep.subr.mxu0 0.0
    %3392 = vmatpush1.msra.mxu0 0.0
    %3393 = vmatprep.subr.mxu0 0.0
    %3394 = vmatpush1.msra.mxu0 0.0
    %3395 = vmatprep.subr.mxu0 0.0
    %3396 = vmatpush1.msra.mxu0 0.0
    %3397 = vmatprep.subr.mxu0 0.0
    %3398 = vmatpush1.msra.mxu0 0.0
    %3399 = vmatprep.subr.mxu0 0.0
    %3400 = vmatpush1.msra.mxu0 0.0
    %3401 = vmatprep.subr.mxu0 0.0
    %3402 = vmatpush1.msra.mxu0 0.0
    %3403 = vmatprep.subr.mxu0 0.0
    %3404 = vmatpush1.msra.mxu0 %v3368
    %3405 = vmatprep.subr.mxu0 0.0
    %3406 = vmatpush2.msra.mxu0 0.0
    %3407 = vmatprep.subr.mxu0 0.0
    %3408 = vmatpush2.msra.mxu0 0.0
    %3409 = vmatprep.subr.mxu0 0.0
    %3410 = vmatpush2.msra.mxu0 0.0
    %3411 = vmatprep.subr.mxu0 0.0
    %3412 = vmatpush2.msra.mxu0 0.0
    %3413 = vmatprep.subr.mxu0 0.0
    %3414 = vmatpush2.msra.mxu0 0.0
    %3415 = vmatprep.subr.mxu0 0.0
    %3416 = vmatpush2.msra.mxu0 0.0
    %3417 = vmatprep.subr.mxu0 0.0
    %3418 = vmatpush2.msra.mxu0 0.0
    %3419 = vmatprep.subr.mxu0 0.0
    %3420 = vmatpush2.msra.mxu0 0.0
    %3421 = vmatprep.subr.mxu0 0.0
    %3422 = vmatpush2.msra.mxu0 0.0
    %3423 = vmatprep.subr.mxu0 0.0
    %3424 = vmatpush2.msra.mxu0 0.0
    %3425 = vmatprep.subr.mxu0 0.0
    %3426 = vmatpush2.msra.mxu0 0.0
    %3427 = vmatprep.subr.mxu0 0.0
    %3428 = vmatpush2.msra.mxu0 0.0
    %3429 = vmatprep.subr.mxu0 0.0
    %3430 = vmatpush2.msra.mxu0 0.0
    %3431 = vmatprep.subr.mxu0 0.0
    %3432 = vmatpush2.msra.mxu0 0.0
    %3433 = vmatprep.subr.mxu0 0.0
    %3434 = vmatpush2.msra.mxu0 0.0
    %3435 = vmatprep.subr.mxu0 0.0
    %3436 = vmatpush2.msra.mxu0 0.0
    %3437 = vmatprep.mubr.f32.mxu0 0.0
    %3438 = vmatmul.mubr.f32.gmra.mxu0 %v3371
    %v3439 = vpop.f32.mrf.mxu0
    %v3440 = vadd.f32 0.0, %v3439
    %v3441 = vpop.f32.mrf.mxu0
    %3442 = vdwg.mxu0
    %3443 = vrot.lane.b32.xlu0 %v2261, 80
    %v3444 = vpop.permute.xlu0 %3443
    %3445 = vrot.lane.b32.xlu0 %v2261, 16
    %v3446 = vpop.permute.xlu0 %3445
    %v3447 = vsel %vm385, %v3444, 0
    %v3449 = vsel %vm385, %v3446, 0
    %3451 = vmatprep.subr.mxu0 0.0
    %3452 = vmatpush1.xpose.msra.mxu0 0.0
    %3453 = vmatprep.subr.mxu0 0.0
    %3454 = vmatpush1.xpose.msra.mxu0 0.0
    %3455 = vmatprep.subr.mxu0 0.0
    %3456 = vmatpush1.xpose.msra.mxu0 0.0
    %3457 = vmatprep.subr.mxu0 0.0
    %3458 = vmatpush1.xpose.msra.mxu0 0.0
    %3459 = vmatprep.subr.mxu0 0.0
    %3460 = vmatpush1.xpose.msra.mxu0 0.0
    %3461 = vmatprep.subr.mxu0 0.0
    %3462 = vmatpush1.xpose.msra.mxu0 0.0
    %3463 = vmatprep.subr.mxu0 0.0
    %3464 = vmatpush1.xpose.msra.mxu0 0.0
    %3465 = vmatprep.subr.mxu0 0.0
    %3466 = vmatpush1.xpose.msra.mxu0 0.0
    %3467 = vmatprep.subr.mxu0 0.0
    %3468 = vmatpush1.xpose.msra.mxu0 0.0
    %3469 = vmatprep.subr.mxu0 0.0
    %3470 = vmatpush1.xpose.msra.mxu0 0.0
    %3471 = vmatprep.subr.mxu0 0.0
    %3472 = vmatpush1.xpose.msra.mxu0 0.0
    %3473 = vmatprep.subr.mxu0 0.0
    %3474 = vmatpush1.xpose.msra.mxu0 0.0
    %3475 = vmatprep.subr.mxu0 0.0
    %3476 = vmatpush1.xpose.msra.mxu0 0.0
    %3477 = vmatprep.subr.mxu0 0.0
    %3478 = vmatpush1.xpose.msra.mxu0 0.0
    %3479 = vmatprep.subr.mxu0 0.0
    %3480 = vmatpush1.xpose.msra.mxu0 0.0
    %3481 = vmatprep.subr.mxu0 0.0
    %3482 = vmatpush1.xpose.msra.mxu0 %v3449
    %3483 = vmatprep.subr.mxu0 0.0
    %3484 = vmatpush2.xpose.msra.mxu0 0.0
    %3485 = vmatprep.subr.mxu0 0.0
    %3486 = vmatpush2.xpose.msra.mxu0 0.0
    %3487 = vmatprep.subr.mxu0 0.0
    %3488 = vmatpush2.xpose.msra.mxu0 0.0
    %3489 = vmatprep.subr.mxu0 0.0
    %3490 = vmatpush2.xpose.msra.mxu0 0.0
    %3491 = vmatprep.subr.mxu0 0.0
    %3492 = vmatpush2.xpose.msra.mxu0 0.0
    %3493 = vmatprep.subr.mxu0 0.0
    %3494 = vmatpush2.xpose.msra.mxu0 0.0
    %3495 = vmatprep.subr.mxu0 0.0
    %3496 = vmatpush2.xpose.msra.mxu0 0.0
    %3497 = vmatprep.subr.mxu0 0.0
    %3498 = vmatpush2.xpose.msra.mxu0 0.0
    %3499 = vmatprep.subr.mxu0 0.0
    %3500 = vmatpush2.xpose.msra.mxu0 0.0
    %3501 = vmatprep.subr.mxu0 0.0
    %3502 = vmatpush2.xpose.msra.mxu0 0.0
    %3503 = vmatprep.subr.mxu0 0.0
    %3504 = vmatpush2.xpose.msra.mxu0 0.0
    %3505 = vmatprep.subr.mxu0 0.0
    %3506 = vmatpush2.xpose.msra.mxu0 0.0
    %3507 = vmatprep.subr.mxu0 0.0
    %3508 = vmatpush2.xpose.msra.mxu0 0.0
    %3509 = vmatprep.subr.mxu0 0.0
    %3510 = vmatpush2.xpose.msra.mxu0 0.0
    %3511 = vmatprep.subr.mxu0 0.0
    %3512 = vmatpush2.xpose.msra.mxu0 0.0
    %3513 = vmatprep.subr.mxu0 0.0
    %3514 = vmatpush2.xpose.msra.mxu0 0.0
    %3515 = vmatprep.mubr.f32.mxu0 0.0
    %3516 = vmatmul.mubr.f32.gmra.mxu0 %v3447
    %v3517 = vpop.f32.mrf.mxu0
    %v3518 = vadd.f32 0.0, %v3517
    %v3519 = vpop.f32.mrf.mxu0
    %3520 = vdwg.mxu0
    %v3521 = vmul.f32 %v3518, 0.25
    %v3522 = vadd.f32 %v3521, %v1151
    %v3523 = vsel %vm466, %v3522, -inf
    %3524 = vmax.xlane.f32.xlu0 %v3523
    %v3525 = vpop.xlane.xlu0 %3524
    %v3526 = vsub.f32 %v3522, %v3525
    %v3527 = vmul.f32 %v3526, 1.442695
    %v3528 = vpow.pop %v3527
    %v3529 = vsel %vm466, %v3528, 0.0
    %3530 = vadd.xlane.f32.xlu0 %v3529
    %v3531 = vpop.xlane.xlu0 %3530
    %v3532 = vrcp.pop %v3531
    %v3533 = vmul.f32 %v3528, %v3532
    %3534 = vrot.lane.b32.xlu0 %v2263, 80
    %v3535 = vpop.permute.xlu0 %3534
    %v3538 = vsel %vm466, %v3533, 0
    %3540 = vmatprep.subr.mxu0 0.0
    %3541 = vmatpush1.msra.mxu0 0.0
    %3542 = vmatprep.subr.mxu0 0.0
    %3543 = vmatpush1.msra.mxu0 0.0
    %3544 = vmatprep.subr.mxu0 0.0
    %3545 = vmatpush1.msra.mxu0 0.0
    %3546 = vmatprep.subr.mxu0 0.0
    %3547 = vmatpush1.msra.mxu0 0.0
    %3548 = vmatprep.subr.mxu0 0.0
    %3549 = vmatpush1.msra.mxu0 0.0
    %3550 = vmatprep.subr.mxu0 0.0
    %3551 = vmatpush1.msra.mxu0 0.0
    %3552 = vmatprep.subr.mxu0 0.0
    %3553 = vmatpush1.msra.mxu0 0.0
    %3554 = vmatprep.subr.mxu0 0.0
    %3555 = vmatpush1.msra.mxu0 0.0
    %3556 = vmatprep.subr.mxu0 0.0
    %3557 = vmatpush1.msra.mxu0 0.0
    %3558 = vmatprep.subr.mxu0 0.0
    %3559 = vmatpush1.msra.mxu0 0.0
    %3560 = vmatprep.subr.mxu0 0.0
    %3561 = vmatpush1.msra.mxu0 0.0
    %3562 = vmatprep.subr.mxu0 0.0
    %3563 = vmatpush1.msra.mxu0 0.0
    %3564 = vmatprep.subr.mxu0 0.0
    %3565 = vmatpush1.msra.mxu0 0.0
    %3566 = vmatprep.subr.mxu0 0.0
    %3567 = vmatpush1.msra.mxu0 0.0
    %3568 = vmatprep.subr.mxu0 0.0
    %3569 = vmatpush1.msra.mxu0 0.0
    %3570 = vmatprep.subr.mxu0 0.0
    %3571 = vmatpush1.msra.mxu0 %v3535
    %3572 = vmatprep.subr.mxu0 0.0
    %3573 = vmatpush2.msra.mxu0 0.0
    %3574 = vmatprep.subr.mxu0 0.0
    %3575 = vmatpush2.msra.mxu0 0.0
    %3576 = vmatprep.subr.mxu0 0.0
    %3577 = vmatpush2.msra.mxu0 0.0
    %3578 = vmatprep.subr.mxu0 0.0
    %3579 = vmatpush2.msra.mxu0 0.0
    %3580 = vmatprep.subr.mxu0 0.0
    %3581 = vmatpush2.msra.mxu0 0.0
    %3582 = vmatprep.subr.mxu0 0.0
    %3583 = vmatpush2.msra.mxu0 0.0
    %3584 = vmatprep.subr.mxu0 0.0
    %3585 = vmatpush2.msra.mxu0 0.0
    %3586 = vmatprep.subr.mxu0 0.0
    %3587 = vmatpush2.msra.mxu0 0.0
    %3588 = vmatprep.subr.mxu0 0.0
    %3589 = vmatpush2.msra.mxu0 0.0
    %3590 = vmatprep.subr.mxu0 0.0
    %3591 = vmatpush2.msra.mxu0 0.0
    %3592 = vmatprep.subr.mxu0 0.0
    %3593 = vmatpush2.msra.mxu0 0.0
    %3594 = vmatprep.subr.mxu0 0.0
    %3595 = vmatpush2.msra.mxu0 0.0
    %3596 = vmatprep.subr.mxu0 0.0
    %3597 = vmatpush2.msra.mxu0 0.0
    %3598 = vmatprep.subr.mxu0 0.0
    %3599 = vmatpush2.msra.mxu0 0.0
    %3600 = vmatprep.subr.mxu0 0.0
    %3601 = vmatpush2.msra.mxu0 0.0
    %3602 = vmatprep.subr.mxu0 0.0
    %3603 = vmatpush2.msra.mxu0 0.0
    %3604 = vmatprep.mubr.f32.mxu0 0.0
    %3605 = vmatmul.mubr.f32.gmra.mxu0 %v3538
    %v3606 = vpop.f32.mrf.mxu0
    %v3607 = vadd.f32 0.0, %v3606
    %v3608 = vpop.f32.mrf.mxu0
    %3609 = vdwg.mxu0
    %3611 = vrot.lane.b32.xlu0 %v3273, 16
    %v3612 = vpop.permute.xlu0 %3611
    %3615 = vrot.lane.b32.xlu0 %v3440, 32
    %v3616 = vpop.permute.xlu0 %3615
    %3619 = vrot.lane.b32.xlu0 %v3607, 48
    %v3620 = vpop.permute.xlu0 %3619
    %v3622 = vsel %vm385, %v3105, %v3612
    %v3623 = vsel %vm1066, %v3622, %v3616
    %v3624 = vsel %vm1068, %v3623, %v3620
    %v3625 = vld [vmem:[#allocation8] sm:$0xff]
    %v3626 = vld [vmem:[#allocation8 + $0x8] sm:$0xff]
    %v3627 = vld [vmem:[#allocation8 + $0x10] sm:$0xff]
    %v3628 = vld [vmem:[#allocation8 + $0x18] sm:$0xff]
    %v3629 = vld [vmem:[#allocation8 + $0x20] sm:$0xff]
    %v3630 = vld [vmem:[#allocation8 + $0x28] sm:$0xff]
    %v3631 = vld [vmem:[#allocation8 + $0x30] sm:$0xff]
    %v3632 = vld [vmem:[#allocation8 + $0x38] sm:$0xff]
    %v3633 = vld [vmem:[%s39] sm:$0x1]
    %v3635 = vlaneseq
    %v3636 = vshrl.u32 %v3635, 7
    %v3637 = vsub.s32 0, %v3636
    %v3638 = vrot.slane %v3633, %v3637
    %v3641 = vsel %vm227, %v2944, 0
    %v3644 = vsel %vm227, %v3624, 0
    %3646 = vmatprep.subr.mxu0 0.0
    %3647 = vmatpush1.msra.mxu0 0.0
    %3648 = vmatprep.subr.mxu0 0.0
    %3649 = vmatpush1.msra.mxu0 0.0
    %3650 = vmatprep.subr.mxu0 0.0
    %3651 = vmatpush1.msra.mxu0 0.0
    %3652 = vmatprep.subr.mxu0 0.0
    %3653 = vmatpush1.msra.mxu0 0.0
    %3654 = vmatprep.subr.mxu0 0.0
    %3655 = vmatpush1.msra.mxu0 0.0
    %3656 = vmatprep.subr.mxu0 0.0
    %3657 = vmatpush1.msra.mxu0 0.0
    %3658 = vmatprep.subr.mxu0 0.0
    %3659 = vmatpush1.msra.mxu0 0.0
    %3660 = vmatprep.subr.mxu0 0.0
    %3661 = vmatpush1.msra.mxu0 0.0
    %3662 = vmatprep.subr.mxu0 0.0
    %3663 = vmatpush1.msra.mxu0 %v3632
    %3664 = vmatprep.subr.mxu0 0.0
    %3665 = vmatpush1.msra.mxu0 %v3631
    %3666 = vmatprep.subr.mxu0 0.0
    %3667 = vmatpush1.msra.mxu0 %v3630
    %3668 = vmatprep.subr.mxu0 0.0
    %3669 = vmatpush1.msra.mxu0 %v3629
    %3670 = vmatprep.subr.mxu0 0.0
    %3671 = vmatpush1.msra.mxu0 %v3628
    %3672 = vmatprep.subr.mxu0 0.0
    %3673 = vmatpush1.msra.mxu0 %v3627
    %3674 = vmatprep.subr.mxu0 0.0
    %3675 = vmatpush1.msra.mxu0 %v3626
    %3676 = vmatprep.subr.mxu0 0.0
    %3677 = vmatpush1.msra.mxu0 %v3625
    %3678 = vmatprep.subr.mxu0 0.0
    %3679 = vmatpush2.msra.mxu0 0.0
    %3680 = vmatprep.subr.mxu0 0.0
    %3681 = vmatpush2.msra.mxu0 0.0
    %3682 = vmatprep.subr.mxu0 0.0
    %3683 = vmatpush2.msra.mxu0 0.0
    %3684 = vmatprep.subr.mxu0 0.0
    %3685 = vmatpush2.msra.mxu0 0.0
    %3686 = vmatprep.subr.mxu0 0.0
    %3687 = vmatpush2.msra.mxu0 0.0
    %3688 = vmatprep.subr.mxu0 0.0
    %3689 = vmatpush2.msra.mxu0 0.0
    %3690 = vmatprep.subr.mxu0 0.0
    %3691 = vmatpush2.msra.mxu0 0.0
    %3692 = vmatprep.subr.mxu0 0.0
    %3693 = vmatpush2.msra.mxu0 0.0
    %3694 = vmatprep.subr.mxu0 0.0
    %3695 = vmatpush2.msra.mxu0 0.0
    %3696 = vmatprep.subr.mxu0 0.0
    %3697 = vmatpush2.msra.mxu0 0.0
    %3698 = vmatprep.subr.mxu0 0.0
    %3699 = vmatpush2.msra.mxu0 0.0
    %3700 = vmatprep.subr.mxu0 0.0
    %3701 = vmatpush2.msra.mxu0 0.0
    %3702 = vmatprep.subr.mxu0 0.0
    %3703 = vmatpush2.msra.mxu0 0.0
    %3704 = vmatprep.subr.mxu0 0.0
    %3705 = vmatpush2.msra.mxu0 0.0
    %3706 = vmatprep.subr.mxu0 0.0
    %3707 = vmatpush2.msra.mxu0 0.0
    %3708 = vmatprep.subr.mxu0 0.0
    %3709 = vmatpush2.msra.mxu0 0.0
    %3710 = vmatprep.mubr.f32.mxu0 0.0
    %3711 = vmatmul.mubr.f32.gmra.mxu0 %v3641
    %v3712 = vpop.f32.mrf.mxu0
    %v3713 = vadd.f32 %v3638, %v3712
    %v3714 = vpop.f32.mrf.mxu0
    %3715 = vmatprep.mubr.f32.mxu0 0.0
    %3716 = vmatmul.mubr.f32.gmra.mxu0 %v3644
    %v3717 = vpop.f32.mrf.mxu0
    %v3718 = vadd.f32 %v3638, %v3717
    %v3719 = vpop.f32.mrf.mxu0
    %3720 = vdwg.mxu0
    %v3721 = vadd.f32 %v3713, %v2152
    %v3722 = vadd.f32 %v3718, %v2153
    %v3723 = vld [vmem:[%s41] sm:$0x1]
    %v3724 = vld [vmem:[%s43] sm:$0x1]
    %v3725 = vsel %vm227, %v3721, 0.0
    %3726 = vadd.xlane.f32.xlu0 %v3725
    %v3727 = vpop.xlane.xlu0 %3726
    %v3728 = vsel %vm227, %v3722, 0.0
    %3729 = vadd.xlane.f32.xlu0 %v3728
    %v3730 = vpop.xlane.xlu0 %3729
    %v3731 = vmul.f32 %v3727, %v234
    %v3732 = vmul.f32 %v3730, %v234
    %v3733 = vsub.f32 %v3721, %v3731
    %v3734 = vsub.f32 %v3722, %v3732
    %v3735 = vmul.f32 %v3733, %v3733
    %v3736 = vmul.f32 %v3734, %v3734
    %v3737 = vsel %vm227, %v3735, 0.0
    %3738 = vadd.xlane.f32.xlu0 %v3737
    %v3739 = vpop.xlane.xlu0 %3738
    %v3740 = vsel %vm227, %v3736, 0.0
    %3741 = vadd.xlane.f32.xlu0 %v3740
    %v3742 = vpop.xlane.xlu0 %3741
    %v3743 = vmul.f32 %v3739, %v234
    %v3744 = vmul.f32 %v3742, %v234
    %v3745 = vadd.f32 %v3743, 1e-12
    %v3746 = vadd.f32 %v3744, 1e-12
    %v3747 = vrsqrt.pop %v3745
    %v3748 = vrsqrt.pop %v3746
    %v3749 = vmul.f32 %v3733, %v3747
    %v3750 = vmul.f32 %v3734, %v3748
    %v3752 = vlaneseq
    %v3753 = vshrl.u32 %v3752, 7
    %v3754 = vsub.s32 0, %v3753
    %v3755 = vrot.slane %v3723, %v3754
    %v3757 = vmul.f32 %v3749, %v3755
    %v3758 = vmul.f32 %v3750, %v3755
    %v3760 = vlaneseq
    %v3761 = vshrl.u32 %v3760, 7
    %v3762 = vsub.s32 0, %v3761
    %v3763 = vrot.slane %v3724, %v3762
    %v3765 = vadd.f32 %v3757, %v3763
    %v3766 = vadd.f32 %v3758, %v3763
    %v3768 = vrot.slane %v3766, 7
    %vm3770 = vcmask 1040384
    %v3771 = vsel %vm3770, %v3765, %v3768
    %v3772 = vld [vmem:[#allocation10] sm:$0xff]
    %v3773 = vld [vmem:[#allocation10 + $0x8] sm:$0xff]
    %v3774 = vld [vmem:[#allocation10 + $0x10] sm:$0xff]
    %v3775 = vld [vmem:[#allocation10 + $0x18] sm:$0xff]
    %v3776 = vld [vmem:[#allocation10 + $0x20] sm:$0xff]
    %v3777 = vld [vmem:[#allocation10 + $0x28] sm:$0xff]
    %v3778 = vld [vmem:[#allocation10 + $0x30] sm:$0xff]
    %v3779 = vld [vmem:[#allocation10 + $0x38] sm:$0xff]
    %v3780 = vld [vmem:[%s47] sm:$0x1]
    %v3782 = vlaneseq
    %v3783 = vshrl.u32 %v3782, 7
    %v3784 = vsub.s32 0, %v3783
    %v3785 = vrot.slane %v3780, %v3784
    %v3788 = vsel %vm227, %v3771, 0
    %3790 = vmatprep.subr.mxu0 0.0
    %3791 = vmatpush1.msra.mxu0 0.0
    %3792 = vmatprep.subr.mxu0 0.0
    %3793 = vmatpush1.msra.mxu0 0.0
    %3794 = vmatprep.subr.mxu0 0.0
    %3795 = vmatpush1.msra.mxu0 0.0
    %3796 = vmatprep.subr.mxu0 0.0
    %3797 = vmatpush1.msra.mxu0 0.0
    %3798 = vmatprep.subr.mxu0 0.0
    %3799 = vmatpush1.msra.mxu0 0.0
    %3800 = vmatprep.subr.mxu0 0.0
    %3801 = vmatpush1.msra.mxu0 0.0
    %3802 = vmatprep.subr.mxu0 0.0
    %3803 = vmatpush1.msra.mxu0 0.0
    %3804 = vmatprep.subr.mxu0 0.0
    %3805 = vmatpush1.msra.mxu0 0.0
    %3806 = vmatprep.subr.mxu0 0.0
    %3807 = vmatpush1.msra.mxu0 %v3779
    %3808 = vmatprep.subr.mxu0 0.0
    %3809 = vmatpush1.msra.mxu0 %v3778
    %3810 = vmatprep.subr.mxu0 0.0
    %3811 = vmatpush1.msra.mxu0 %v3777
    %3812 = vmatprep.subr.mxu0 0.0
    %3813 = vmatpush1.msra.mxu0 %v3776
    %3814 = vmatprep.subr.mxu0 0.0
    %3815 = vmatpush1.msra.mxu0 %v3775
    %3816 = vmatprep.subr.mxu0 0.0
    %3817 = vmatpush1.msra.mxu0 %v3774
    %3818 = vmatprep.subr.mxu0 0.0
    %3819 = vmatpush1.msra.mxu0 %v3773
    %3820 = vmatprep.subr.mxu0 0.0
    %3821 = vmatpush1.msra.mxu0 %v3772
    %3822 = vmatprep.subr.mxu0 0.0
    %3823 = vmatpush2.msra.mxu0 0.0
    %3824 = vmatprep.subr.mxu0 0.0
    %3825 = vmatpush2.msra.mxu0 0.0
    %3826 = vmatprep.subr.mxu0 0.0
    %3827 = vmatpush2.msra.mxu0 0.0
    %3828 = vmatprep.subr.mxu0 0.0
    %3829 = vmatpush2.msra.mxu0 0.0
    %3830 = vmatprep.subr.mxu0 0.0
    %3831 = vmatpush2.msra.mxu0 0.0
    %3832 = vmatprep.subr.mxu0 0.0
    %3833 = vmatpush2.msra.mxu0 0.0
    %3834 = vmatprep.subr.mxu0 0.0
    %3835 = vmatpush2.msra.mxu0 0.0
    %3836 = vmatprep.subr.mxu0 0.0
    %3837 = vmatpush2.msra.mxu0 0.0
    %3838 = vmatprep.subr.mxu0 0.0
    %3839 = vmatpush2.msra.mxu0 0.0
    %3840 = vmatprep.subr.mxu0 0.0
    %3841 = vmatpush2.msra.mxu0 0.0
    %3842 = vmatprep.subr.mxu0 0.0
    %3843 = vmatpush2.msra.mxu0 0.0
    %3844 = vmatprep.subr.mxu0 0.0
    %3845 = vmatpush2.msra.mxu0 0.0
    %3846 = vmatprep.subr.mxu0 0.0
    %3847 = vmatpush2.msra.mxu0 0.0
    %3848 = vmatprep.subr.mxu0 0.0
    %3849 = vmatpush2.msra.mxu0 0.0
    %3850 = vmatprep.subr.mxu0 0.0
    %3851 = vmatpush2.msra.mxu0 0.0
    %3852 = vmatprep.subr.mxu0 0.0
    %3853 = vmatpush2.msra.mxu0 0.0
    %3854 = vmatprep.mubr.f32.mxu0 0.0
    %3855 = vmatmul.mubr.f32.gmra.mxu0 %v3788
    %v3856 = vpop.f32.mrf.mxu0
    %v3857 = vadd.f32 %v3785, %v3856
    %v3858 = vpop.f32.mrf.mxu0
    %3859 = vdwg.mxu0
    %v3860 = vmul.f32 %v3857, %v3857
    %v3861 = vmul.f32 %v3857, %v3860
    %v3862 = vmul.f32 %v3861, 0.044715
    %v3863 = vadd.f32 %v3857, %v3862
    %v3864 = vmul.f32 %v3863, 0.7978846
    %v3865 = vtanh.pop %v3864
    %v3866 = vadd.f32 %v3865, 1.0
    %v3867 = vmul.f32 %v3866, 0.5
    %v3868 = vmul.f32 %v3857, %v3867
    %v3869 = vld [vmem:[#allocation11] sm:$0xff]
    %v3870 = vld [vmem:[#allocation11 + $0x8] sm:$0xff]
    %v3871 = vld [vmem:[#allocation11 + $0x10] sm:$0xff]
    %v3872 = vld [vmem:[#allocation11 + $0x18] sm:$0xff]
    %v3873 = vld [vmem:[#allocation11 + $0x20] sm:$0xff]
    %v3874 = vld [vmem:[#allocation11 + $0x28] sm:$0xff]
    %v3875 = vld [vmem:[#allocation11 + $0x30] sm:$0xff]
    %v3876 = vld [vmem:[#allocation11 + $0x38] sm:$0xff]
    %v3877 = vld [vmem:[#allocation11 + $0x40] sm:$0xff]
    %v3878 = vld [vmem:[#allocation11 + $0x48] sm:$0xff]
    %v3879 = vld [vmem:[#allocation11 + $0x50] sm:$0xff]
    %v3880 = vld [vmem:[#allocation11 + $0x58] sm:$0xff]
    %v3881 = vld [vmem:[#allocation11 + $0x60] sm:$0xff]
    %v3882 = vld [vmem:[#allocation11 + $0x68] sm:$0xff]
    %v3883 = vld [vmem:[#allocation11 + $0x70] sm:$0xff]
    %v3884 = vld [vmem:[#allocation11 + $0x78] sm:$0xff]
    %v3885 = vld [vmem:[%s51] sm:$0x1]
    %v3887 = vlaneseq
    %v3888 = vshrl.u32 %v3887, 7
    %v3889 = vsub.s32 0, %v3888
    %v3890 = vrot.slane %v3885, %v3889
    %3892 = vmatprep.subr.mxu0 0.0
    %3893 = vmatpush1.msra.mxu0 %v3884
    %3894 = vmatprep.subr.mxu0 0.0
    %3895 = vmatpush1.msra.mxu0 %v3883
    %3896 = vmatprep.subr.mxu0 0.0
    %3897 = vmatpush1.msra.mxu0 %v3882
    %3898 = vmatprep.subr.mxu0 0.0
    %3899 = vmatpush1.msra.mxu0 %v3881
    %3900 = vmatprep.subr.mxu0 0.0
    %3901 = vmatpush1.msra.mxu0 %v3880
    %3902 = vmatprep.subr.mxu0 0.0
    %3903 = vmatpush1.msra.mxu0 %v3879
    %3904 = vmatprep.subr.mxu0 0.0
    %3905 = vmatpush1.msra.mxu0 %v3878
    %3906 = vmatprep.subr.mxu0 0.0
    %3907 = vmatpush1.msra.mxu0 %v3877
    %3908 = vmatprep.subr.mxu0 0.0
    %3909 = vmatpush1.msra.mxu0 %v3876
    %3910 = vmatprep.subr.mxu0 0.0
    %3911 = vmatpush1.msra.mxu0 %v3875
    %3912 = vmatprep.subr.mxu0 0.0
    %3913 = vmatpush1.msra.mxu0 %v3874
    %3914 = vmatprep.subr.mxu0 0.0
    %3915 = vmatpush1.msra.mxu0 %v3873
    %3916 = vmatprep.subr.mxu0 0.0
    %3917 = vmatpush1.msra.mxu0 %v3872
    %3918 = vmatprep.subr.mxu0 0.0
    %3919 = vmatpush1.msra.mxu0 %v3871
    %3920 = vmatprep.subr.mxu0 0.0
    %3921 = vmatpush1.msra.mxu0 %v3870
    %3922 = vmatprep.subr.mxu0 0.0
    %3923 = vmatpush1.msra.mxu0 %v3869
    %3924 = vmatprep.subr.mxu0 0.0
    %3925 = vmatpush2.msra.mxu0 0.0
    %3926 = vmatprep.subr.mxu0 0.0
    %3927 = vmatpush2.msra.mxu0 0.0
    %3928 = vmatprep.subr.mxu0 0.0
    %3929 = vmatpush2.msra.mxu0 0.0
    %3930 = vmatprep.subr.mxu0 0.0
    %3931 = vmatpush2.msra.mxu0 0.0
    %3932 = vmatprep.subr.mxu0 0.0
    %3933 = vmatpush2.msra.mxu0 0.0
    %3934 = vmatprep.subr.mxu0 0.0
    %3935 = vmatpush2.msra.mxu0 0.0
    %3936 = vmatprep.subr.mxu0 0.0
    %3937 = vmatpush2.msra.mxu0 0.0
    %3938 = vmatprep.subr.mxu0 0.0
    %3939 = vmatpush2.msra.mxu0 0.0
    %3940 = vmatprep.subr.mxu0 0.0
    %3941 = vmatpush2.msra.mxu0 0.0
    %3942 = vmatprep.subr.mxu0 0.0
    %3943 = vmatpush2.msra.mxu0 0.0
    %3944 = vmatprep.subr.mxu0 0.0
    %3945 = vmatpush2.msra.mxu0 0.0
    %3946 = vmatprep.subr.mxu0 0.0
    %3947 = vmatpush2.msra.mxu0 0.0
    %3948 = vmatprep.subr.mxu0 0.0
    %3949 = vmatpush2.msra.mxu0 0.0
    %3950 = vmatprep.subr.mxu0 0.0
    %3951 = vmatpush2.msra.mxu0 0.0
    %3952 = vmatprep.subr.mxu0 0.0
    %3953 = vmatpush2.msra.mxu0 0.0
    %3954 = vmatprep.subr.mxu0 0.0
    %3955 = vmatpush2.msra.mxu0 0.0
    %3956 = vmatprep.mubr.f32.mxu0 0.0
    %3957 = vmatmul.mubr.f32.gmra.mxu0 %v3868
    %v3958 = vpop.f32.mrf.mxu0
    %v3959 = vadd.f32 %v3890, %v3958
    %v3960 = vpop.f32.mrf.mxu0
    %3961 = vdwg.mxu0
    %v3962 = vadd.f32 %v3959, %v3771
    %v3963 = vld [vmem:[%s53] sm:$0x1]
    %v3964 = vld [vmem:[%s55] sm:$0x1]
    %vm3965 = vcmask 517120
    %v3966 = vsel %vm3965, %v3962, 0.0
    %3967 = vadd.xlane.f32.xlu0 %v3966
    %v3968 = vpop.xlane.xlu0 %3967
    %v3969 = vmul.f32 %v3968, %v234
    %v3970 = vsub.f32 %v3962, %v3969
    %v3971 = vmul.f32 %v3970, %v3970
    %v3972 = vsel %vm3965, %v3971, 0.0
    %3973 = vadd.xlane.f32.xlu0 %v3972
    %v3974 = vpop.xlane.xlu0 %3973
    %v3975 = vmul.f32 %v3974, %v234
    %v3976 = vadd.f32 %v3975, 1e-12
    %v3977 = vrsqrt.pop %v3976
    %v3978 = vmul.f32 %v3970, %v3977
    %v3980 = vlaneseq
    %v3981 = vshrl.u32 %v3980, 7
    %v3982 = vsub.s32 0, %v3981
    %v3983 = vrot.slane %v3963, %v3982
    %v3985 = vmul.f32 %v3978, %v3983
    %v3987 = vlaneseq
    %v3988 = vshrl.u32 %v3987, 7
    %v3989 = vsub.s32 0, %v3988
    %v3990 = vrot.slane %v3964, %v3989
    %v3992 = vadd.f32 %v3985, %v3990
    %v3993 = vld [vmem:[#allocation13] sm:$0xff]
    %v3994 = vld [vmem:[#allocation13 + $0x8] sm:$0xff]
    %v3995 = vld [vmem:[#allocation13 + $0x10] sm:$0xff]
    %v3996 = vld [vmem:[#allocation13 + $0x18] sm:$0xff]
    %v3997 = vld [vmem:[#allocation13 + $0x20] sm:$0xff]
    %v3998 = vld [vmem:[#allocation13 + $0x28] sm:$0xff]
    %v3999 = vld [vmem:[#allocation13 + $0x30] sm:$0xff]
    %v4000 = vld [vmem:[#allocation13 + $0x38] sm:$0xff]
    %v4001 = vld [vmem:[%s59] sm:$0x1]
    %v4003 = vlaneseq
    %v4004 = vshrl.u32 %v4003, 7
    %v4005 = vsub.s32 0, %v4004
    %v4006 = vrot.slane %v4001, %v4005
    %v4009 = vsel %vm227, %v3992, 0
    %4011 = vmatprep.subr.mxu0 0.0
    %4012 = vmatpush1.msra.mxu0 0.0
    %4013 = vmatprep.subr.mxu0 0.0
    %4014 = vmatpush1.msra.mxu0 0.0
    %4015 = vmatprep.subr.mxu0 0.0
    %4016 = vmatpush1.msra.mxu0 0.0
    %4017 = vmatprep.subr.mxu0 0.0
    %4018 = vmatpush1.msra.mxu0 0.0
    %4019 = vmatprep.subr.mxu0 0.0
    %4020 = vmatpush1.msra.mxu0 0.0
    %4021 = vmatprep.subr.mxu0 0.0
    %4022 = vmatpush1.msra.mxu0 0.0
    %4023 = vmatprep.subr.mxu0 0.0
    %4024 = vmatpush1.msra.mxu0 0.0
    %4025 = vmatprep.subr.mxu0 0.0
    %4026 = vmatpush1.msra.mxu0 0.0
    %4027 = vmatprep.subr.mxu0 0.0
    %4028 = vmatpush1.msra.mxu0 %v4000
    %4029 = vmatprep.subr.mxu0 0.0
    %4030 = vmatpush1.msra.mxu0 %v3999
    %4031 = vmatprep.subr.mxu0 0.0
    %4032 = vmatpush1.msra.mxu0 %v3998
    %4033 = vmatprep.subr.mxu0 0.0
    %4034 = vmatpush1.msra.mxu0 %v3997
    %4035 = vmatprep.subr.mxu0 0.0
    %4036 = vmatpush1.msra.mxu0 %v3996
    %4037 = vmatprep.subr.mxu0 0.0
    %4038 = vmatpush1.msra.mxu0 %v3995
    %4039 = vmatprep.subr.mxu0 0.0
    %4040 = vmatpush1.msra.mxu0 %v3994
    %4041 = vmatprep.subr.mxu0 0.0
    %4042 = vmatpush1.msra.mxu0 %v3993
    %4043 = vmatprep.subr.mxu0 0.0
    %4044 = vmatpush2.msra.mxu0 0.0
    %4045 = vmatprep.subr.mxu0 0.0
    %4046 = vmatpush2.msra.mxu0 0.0
    %4047 = vmatprep.subr.mxu0 0.0
    %4048 = vmatpush2.msra.mxu0 0.0
    %4049 = vmatprep.subr.mxu0 0.0
    %4050 = vmatpush2.msra.mxu0 0.0
    %4051 = vmatprep.subr.mxu0 0.0
    %4052 = vmatpush2.msra.mxu0 0.0
    %4053 = vmatprep.subr.mxu0 0.0
    %4054 = vmatpush2.msra.mxu0 0.0
    %4055 = vmatprep.subr.mxu0 0.0
    %4056 = vmatpush2.msra.mxu0 0.0
    %4057 = vmatprep.subr.mxu0 0.0
    %4058 = vmatpush2.msra.mxu0 0.0
    %4059 = vmatprep.subr.mxu0 0.0
    %4060 = vmatpush2.msra.mxu0 0.0
    %4061 = vmatprep.subr.mxu0 0.0
    %4062 = vmatpush2.msra.mxu0 0.0
    %4063 = vmatprep.subr.mxu0 0.0
    %4064 = vmatpush2.msra.mxu0 0.0
    %4065 = vmatprep.subr.mxu0 0.0
    %4066 = vmatpush2.msra.mxu0 0.0
    %4067 = vmatprep.subr.mxu0 0.0
    %4068 = vmatpush2.msra.mxu0 0.0
    %4069 = vmatprep.subr.mxu0 0.0
    %4070 = vmatpush2.msra.mxu0 0.0
    %4071 = vmatprep.subr.mxu0 0.0
    %4072 = vmatpush2.msra.mxu0 0.0
    %4073 = vmatprep.subr.mxu0 0.0
    %4074 = vmatpush2.msra.mxu0 0.0
    %4075 = vmatprep.mubr.f32.mxu0 0.0
    %4076 = vmatmul.mubr.f32.gmra.mxu0 %v4009
    %v4077 = vpop.f32.mrf.mxu0
    %v4078 = vadd.f32 %v4006, %v4077
    %v4079 = vpop.f32.mrf.mxu0
    %4080 = vdwg.mxu0
    %v4081 = vtanh.pop %v4078
    %4082 = vst.msk [vmem:[#allocation14] sm:$0x3] %vm3965, %v4081
    // Predicated region
    $region150: #{_lambda_.1} parent=1 // pred_check
      _
    $region151: #{_lambda_.1} parent=1 // pred_check_branch
      %4084 = sbr.rel (0) target = $region153
    $region152: #{_lambda_.1} parent=1 // pred_region
      %s4086 = ssub.s32 32, 32
      %4087 = vsyncadd [#allocation4], %s4086
      %s4089 = sshll.u32 [#allocation14], 4
      %s4090 = int_to_ptr.vmem [resolvable:$true] %s4089
      %4092 = dma.vmem_to_hbm [thread:$0]  %s4090, 32, %s61, [#allocation4]
    $region153: #{_lambda_.1} parent=1 // pred_fallthru
      _
    // Predicated region
    $region154: #{_lambda_.1} parent=1 // pred_check
      _
    $region155: #{_lambda_.1} parent=1 // pred_check_branch
      %4094 = sbr.rel (0) target = $region157
    $region156: #{_lambda_.1} parent=1 // pred_region
      %4095 = dma.done [#allocation4], 32
    $region157: #{_lambda_.1} parent=1 // pred_fallthru
      _
    %4096 = vsyncpa [#allocation3], 1
    %4097 = vsyncpa [#allocation6], 1
    %4098 = vsyncpa [#allocation9], 1
    %4099 = vsyncpa [#allocation12], 1
    %4100 = vsyncpa [#allocation4], 1

</llo_original>
